<compile_context>
chip_gen: v7x
topology: tpu7x:2x2x1
jax: 0.10.0
libtpu: 0.0.40
codegen_flags: <defaults>
</compile_context>

<pallas_src>
import functools

import jax
import jax.numpy as jnp
from jax.experimental import pallas as pl
from jax.experimental.pallas import tpu as pltpu


def _round_up(x, m):
    return ((x + m - 1) // m) * m


# --------------------------------------------------------------------------- #
# Fused decode-step kernel
# --------------------------------------------------------------------------- #
def _make_fused_kernel(L, Hp, Sp, S_real, Bp):
    bf16, f32 = jnp.bfloat16, jnp.float32

    def kernel(tok_ref,           # SMEM (Bp,) int32   -- scalar prefetch (token ids)
               emb_hbm,           # ANY  [Vrows, Ep] f32 (embedding table, stays in HBM)
               h0_ref,            # VMEM [L, Bp, Hp] f32
               enc_ref,           # VMEM [Bp, Sp, Hp] f32
               *rest):
        w_gru = [rest[2 * l] for l in range(L)]          # bf16 [(In_p+Hp), 6Hp]
        b_gru = [rest[2 * l + 1] for l in range(L)]      # f32  [1, 6Hp]
        wa_ref, wc_ref, bc_ref, wo_ref, bo_ref = rest[2 * L:2 * L + 5]
        hid_ref, logits_ref = rest[2 * L + 5:2 * L + 7]
        emb_vmem, emb_sem, state_vmem = rest[2 * L + 7:2 * L + 10]

        @pl.when(pl.program_id(0) == 0)
        def _():
            # ---- embedding gather: one row DMA per batch element (HBM -> VMEM) ----
            copies = []
            for b in range(Bp):
                cp = pltpu.make_async_copy(
                    emb_hbm.at[pl.ds(tok_ref[b], 1)],
                    emb_vmem.at[pl.ds(b, 1)],
                    emb_sem.at[b])
                cp.start()
                copies.append(cp)
            for cp in copies:
                cp.wait()

            # ---- stacked GRU layers: one MXU matmul per layer on [x | h] ----------
            x = emb_vmem[...]                                     # [Bp, Ep] f32
            for l in range(L):
                h = h0_ref[l]                                     # [Bp, Hp] f32
                xc = jnp.concatenate([x, h], axis=1).astype(bf16)
                g = jnp.dot(xc, w_gru[l][...],
                            preferred_element_type=f32) + b_gru[l][...]   # [Bp, 6Hp]
                # PyTorch GRU gate order: r, z, n ; gi = g[:, :3Hp], gh = g[:, 3Hp:]
                r = jax.nn.sigmoid(g[:, 0:Hp] + g[:, 3 * Hp:4 * Hp])
                z = jax.nn.sigmoid(g[:, Hp:2 * Hp] + g[:, 4 * Hp:5 * Hp])
                n = jnp.tanh(g[:, 2 * Hp:3 * Hp] + r * g[:, 5 * Hp:6 * Hp])
                h_new = (1.0 - z) * n + z * h
                hid_ref[l] = h_new
                x = h_new

            rnn = x                                               # [Bp, Hp] f32
            enc16 = enc_ref[...].astype(bf16)                     # [Bp, Sp, Hp]

            # ---- Luong 'general' attention on the MXU -----------------------------
            # score[b,s] = enc[b,s,:] . (rnn @ Wa)[b,:]
            # (the attention Linear's bias contributes a per-row constant over s,
            #  which cancels exactly in the softmax, so it is dropped here)
            t = jnp.dot(rnn.astype(bf16), wa_ref[...], preferred_element_type=f32)
            q = t.astype(bf16)[:, None, :]                        # [Bp, 1, Hp]
            s = jnp.einsum('bqh,bsh->bqs', q, enc16,
                           preferred_element_type=f32)            # [Bp, 1, Sp]
            if Sp > S_real:                                       # mask padded positions
                col = jax.lax.broadcasted_iota(jnp.int32, s.shape, 2)
                s = jnp.where(col < S_real, s, -jnp.inf)
            m = jnp.max(s, axis=2, keepdims=True)
            p = jnp.exp(s - m)
            attn = p / jnp.sum(p, axis=2, keepdims=True)          # [Bp, 1, Sp]
            ctx = jnp.einsum('bqs,bsh->bqh', attn.astype(bf16), enc16,
                             preferred_element_type=f32)[:, 0, :]  # [Bp, Hp]

            # ---- tanh(Linear(cat[rnn, context])) ; kept resident for all vocab tiles
            cat = jnp.concatenate([rnn, ctx], axis=1).astype(bf16)  # [Bp, 2Hp]
            state_vmem[...] = jnp.tanh(
                jnp.dot(cat, wc_ref[...], preferred_element_type=f32) + bc_ref[...])

        # ---- streamed, pipelined vocab projection (every vocab tile) --------------
        co = state_vmem[...].astype(bf16)                          # [Bp, Hp]
        logits_ref[...] = (jnp.dot(co, wo_ref[...], preferred_element_type=f32)
                           + bo_ref[...])                          # [Bp, TN]

    return kernel


def _softmax_kernel(logits_ref, out_ref):
    x = logits_ref[...]
    m = jnp.max(x, axis=1, keepdims=True)
    e = jnp.exp(x - m)
    out_ref[...] = e / jnp.sum(e, axis=1, keepdims=True)


# --------------------------------------------------------------------------- #
# One-time parameter preparation (pad / transpose / bf16-cast)
# --------------------------------------------------------------------------- #
def prepare_decoder_params(params, *, voc_length, embedding_dim, hidden_size,
                           num_layers, vocab_tile=512):
    f32, bf16 = jnp.float32, jnp.bfloat16
    H, E, V, L = hidden_size, embedding_dim, voc_length, num_layers
    Hp, Ep = _round_up(H, 128), _round_up(E, 128)
    Vp = _round_up(V, 128)
    TN = min(vocab_tile, Vp)
    Vp = _round_up(Vp, TN)

    prep = {}
    prep["embedding"] = (jnp.zeros((_round_up(V, 8), Ep), f32)
                         .at[:V, :E].set(params["embedding"].astype(f32)))

    for l in range(L):
        in_dim = E if l == 0 else H
        Ip = Ep if l == 0 else Hp
        w_ih, w_hh = params[f"w_ih_{l}"], params[f"w_hh_{l}"]
        b_ih, b_hh = params[f"b_ih_{l}"], params[f"b_hh_{l}"]
        # block weight so that  [x | h] @ W  = [ x @ w_ih.T | h @ w_hh.T ]  (per-gate padded)
        W = jnp.zeros((Ip + Hp, 6 * Hp), f32)
        b = jnp.zeros((1, 6 * Hp), f32)
        for g in range(3):  # r, z, n
            W = W.at[:in_dim, g * Hp:g * Hp + H].set(w_ih[g * H:(g + 1) * H, :].T)
            W = W.at[Ip:Ip + H, 3 * Hp + g * Hp:3 * Hp + g * Hp + H].set(
                w_hh[g * H:(g + 1) * H, :].T)
            b = b.at[0, g * Hp:g * Hp + H].set(b_ih[g * H:(g + 1) * H])
            b = b.at[0, 3 * Hp + g * Hp:3 * Hp + g * Hp + H].set(b_hh[g * H:(g + 1) * H])
        prep[f"w_gru_{l}"] = W.astype(bf16)
        prep[f"b_gru_{l}"] = b

    # attention 'general' weight, kept in [out,in] layout because the factored score
    # contracts over the output axis:  t = rnn @ Wa
    prep["w_attn"] = (jnp.zeros((Hp, Hp), f32)
                      .at[:H, :H].set(params["w_attn"]).astype(bf16))
    wc = params["w_concat"]                                     # [H, 2H]
    wct = jnp.zeros((2 * Hp, Hp), f32)
    wct = wct.at[:H, :H].set(wc[:, :H].T)                       # rnn half
    wct = wct.at[Hp:Hp + H, :H].set(wc[:, H:].T)                # context half
    prep["w_concat_t"] = wct.astype(bf16)
    prep["b_concat"] = jnp.zeros((1, Hp), f32).at[0, :H].set(params["b_concat"])
    prep["w_out_t"] = (jnp.zeros((Hp, Vp), f32)
                       .at[:H, :V].set(params["w_out"].T).astype(bf16))
    # padded vocab columns get a huge negative bias -> exactly zero probability after softmax
    prep["b_out"] = jnp.full((1, Vp), -1e30, f32).at[0, :V].set(params["b_out"])

    dims = dict(H=H, E=E, V=V, L=L, Hp=Hp, Ep=Ep, Vp=Vp, TN=TN)
    return prep, dims


# --------------------------------------------------------------------------- #
# Build the jitted forward (pallas_calls constructed once with static shapes)
# --------------------------------------------------------------------------- #
def build_attention_decoder(dims, *, batch_size, max_seq_len):
    H, E, V, L = dims["H"], dims["E"], dims["V"], dims["L"]
    Hp, Ep, Vp, TN = dims["Hp"], dims["Ep"], dims["Vp"], dims["TN"]
    Bp = _round_up(max(batch_size, 8), 8)
    Sp = _round_up(max(max_seq_len, 8), 8)

    kernel = _make_fused_kernel(L, Hp, Sp, max_seq_len, Bp)

    in_specs = [
        pl.BlockSpec(memory_space=pl.ANY),                                # embedding (HBM)
        pl.BlockSpec((L, Bp, Hp), lambda j, tok: (0, 0, 0)),              # h0
        pl.BlockSpec((Bp, Sp, Hp), lambda j, tok: (0, 0, 0)),             # encoder outputs
    ]
    for l in range(L):
        Ip = Ep if l == 0 else Hp
        in_specs.append(pl.BlockSpec((Ip + Hp, 6 * Hp), lambda j, tok: (0, 0)))
        in_specs.append(pl.BlockSpec((1, 6 * Hp), lambda j, tok: (0, 0)))
    in_specs += [
        pl.BlockSpec((Hp, Hp), lambda j, tok: (0, 0)),                    # w_attn
        pl.BlockSpec((2 * Hp, Hp), lambda j, tok: (0, 0)),                # w_concat_t
        pl.BlockSpec((1, Hp), lambda j, tok: (0, 0)),                     # b_concat
        pl.BlockSpec((Hp, TN), lambda j, tok: (0, j)),                    # w_out_t (tiled)
        pl.BlockSpec((1, TN), lambda j, tok: (0, j)),                     # b_out   (tiled)
    ]
    out_specs = [
        pl.BlockSpec((L, Bp, Hp), lambda j, tok: (0, 0, 0)),              # new hidden
        pl.BlockSpec((Bp, TN), lambda j, tok: (0, j)),                    # logits tile
    ]
    grid_spec = pltpu.PrefetchScalarGridSpec(
        num_scalar_prefetch=1,
        grid=(Vp // TN,),
        in_specs=in_specs,
        out_specs=out_specs,
        scratch_shapes=[pltpu.VMEM((Bp, Ep), jnp.float32),     # gathered embedding rows
                        pltpu.SemaphoreType.DMA((Bp,)),        # per-row DMA semaphores
                        pltpu.VMEM((Bp, Hp), jnp.float32)])    # concat_output (resident)

    fused = pl.pallas_call(
        kernel,
        out_shape=(jax.ShapeDtypeStruct((L, Bp, Hp), jnp.float32),
                   jax.ShapeDtypeStruct((Bp, Vp), jnp.float32)),
        grid_spec=grid_spec,
        compiler_params=pltpu.CompilerParams(
            # TODO(synk): mark the vocab axis 'parallel' + per-core softmax partials for v7x megacore.
            dimension_semantics=("arbitrary",),
            vmem_limit_bytes=64 * 1024 * 1024),
    )

    softmax = pl.pallas_call(
        _softmax_kernel,
        out_shape=jax.ShapeDtypeStruct((Bp, Vp), jnp.float32),
        in_specs=[pl.BlockSpec(memory_space=pltpu.MemorySpace.VMEM)],
        out_specs=pl.BlockSpec(memory_space=pltpu.MemorySpace.VMEM),
    )

    @jax.jit
    def forward(prep, input_step, last_hidden, encoder_outputs):
        B, S = batch_size, max_seq_len
        tok = jnp.zeros((Bp,), jnp.int32).at[:B].set(input_step[0].astype(jnp.int32))
        h0 = (jnp.zeros((L, Bp, Hp), jnp.float32)
              .at[:, :B, :H].set(last_hidden.astype(jnp.float32)))
        enc = (jnp.zeros((Bp, Sp, Hp), jnp.float32)
               .at[:B, :S, :H].set(jnp.transpose(encoder_outputs, (1, 0, 2)).astype(jnp.float32)))
        args = [tok, prep["embedding"], h0, enc]
        for l in range(L):
            args += [prep[f"w_gru_{l}"], prep[f"b_gru_{l}"]]
        args += [prep["w_attn"], prep["w_concat_t"], prep["b_concat"],
                 prep["w_out_t"], prep["b_out"]]
        hidden_pad, logits = fused(*args)
        probs = softmax(logits)
        return probs[:B, :V], hidden_pad[:, :B, :H]

    return forward


# --------------------------------------------------------------------------- #
# Pure-JAX reference (PyTorch semantics, mirroring the kernel's bf16-in / f32-acc policy)
# --------------------------------------------------------------------------- #
def reference_forward(params, input_step, last_hidden, encoder_outputs):
    bf16, f32 = jnp.bfloat16, jnp.float32
    mm = lambda a, b: jnp.dot(a.astype(bf16), b.astype(bf16), preferred_element_type=f32)

    H = last_hidden.shape[-1]
    emb = params["embedding"][input_step[0]]                      # [B, E]
    x = emb
    hs = []
    for l in range(last_hidden.shape[0]):
        h = last_hidden[l]
        gi = mm(x, params[f"w_ih_{l}"].T) + params[f"b_ih_{l}"]
        gh = mm(h, params[f"w_hh_{l}"].T) + params[f"b_hh_{l}"]
        r = jax.nn.sigmoid(gi[:, :H] + gh[:, :H])
        z = jax.nn.sigmoid(gi[:, H:2 * H] + gh[:, H:2 * H])
        n = jnp.tanh(gi[:, 2 * H:] + r * gh[:, 2 * H:])
        h = (1.0 - z) * n + z * h
        hs.append(h)
        x = h
    hidden = jnp.stack(hs)
    rnn = x                                                       # [B, H]
    enc_b = jnp.transpose(encoder_outputs, (1, 0, 2))             # [B, S, H]

    # 'general' score, factored exactly like the kernel (mathematically identical to
    # energy = Linear(enc); score = sum(rnn * energy)); the bias term is constant over
    # the sequence axis and cancels in the softmax.
    t = mm(rnn, params["w_attn"])
    scores = jnp.einsum('bsh,bh->bs', enc_b.astype(bf16), t.astype(bf16),
                        preferred_element_type=f32)
    scores = scores + jnp.sum(rnn * params["b_attn"], axis=1, keepdims=True)
    attn = jax.nn.softmax(scores, axis=1)                         # [B, S]
    context = jnp.einsum('bs,bsh->bh', attn.astype(bf16), enc_b.astype(bf16),
                         preferred_element_type=f32)
    concat_in = jnp.concatenate([rnn, context], axis=1)
    concat_out = jnp.tanh(mm(concat_in, params["w_concat"].T) + params["b_concat"])
    logits = mm(concat_out, params["w_out"].T) + params["b_out"]
    out = jax.nn.softmax(logits, axis=1)
    return out, hidden


# --------------------------------------------------------------------------- #
# Parameter init (PyTorch layouts)
# --------------------------------------------------------------------------- #
def init_params(key, voc_length, embedding_dim, hidden_size, num_layers):
    ks = jax.random.split(key, 16)
    i = iter(range(16))
    s = 0.1
    p = {"embedding": s * jax.random.normal(ks[next(i)], (voc_length, embedding_dim), jnp.float32)}
    for l in range(num_layers):
        in_dim = embedding_dim if l == 0 else hidden_size
        p[f"w_ih_{l}"] = s * jax.random.normal(ks[next(i)], (3 * hidden_size, in_dim), jnp.float32)
        p[f"w_hh_{l}"] = s * jax.random.normal(ks[next(i)], (3 * hidden_size, hidden_size), jnp.float32)
        p[f"b_ih_{l}"] = s * jax.random.normal(ks[next(i)], (3 * hidden_size,), jnp.float32)
        p[f"b_hh_{l}"] = s * jax.random.normal(ks[next(i)], (3 * hidden_size,), jnp.float32)
    p["w_attn"] = s * jax.random.normal(ks[next(i)], (hidden_size, hidden_size), jnp.float32)
    p["b_attn"] = s * jax.random.normal(ks[next(i)], (hidden_size,), jnp.float32)
    p["w_concat"] = s * jax.random.normal(ks[next(i)], (hidden_size, 2 * hidden_size), jnp.float32)
    p["b_concat"] = s * jax.random.normal(ks[next(i)], (hidden_size,), jnp.float32)
    p["w_out"] = s * jax.random.normal(ks[next(i)], (voc_length, hidden_size), jnp.float32)
    p["b_out"] = s * jax.random.normal(ks[next(i)], (voc_length,), jnp.float32)
    return p


if __name__ == "__main__":
    B, E, H, S, V, L = 2, 16, 32, 8, 40, 2
    key = jax.random.PRNGKey(0)
    kp, k1, k2, k3 = jax.random.split(key, 4)

    params = init_params(kp, voc_length=V, embedding_dim=E, hidden_size=H, num_layers=L)
    input_step = jax.random.randint(k1, (1, B), 0, V, dtype=jnp.int32)         # [1, B]
    last_hidden = jax.random.normal(k2, (L, B, H), jnp.float32)                # [L, B, H]
    encoder_outputs = jax.random.normal(k3, (S, B, H), jnp.float32)            # [S, B, H]

    prep, dims = prepare_decoder_params(params, voc_length=V, embedding_dim=E,
                                        hidden_size=H, num_layers=L)
    forward = build_attention_decoder(dims, batch_size=B, max_seq_len=S)

    out, hidden = forward(prep, input_step, last_hidden, encoder_outputs)
    out = jax.block_until_ready(out)
    hidden = jax.block_until_ready(hidden)

    out_ref, hidden_ref = reference_forward(params, input_step, last_hidden, encoder_outputs)

    assert out.shape == (B, V) and hidden.shape == (L, B, H)
    assert bool(jnp.allclose(jnp.sum(out, axis=1), 1.0, atol=1e-3))
    assert bool(jnp.allclose(out, out_ref, atol=2e-3, rtol=2e-3)), \
        f"max |dout| = {float(jnp.max(jnp.abs(out - out_ref)))}"
    assert bool(jnp.allclose(hidden, hidden_ref, atol=2e-3, rtol=2e-3)), \
        f"max |dh| = {float(jnp.max(jnp.abs(hidden - hidden_ref)))}"
    print("KERNEL_OK")
</pallas_src>

<mosaic_0001>
module attributes {stable_mosaic.version = 11 : i64} {
  func.func @_softmax_kernel(%arg0: memref<8x128xf32, #tpu.memory_space<vmem>>, %arg1: memref<8x128xf32, #tpu.memory_space<vmem>>) attributes {dimension_semantics = [], scalar_prefetch = 0 : i64, scratch_operands = 0 : i64, tpu.core_type = #tpu.core_type<tc>} {
    %c0 = arith.constant 0 : index
    %c0_0 = arith.constant 0 : index
    %0 = vector.load %arg0[%c0, %c0_0] : memref<8x128xf32, #tpu.memory_space<vmem>>, vector<8x128xf32>
    %cst = arith.constant dense<0xFF800000> : vector<8xf32>
    %1 = vector.multi_reduction <maximumf>, %0, %cst [1] : vector<8x128xf32> to vector<8xf32>
    %2 = vector.shape_cast %1 : vector<8xf32> to vector<8x1xf32>
    %3 = vector.broadcast %2 : vector<8x1xf32> to vector<8x128xf32>
    %4 = arith.subf %0, %3 : vector<8x128xf32>
    %5 = math.exp %4 : vector<8x128xf32>
    %cst_1 = arith.constant dense<0.000000e+00> : vector<8xf32>
    %6 = vector.multi_reduction <add>, %5, %cst_1 [1] : vector<8x128xf32> to vector<8xf32>
    %7 = vector.shape_cast %6 : vector<8xf32> to vector<8x1xf32>
    %8 = vector.broadcast %7 : vector<8x1xf32> to vector<8x128xf32>
    %9 = arith.divf %5, %8 : vector<8x128xf32>
    %c0_2 = arith.constant 0 : index
    %c0_3 = arith.constant 0 : index
    %10 = vector.load %arg1[%c0_2, %c0_3] : memref<8x128xf32, #tpu.memory_space<vmem>>, vector<8x128xf32>
    tpu.vector_store %arg1[%c0_2, %c0_3], %9 {strides = array<i32>} : memref<8x128xf32, #tpu.memory_space<vmem>>, vector<8x128xf32>,
    return
  }
}

module attributes {stable_mosaic.version = 11 : i64} {
  func.func @kernel(%arg0: i32, %arg1: memref<8xi32, #tpu.memory_space<smem>>, %arg2: memref<40x128xf32, #tpu.memory_space<any>>, %arg3: memref<2x8x128xf32, #tpu.memory_space<vmem>>, %arg4: memref<8x8x128xf32, #tpu.memory_space<vmem>>, %arg5: memref<256x768xbf16, #tpu.memory_space<vmem>>, %arg6: memref<1x768xf32, #tpu.memory_space<vmem>>, %arg7: memref<256x768xbf16, #tpu.memory_space<vmem>>, %arg8: memref<1x768xf32, #tpu.memory_space<vmem>>, %arg9: memref<128x128xbf16, #tpu.memory_space<vmem>>, %arg10: memref<256x128xbf16, #tpu.memory_space<vmem>>, %arg11: memref<1x128xf32, #tpu.memory_space<vmem>>, %arg12: memref<128x128xbf16, #tpu.memory_space<vmem>>, %arg13: memref<1x128xf32, #tpu.memory_space<vmem>>, %arg14: memref<2x8x128xf32, #tpu.memory_space<vmem>>, %arg15: memref<8x128xf32, #tpu.memory_space<vmem>>, %arg16: memref<8x128xf32, #tpu.memory_space<vmem>>, %arg17: memref<8x!tpu.dma_semaphore, #tpu.memory_space<semaphore_mem>>, %arg18: memref<8x128xf32, #tpu.memory_space<vmem>>) attributes {dimension_semantics = [#tpu.dimension_semantics<arbitrary>], iteration_bounds = array<i64: 1>, scalar_prefetch = 1 : i64, scratch_operands = 3 : i64, tpu.core_type = #tpu.core_type<tc>, window_params = [{}, {pipeline_mode = #tpu.pipeline_mode<synchronous>, transform_indices = @transform_1, window_bounds = array<i64: 2, 8, 128>}, {pipeline_mode = #tpu.pipeline_mode<synchronous>, transform_indices = @transform_2, window_bounds = array<i64: 8, 8, 128>}, {pipeline_mode = #tpu.pipeline_mode<synchronous>, transform_indices = @transform_3, window_bounds = array<i64: 256, 768>}, {pipeline_mode = #tpu.pipeline_mode<synchronous>, transform_indices = @transform_4, window_bounds = array<i64: 1, 768>}, {pipeline_mode = #tpu.pipeline_mode<synchronous>, transform_indices = @transform_5, window_bounds = array<i64: 256, 768>}, {pipeline_mode = #tpu.pipeline_mode<synchronous>, transform_indices = @transform_6, window_bounds = array<i64: 1, 768>}, {pipeline_mode = #tpu.pipeline_mode<synchronous>, transform_indices = @transform_7, window_bounds = array<i64: 128, 128>}, {pipeline_mode = #tpu.pipeline_mode<synchronous>, transform_indices = @transform_8, window_bounds = array<i64: 256, 128>}, {pipeline_mode = #tpu.pipeline_mode<synchronous>, transform_indices = @transform_9, window_bounds = array<i64: 1, 128>}, {transform_indices = @transform_10, window_bounds = array<i64: 128, 128>}, {transform_indices = @transform_11, window_bounds = array<i64: 1, 128>}, {pipeline_mode = #tpu.pipeline_mode<synchronous>, transform_indices = @transform_12, window_bounds = array<i64: 2, 8, 128>}, {transform_indices = @transform_13, window_bounds = array<i64: 8, 128>}]} {
    %c0_i32 = arith.constant 0 : i32
    %0 = arith.cmpi eq, %arg0, %c0_i32 : i32
    %1 = arith.extui %0 : i1 to i32
    %c0_i32_0 = arith.constant 0 : i32
    %2 = arith.cmpi ne, %1, %c0_i32_0 : i32
    scf.if %2 {
      %c0_8 = arith.constant 0 : index
      %11 = memref.load %arg1[%c0_8] : memref<8xi32, #tpu.memory_space<smem>>
      %c0_i32_9 = arith.constant 0 : i32
      %c0_i32_10 = arith.constant 0 : i32
      %12 = tpu.memref_slice %arg2[%11, %c0_i32_10] : memref<40x128xf32, #tpu.memory_space<any>> -> memref<1x128xf32, #tpu.memory_space<any>>
      %c0_i32_11 = arith.constant 0 : i32
      %c0_i32_12 = arith.constant 0 : i32
      %13 = tpu.memref_slice %arg16[%c0_i32_11, %c0_i32_12] : memref<8x128xf32, #tpu.memory_space<vmem>> -> memref<1x128xf32, #tpu.memory_space<vmem>>
      %14 = tpu.memref_slice %arg17[%c0_i32_9] : memref<8x!tpu.dma_semaphore, #tpu.memory_space<semaphore_mem>> -> memref<1x!tpu.dma_semaphore, #tpu.memory_space<semaphore_mem>>
      %15 = tpu.memref_squeeze %14 : memref<1x!tpu.dma_semaphore, #tpu.memory_space<semaphore_mem>> -> memref<!tpu.dma_semaphore, #tpu.memory_space<semaphore_mem>>
      tpu.enqueue_dma source(%12 : memref<1x128xf32, #tpu.memory_space<any>>) target(%13 : memref<1x128xf32, #tpu.memory_space<vmem>>) target_semaphore(%15 : memref<!tpu.dma_semaphore, #tpu.memory_space<semaphore_mem>>)
      %c1 = arith.constant 1 : index
      %16 = memref.load %arg1[%c1] : memref<8xi32, #tpu.memory_space<smem>>
      %c1_i32 = arith.constant 1 : i32
      %c0_i32_13 = arith.constant 0 : i32
      %17 = tpu.memref_slice %arg2[%16, %c0_i32_13] : memref<40x128xf32, #tpu.memory_space<any>> -> memref<1x128xf32, #tpu.memory_space<any>>
      %c1_i32_14 = arith.constant 1 : i32
      %c0_i32_15 = arith.constant 0 : i32
      %18 = tpu.memref_slice %arg16[%c1_i32_14, %c0_i32_15] : memref<8x128xf32, #tpu.memory_space<vmem>> -> memref<1x128xf32, #tpu.memory_space<vmem>>
      %19 = tpu.memref_slice %arg17[%c1_i32] : memref<8x!tpu.dma_semaphore, #tpu.memory_space<semaphore_mem>> -> memref<1x!tpu.dma_semaphore, #tpu.memory_space<semaphore_mem>>
      %20 = tpu.memref_squeeze %19 : memref<1x!tpu.dma_semaphore, #tpu.memory_space<semaphore_mem>> -> memref<!tpu.dma_semaphore, #tpu.memory_space<semaphore_mem>>
      tpu.enqueue_dma source(%17 : memref<1x128xf32, #tpu.memory_space<any>>) target(%18 : memref<1x128xf32, #tpu.memory_space<vmem>>) target_semaphore(%20 : memref<!tpu.dma_semaphore, #tpu.memory_space<semaphore_mem>>)
      %c2 = arith.constant 2 : index
      %21 = memref.load %arg1[%c2] : memref<8xi32, #tpu.memory_space<smem>>
      %c2_i32 = arith.constant 2 : i32
      %c0_i32_16 = arith.constant 0 : i32
      %22 = tpu.memref_slice %arg2[%21, %c0_i32_16] : memref<40x128xf32, #tpu.memory_space<any>> -> memref<1x128xf32, #tpu.memory_space<any>>
      %c2_i32_17 = arith.constant 2 : i32
      %c0_i32_18 = arith.constant 0 : i32
      %23 = tpu.memref_slice %arg16[%c2_i32_17, %c0_i32_18] : memref<8x128xf32, #tpu.memory_space<vmem>> -> memref<1x128xf32, #tpu.memory_space<vmem>>
      %24 = tpu.memref_slice %arg17[%c2_i32] : memref<8x!tpu.dma_semaphore, #tpu.memory_space<semaphore_mem>> -> memref<1x!tpu.dma_semaphore, #tpu.memory_space<semaphore_mem>>
      %25 = tpu.memref_squeeze %24 : memref<1x!tpu.dma_semaphore, #tpu.memory_space<semaphore_mem>> -> memref<!tpu.dma_semaphore, #tpu.memory_space<semaphore_mem>>
      tpu.enqueue_dma source(%22 : memref<1x128xf32, #tpu.memory_space<any>>) target(%23 : memref<1x128xf32, #tpu.memory_space<vmem>>) target_semaphore(%25 : memref<!tpu.dma_semaphore, #tpu.memory_space<semaphore_mem>>)
      %c3 = arith.constant 3 : index
      %26 = memref.load %arg1[%c3] : memref<8xi32, #tpu.memory_space<smem>>
      %c3_i32 = arith.constant 3 : i32
      %c0_i32_19 = arith.constant 0 : i32
      %27 = tpu.memref_slice %arg2[%26, %c0_i32_19] : memref<40x128xf32, #tpu.memory_space<any>> -> memref<1x128xf32, #tpu.memory_space<any>>
      %c3_i32_20 = arith.constant 3 : i32
      %c0_i32_21 = arith.constant 0 : i32
      %28 = tpu.memref_slice %arg16[%c3_i32_20, %c0_i32_21] : memref<8x128xf32, #tpu.memory_space<vmem>> -> memref<1x128xf32, #tpu.memory_space<vmem>>
      %29 = tpu.memref_slice %arg17[%c3_i32] : memref<8x!tpu.dma_semaphore, #tpu.memory_space<semaphore_mem>> -> memref<1x!tpu.dma_semaphore, #tpu.memory_space<semaphore_mem>>
      %30 = tpu.memref_squeeze %29 : memref<1x!tpu.dma_semaphore, #tpu.memory_space<semaphore_mem>> -> memref<!tpu.dma_semaphore, #tpu.memory_space<semaphore_mem>>
      tpu.enqueue_dma source(%27 : memref<1x128xf32, #tpu.memory_space<any>>) target(%28 : memref<1x128xf32, #tpu.memory_space<vmem>>) target_semaphore(%30 : memref<!tpu.dma_semaphore, #tpu.memory_space<semaphore_mem>>)
      %c4 = arith.constant 4 : index
      %31 = memref.load %arg1[%c4] : memref<8xi32, #tpu.memory_space<smem>>
      %c4_i32 = arith.constant 4 : i32
      %c0_i32_22 = arith.constant 0 : i32
      %32 = tpu.memref_slice %arg2[%31, %c0_i32_22] : memref<40x128xf32, #tpu.memory_space<any>> -> memref<1x128xf32, #tpu.memory_space<any>>
      %c4_i32_23 = arith.constant 4 : i32
      %c0_i32_24 = arith.constant 0 : i32
      %33 = tpu.memref_slice %arg16[%c4_i32_23, %c0_i32_24] : memref<8x128xf32, #tpu.memory_space<vmem>> -> memref<1x128xf32, #tpu.memory_space<vmem>>
      %34 = tpu.memref_slice %arg17[%c4_i32] : memref<8x!tpu.dma_semaphore, #tpu.memory_space<semaphore_mem>> -> memref<1x!tpu.dma_semaphore, #tpu.memory_space<semaphore_mem>>
      %35 = tpu.memref_squeeze %34 : memref<1x!tpu.dma_semaphore, #tpu.memory_space<semaphore_mem>> -> memref<!tpu.dma_semaphore, #tpu.memory_space<semaphore_mem>>
      tpu.enqueue_dma source(%32 : memref<1x128xf32, #tpu.memory_space<any>>) target(%33 : memref<1x128xf32, #tpu.memory_space<vmem>>) target_semaphore(%35 : memref<!tpu.dma_semaphore, #tpu.memory_space<semaphore_mem>>)
      %c5 = arith.constant 5 : index
      %36 = memref.load %arg1[%c5] : memref<8xi32, #tpu.memory_space<smem>>
      %c5_i32 = arith.constant 5 : i32
      %c0_i32_25 = arith.constant 0 : i32
      %37 = tpu.memref_slice %arg2[%36, %c0_i32_25] : memref<40x128xf32, #tpu.memory_space<any>> -> memref<1x128xf32, #tpu.memory_space<any>>
      %c5_i32_26 = arith.constant 5 : i32
      %c0_i32_27 = arith.constant 0 : i32
      %38 = tpu.memref_slice %arg16[%c5_i32_26, %c0_i32_27] : memref<8x128xf32, #tpu.memory_space<vmem>> -> memref<1x128xf32, #tpu.memory_space<vmem>>
      %39 = tpu.memref_slice %arg17[%c5_i32] : memref<8x!tpu.dma_semaphore, #tpu.memory_space<semaphore_mem>> -> memref<1x!tpu.dma_semaphore, #tpu.memory_space<semaphore_mem>>
      %40 = tpu.memref_squeeze %39 : memref<1x!tpu.dma_semaphore, #tpu.memory_space<semaphore_mem>> -> memref<!tpu.dma_semaphore, #tpu.memory_space<semaphore_mem>>
      tpu.enqueue_dma source(%37 : memref<1x128xf32, #tpu.memory_space<any>>) target(%38 : memref<1x128xf32, #tpu.memory_space<vmem>>) target_semaphore(%40 : memref<!tpu.dma_semaphore, #tpu.memory_space<semaphore_mem>>)
      %c6 = arith.constant 6 : index
      %41 = memref.load %arg1[%c6] : memref<8xi32, #tpu.memory_space<smem>>
      %c6_i32 = arith.constant 6 : i32
      %c0_i32_28 = arith.constant 0 : i32
      %42 = tpu.memref_slice %arg2[%41, %c0_i32_28] : memref<40x128xf32, #tpu.memory_space<any>> -> memref<1x128xf32, #tpu.memory_space<any>>
      %c6_i32_29 = arith.constant 6 : i32
      %c0_i32_30 = arith.constant 0 : i32
      %43 = tpu.memref_slice %arg16[%c6_i32_29, %c0_i32_30] : memref<8x128xf32, #tpu.memory_space<vmem>> -> memref<1x128xf32, #tpu.memory_space<vmem>>
      %44 = tpu.memref_slice %arg17[%c6_i32] : memref<8x!tpu.dma_semaphore, #tpu.memory_space<semaphore_mem>> -> memref<1x!tpu.dma_semaphore, #tpu.memory_space<semaphore_mem>>
      %45 = tpu.memref_squeeze %44 : memref<1x!tpu.dma_semaphore, #tpu.memory_space<semaphore_mem>> -> memref<!tpu.dma_semaphore, #tpu.memory_space<semaphore_mem>>
      tpu.enqueue_dma source(%42 : memref<1x128xf32, #tpu.memory_space<any>>) target(%43 : memref<1x128xf32, #tpu.memory_space<vmem>>) target_semaphore(%45 : memref<!tpu.dma_semaphore, #tpu.memory_space<semaphore_mem>>)
      %c7 = arith.constant 7 : index
      %46 = memref.load %arg1[%c7] : memref<8xi32, #tpu.memory_space<smem>>
      %c7_i32 = arith.constant 7 : i32
      %c0_i32_31 = arith.constant 0 : i32
      %47 = tpu.memref_slice %arg2[%46, %c0_i32_31] : memref<40x128xf32, #tpu.memory_space<any>> -> memref<1x128xf32, #tpu.memory_space<any>>
      %c7_i32_32 = arith.constant 7 : i32
      %c0_i32_33 = arith.constant 0 : i32
      %48 = tpu.memref_slice %arg16[%c7_i32_32, %c0_i32_33] : memref<8x128xf32, #tpu.memory_space<vmem>> -> memref<1x128xf32, #tpu.memory_space<vmem>>
      %49 = tpu.memref_slice %arg17[%c7_i32] : memref<8x!tpu.dma_semaphore, #tpu.memory_space<semaphore_mem>> -> memref<1x!tpu.dma_semaphore, #tpu.memory_space<semaphore_mem>>
      %50 = tpu.memref_squeeze %49 : memref<1x!tpu.dma_semaphore, #tpu.memory_space<semaphore_mem>> -> memref<!tpu.dma_semaphore, #tpu.memory_space<semaphore_mem>>
      tpu.enqueue_dma source(%47 : memref<1x128xf32, #tpu.memory_space<any>>) target(%48 : memref<1x128xf32, #tpu.memory_space<vmem>>) target_semaphore(%50 : memref<!tpu.dma_semaphore, #tpu.memory_space<semaphore_mem>>)
      %c0_i32_34 = arith.constant 0 : i32
      %c0_i32_35 = arith.constant 0 : i32
      %51 = tpu.memref_slice %arg2[%11, %c0_i32_35] : memref<40x128xf32, #tpu.memory_space<any>> -> memref<1x128xf32, #tpu.memory_space<any>>
      %c0_i32_36 = arith.constant 0 : i32
      %c0_i32_37 = arith.constant 0 : i32
      %52 = tpu.memref_slice %arg16[%c0_i32_36, %c0_i32_37] : memref<8x128xf32, #tpu.memory_space<vmem>> -> memref<1x128xf32, #tpu.memory_space<vmem>>
      %53 = tpu.memref_slice %arg17[%c0_i32_34] : memref<8x!tpu.dma_semaphore, #tpu.memory_space<semaphore_mem>> -> memref<1x!tpu.dma_semaphore, #tpu.memory_space<semaphore_mem>>
      %54 = tpu.memref_squeeze %53 : memref<1x!tpu.dma_semaphore, #tpu.memory_space<semaphore_mem>> -> memref<!tpu.dma_semaphore, #tpu.memory_space<semaphore_mem>>
      tpu.wait_dma2 semaphore(%54 : memref<!tpu.dma_semaphore, #tpu.memory_space<semaphore_mem>>) src(%51 : memref<1x128xf32, #tpu.memory_space<any>>) dst(%52 : memref<1x128xf32, #tpu.memory_space<vmem>>)
      %c1_i32_38 = arith.constant 1 : i32
      %c0_i32_39 = arith.constant 0 : i32
      %55 = tpu.memref_slice %arg2[%16, %c0_i32_39] : memref<40x128xf32, #tpu.memory_space<any>> -> memref<1x128xf32, #tpu.memory_space<any>>
      %c1_i32_40 = arith.constant 1 : i32
      %c0_i32_41 = arith.constant 0 : i32
      %56 = tpu.memref_slice %arg16[%c1_i32_40, %c0_i32_41] : memref<8x128xf32, #tpu.memory_space<vmem>> -> memref<1x128xf32, #tpu.memory_space<vmem>>
      %57 = tpu.memref_slice %arg17[%c1_i32_38] : memref<8x!tpu.dma_semaphore, #tpu.memory_space<semaphore_mem>> -> memref<1x!tpu.dma_semaphore, #tpu.memory_space<semaphore_mem>>
      %58 = tpu.memref_squeeze %57 : memref<1x!tpu.dma_semaphore, #tpu.memory_space<semaphore_mem>> -> memref<!tpu.dma_semaphore, #tpu.memory_space<semaphore_mem>>
      tpu.wait_dma2 semaphore(%58 : memref<!tpu.dma_semaphore, #tpu.memory_space<semaphore_mem>>) src(%55 : memref<1x128xf32, #tpu.memory_space<any>>) dst(%56 : memref<1x128xf32, #tpu.memory_space<vmem>>)
      %c2_i32_42 = arith.constant 2 : i32
      %c0_i32_43 = arith.constant 0 : i32
      %59 = tpu.memref_slice %arg2[%21, %c0_i32_43] : memref<40x128xf32, #tpu.memory_space<any>> -> memref<1x128xf32, #tpu.memory_space<any>>
      %c2_i32_44 = arith.constant 2 : i32
      %c0_i32_45 = arith.constant 0 : i32
      %60 = tpu.memref_slice %arg16[%c2_i32_44, %c0_i32_45] : memref<8x128xf32, #tpu.memory_space<vmem>> -> memref<1x128xf32, #tpu.memory_space<vmem>>
      %61 = tpu.memref_slice %arg17[%c2_i32_42] : memref<8x!tpu.dma_semaphore, #tpu.memory_space<semaphore_mem>> -> memref<1x!tpu.dma_semaphore, #tpu.memory_space<semaphore_mem>>
      %62 = tpu.memref_squeeze %61 : memref<1x!tpu.dma_semaphore, #tpu.memory_space<semaphore_mem>> -> memref<!tpu.dma_semaphore, #tpu.memory_space<semaphore_mem>>
      tpu.wait_dma2 semaphore(%62 : memref<!tpu.dma_semaphore, #tpu.memory_space<semaphore_mem>>) src(%59 : memref<1x128xf32, #tpu.memory_space<any>>) dst(%60 : memref<1x128xf32, #tpu.memory_space<vmem>>)
      %c3_i32_46 = arith.constant 3 : i32
      %c0_i32_47 = arith.constant 0 : i32
      %63 = tpu.memref_slice %arg2[%26, %c0_i32_47] : memref<40x128xf32, #tpu.memory_space<any>> -> memref<1x128xf32, #tpu.memory_space<any>>
      %c3_i32_48 = arith.constant 3 : i32
      %c0_i32_49 = arith.constant 0 : i32
      %64 = tpu.memref_slice %arg16[%c3_i32_48, %c0_i32_49] : memref<8x128xf32, #tpu.memory_space<vmem>> -> memref<1x128xf32, #tpu.memory_space<vmem>>
      %65 = tpu.memref_slice %arg17[%c3_i32_46] : memref<8x!tpu.dma_semaphore, #tpu.memory_space<semaphore_mem>> -> memref<1x!tpu.dma_semaphore, #tpu.memory_space<semaphore_mem>>
      %66 = tpu.memref_squeeze %65 : memref<1x!tpu.dma_semaphore, #tpu.memory_space<semaphore_mem>> -> memref<!tpu.dma_semaphore, #tpu.memory_space<semaphore_mem>>
      tpu.wait_dma2 semaphore(%66 : memref<!tpu.dma_semaphore, #tpu.memory_space<semaphore_mem>>) src(%63 : memref<1x128xf32, #tpu.memory_space<any>>) dst(%64 : memref<1x128xf32, #tpu.memory_space<vmem>>)
      %c4_i32_50 = arith.constant 4 : i32
      %c0_i32_51 = arith.constant 0 : i32
      %67 = tpu.memref_slice %arg2[%31, %c0_i32_51] : memref<40x128xf32, #tpu.memory_space<any>> -> memref<1x128xf32, #tpu.memory_space<any>>
      %c4_i32_52 = arith.constant 4 : i32
      %c0_i32_53 = arith.constant 0 : i32
      %68 = tpu.memref_slice %arg16[%c4_i32_52, %c0_i32_53] : memref<8x128xf32, #tpu.memory_space<vmem>> -> memref<1x128xf32, #tpu.memory_space<vmem>>
      %69 = tpu.memref_slice %arg17[%c4_i32_50] : memref<8x!tpu.dma_semaphore, #tpu.memory_space<semaphore_mem>> -> memref<1x!tpu.dma_semaphore, #tpu.memory_space<semaphore_mem>>
      %70 = tpu.memref_squeeze %69 : memref<1x!tpu.dma_semaphore, #tpu.memory_space<semaphore_mem>> -> memref<!tpu.dma_semaphore, #tpu.memory_space<semaphore_mem>>
      tpu.wait_dma2 semaphore(%70 : memref<!tpu.dma_semaphore, #tpu.memory_space<semaphore_mem>>) src(%67 : memref<1x128xf32, #tpu.memory_space<any>>) dst(%68 : memref<1x128xf32, #tpu.memory_space<vmem>>)
      %c5_i32_54 = arith.constant 5 : i32
      %c0_i32_55 = arith.constant 0 : i32
      %71 = tpu.memref_slice %arg2[%36, %c0_i32_55] : memref<40x128xf32, #tpu.memory_space<any>> -> memref<1x128xf32, #tpu.memory_space<any>>
      %c5_i32_56 = arith.constant 5 : i32
      %c0_i32_57 = arith.constant 0 : i32
      %72 = tpu.memref_slice %arg16[%c5_i32_56, %c0_i32_57] : memref<8x128xf32, #tpu.memory_space<vmem>> -> memref<1x128xf32, #tpu.memory_space<vmem>>
      %73 = tpu.memref_slice %arg17[%c5_i32_54] : memref<8x!tpu.dma_semaphore, #tpu.memory_space<semaphore_mem>> -> memref<1x!tpu.dma_semaphore, #tpu.memory_space<semaphore_mem>>
      %74 = tpu.memref_squeeze %73 : memref<1x!tpu.dma_semaphore, #tpu.memory_space<semaphore_mem>> -> memref<!tpu.dma_semaphore, #tpu.memory_space<semaphore_mem>>
      tpu.wait_dma2 semaphore(%74 : memref<!tpu.dma_semaphore, #tpu.memory_space<semaphore_mem>>) src(%71 : memref<1x128xf32, #tpu.memory_space<any>>) dst(%72 : memref<1x128xf32, #tpu.memory_space<vmem>>)
      %c6_i32_58 = arith.constant 6 : i32
      %c0_i32_59 = arith.constant 0 : i32
      %75 = tpu.memref_slice %arg2[%41, %c0_i32_59] : memref<40x128xf32, #tpu.memory_space<any>> -> memref<1x128xf32, #tpu.memory_space<any>>
      %c6_i32_60 = arith.constant 6 : i32
      %c0_i32_61 = arith.constant 0 : i32
      %76 = tpu.memref_slice %arg16[%c6_i32_60, %c0_i32_61] : memref<8x128xf32, #tpu.memory_space<vmem>> -> memref<1x128xf32, #tpu.memory_space<vmem>>
      %77 = tpu.memref_slice %arg17[%c6_i32_58] : memref<8x!tpu.dma_semaphore, #tpu.memory_space<semaphore_mem>> -> memref<1x!tpu.dma_semaphore, #tpu.memory_space<semaphore_mem>>
      %78 = tpu.memref_squeeze %77 : memref<1x!tpu.dma_semaphore, #tpu.memory_space<semaphore_mem>> -> memref<!tpu.dma_semaphore, #tpu.memory_space<semaphore_mem>>
      tpu.wait_dma2 semaphore(%78 : memref<!tpu.dma_semaphore, #tpu.memory_space<semaphore_mem>>) src(%75 : memref<1x128xf32, #tpu.memory_space<any>>) dst(%76 : memref<1x128xf32, #tpu.memory_space<vmem>>)
      %c7_i32_62 = arith.constant 7 : i32
      %c0_i32_63 = arith.constant 0 : i32
      %79 = tpu.memref_slice %arg2[%46, %c0_i32_63] : memref<40x128xf32, #tpu.memory_space<any>> -> memref<1x128xf32, #tpu.memory_space<any>>
      %c7_i32_64 = arith.constant 7 : i32
      %c0_i32_65 = arith.constant 0 : i32
      %80 = tpu.memref_slice %arg16[%c7_i32_64, %c0_i32_65] : memref<8x128xf32, #tpu.memory_space<vmem>> -> memref<1x128xf32, #tpu.memory_space<vmem>>
      %81 = tpu.memref_slice %arg17[%c7_i32_62] : memref<8x!tpu.dma_semaphore, #tpu.memory_space<semaphore_mem>> -> memref<1x!tpu.dma_semaphore, #tpu.memory_space<semaphore_mem>>
      %82 = tpu.memref_squeeze %81 : memref<1x!tpu.dma_semaphore, #tpu.memory_space<semaphore_mem>> -> memref<!tpu.dma_semaphore, #tpu.memory_space<semaphore_mem>>
      tpu.wait_dma2 semaphore(%82 : memref<!tpu.dma_semaphore, #tpu.memory_space<semaphore_mem>>) src(%79 : memref<1x128xf32, #tpu.memory_space<any>>) dst(%80 : memref<1x128xf32, #tpu.memory_space<vmem>>)
      %c0_66 = arith.constant 0 : index
      %c0_67 = arith.constant 0 : index
      %83 = vector.load %arg16[%c0_66, %c0_67] : memref<8x128xf32, #tpu.memory_space<vmem>>, vector<8x128xf32>
      %c0_68 = arith.constant 0 : index
      %c0_69 = arith.constant 0 : index
      %c0_70 = arith.constant 0 : index
      %84 = vector.load %arg3[%c0_68, %c0_69, %c0_70] : memref<2x8x128xf32, #tpu.memory_space<vmem>>, vector<1x8x128xf32>
      %85 = vector.shape_cast %84 : vector<1x8x128xf32> to vector<8x128xf32>
      %86 = tpu.concatenate %83, %85 in 1 : vector<8x128xf32>, vector<8x128xf32> -> vector<8x256xf32>
      %87 = arith.truncf %86 : vector<8x256xf32> to vector<8x256xbf16>
      %c0_71 = arith.constant 0 : index
      %c0_72 = arith.constant 0 : index
      %88 = vector.load %arg5[%c0_71, %c0_72] : memref<256x768xbf16, #tpu.memory_space<vmem>>, vector<256x768xbf16>
      %cst_73 = arith.constant dense<0.000000e+00> : vector<8x768xf32>
      %89 = tpu.matmul %87, %88, %cst_73 {dimension_numbers = #tpu.dot_dimension_numbers<[1], [0], [0], [1], [0, 0, 1, 1], [], []>} : vector<8x256xbf16>, vector<256x768xbf16>, vector<8x768xf32> -> vector<8x768xf32>
      %c0_74 = arith.constant 0 : index
      %c0_75 = arith.constant 0 : index
      %90 = vector.load %arg6[%c0_74, %c0_75] : memref<1x768xf32, #tpu.memory_space<vmem>>, vector<1x768xf32>
      %91 = vector.broadcast %90 : vector<1x768xf32> to vector<8x768xf32>
      %92 = arith.addf %89, %91 : vector<8x768xf32>
      %93 = vector.extract_strided_slice %92 {offsets = [0, 0], sizes = [8, 128], strides = [1, 1]} : vector<8x768xf32> to vector<8x128xf32>
      %94 = vector.extract_strided_slice %92 {offsets = [0, 384], sizes = [8, 128], strides = [1, 1]} : vector<8x768xf32> to vector<8x128xf32>
      %95 = arith.addf %93, %94 : vector<8x128xf32>
      %96 = arith.negf %95 : vector<8x128xf32>
      %97 = math.exp %96 : vector<8x128xf32>
      %cst_76 = arith.constant 1.000000e+00 : f32
      %98 = vector.broadcast %cst_76 : f32 to vector<8x128xf32>
      %99 = arith.addf %98, %97 : vector<8x128xf32>
      %100 = arith.divf %98, %99 : vector<8x128xf32>
      %101 = vector.extract_strided_slice %92 {offsets = [0, 128], sizes = [8, 128], strides = [1, 1]} : vector<8x768xf32> to vector<8x128xf32>
      %102 = vector.extract_strided_slice %92 {offsets = [0, 512], sizes = [8, 128], strides = [1, 1]} : vector<8x768xf32> to vector<8x128xf32>
      %103 = arith.addf %101, %102 : vector<8x128xf32>
      %104 = arith.negf %103 : vector<8x128xf32>
      %105 = math.exp %104 : vector<8x128xf32>
      %cst_77 = arith.constant 1.000000e+00 : f32
      %106 = vector.broadcast %cst_77 : f32 to vector<8x128xf32>
      %107 = arith.addf %106, %105 : vector<8x128xf32>
      %108 = arith.divf %106, %107 : vector<8x128xf32>
      %109 = vector.extract_strided_slice %92 {offsets = [0, 256], sizes = [8, 128], strides = [1, 1]} : vector<8x768xf32> to vector<8x128xf32>
      %110 = vector.extract_strided_slice %92 {offsets = [0, 640], sizes = [8, 128], strides = [1, 1]} : vector<8x768xf32> to vector<8x128xf32>
      %111 = arith.mulf %100, %110 : vector<8x128xf32>
      %112 = arith.addf %109, %111 : vector<8x128xf32>
      %113 = math.tanh %112 : vector<8x128xf32>
      %cst_78 = arith.constant 1.000000e+00 : f32
      %114 = vector.broadcast %cst_78 : f32 to vector<8x128xf32>
      %115 = arith.subf %114, %108 : vector<8x128xf32>
      %116 = arith.mulf %115, %113 : vector<8x128xf32>
      %117 = arith.mulf %108, %85 : vector<8x128xf32>
      %118 = arith.addf %116, %117 : vector<8x128xf32>
      %c0_79 = arith.constant 0 : index
      %c0_80 = arith.constant 0 : index
      %c0_81 = arith.constant 0 : index
      %119 = vector.load %arg14[%c0_79, %c0_80, %c0_81] : memref<2x8x128xf32, #tpu.memory_space<vmem>>, vector<1x8x128xf32>
      %120 = vector.shape_cast %119 : vector<1x8x128xf32> to vector<8x128xf32>
      %121 = vector.shape_cast %118 : vector<8x128xf32> to vector<1x8x128xf32>
      tpu.vector_store %arg14[%c0_79, %c0_80, %c0_81], %121 {strides = array<i32>} : memref<2x8x128xf32, #tpu.memory_space<vmem>>, vector<1x8x128xf32>,
      %c1_82 = arith.constant 1 : index
      %c0_83 = arith.constant 0 : index
      %c0_84 = arith.constant 0 : index
      %122 = vector.load %arg3[%c1_82, %c0_83, %c0_84] : memref<2x8x128xf32, #tpu.memory_space<vmem>>, vector<1x8x128xf32>
      %123 = vector.shape_cast %122 : vector<1x8x128xf32> to vector<8x128xf32>
      %124 = tpu.concatenate %118, %123 in 1 : vector<8x128xf32>, vector<8x128xf32> -> vector<8x256xf32>
      %125 = arith.truncf %124 : vector<8x256xf32> to vector<8x256xbf16>
      %c0_85 = arith.constant 0 : index
      %c0_86 = arith.constant 0 : index
      %126 = vector.load %arg7[%c0_85, %c0_86] : memref<256x768xbf16, #tpu.memory_space<vmem>>, vector<256x768xbf16>
      %cst_87 = arith.constant dense<0.000000e+00> : vector<8x768xf32>
      %127 = tpu.matmul %125, %126, %cst_87 {dimension_numbers = #tpu.dot_dimension_numbers<[1], [0], [0], [1], [0, 0, 1, 1], [], []>} : vector<8x256xbf16>, vector<256x768xbf16>, vector<8x768xf32> -> vector<8x768xf32>
      %c0_88 = arith.constant 0 : index
      %c0_89 = arith.constant 0 : index
      %128 = vector.load %arg8[%c0_88, %c0_89] : memref<1x768xf32, #tpu.memory_space<vmem>>, vector<1x768xf32>
      %129 = vector.broadcast %128 : vector<1x768xf32> to vector<8x768xf32>
      %130 = arith.addf %127, %129 : vector<8x768xf32>
      %131 = vector.extract_strided_slice %130 {offsets = [0, 0], sizes = [8, 128], strides = [1, 1]} : vector<8x768xf32> to vector<8x128xf32>
      %132 = vector.extract_strided_slice %130 {offsets = [0, 384], sizes = [8, 128], strides = [1, 1]} : vector<8x768xf32> to vector<8x128xf32>
      %133 = arith.addf %131, %132 : vector<8x128xf32>
      %134 = arith.negf %133 : vector<8x128xf32>
      %135 = math.exp %134 : vector<8x128xf32>
      %cst_90 = arith.constant 1.000000e+00 : f32
      %136 = vector.broadcast %cst_90 : f32 to vector<8x128xf32>
      %137 = arith.addf %136, %135 : vector<8x128xf32>
      %138 = arith.divf %136, %137 : vector<8x128xf32>
      %139 = vector.extract_strided_slice %130 {offsets = [0, 128], sizes = [8, 128], strides = [1, 1]} : vector<8x768xf32> to vector<8x128xf32>
      %140 = vector.extract_strided_slice %130 {offsets = [0, 512], sizes = [8, 128], strides = [1, 1]} : vector<8x768xf32> to vector<8x128xf32>
      %141 = arith.addf %139, %140 : vector<8x128xf32>
      %142 = arith.negf %141 : vector<8x128xf32>
      %143 = math.exp %142 : vector<8x128xf32>
      %cst_91 = arith.constant 1.000000e+00 : f32
      %144 = vector.broadcast %cst_91 : f32 to vector<8x128xf32>
      %145 = arith.addf %144, %143 : vector<8x128xf32>
      %146 = arith.divf %144, %145 : vector<8x128xf32>
      %147 = vector.extract_strided_slice %130 {offsets = [0, 256], sizes = [8, 128], strides = [1, 1]} : vector<8x768xf32> to vector<8x128xf32>
      %148 = vector.extract_strided_slice %130 {offsets = [0, 640], sizes = [8, 128], strides = [1, 1]} : vector<8x768xf32> to vector<8x128xf32>
      %149 = arith.mulf %138, %148 : vector<8x128xf32>
      %150 = arith.addf %147, %149 : vector<8x128xf32>
      %151 = math.tanh %150 : vector<8x128xf32>
      %cst_92 = arith.constant 1.000000e+00 : f32
      %152 = vector.broadcast %cst_92 : f32 to vector<8x128xf32>
      %153 = arith.subf %152, %146 : vector<8x128xf32>
      %154 = arith.mulf %153, %151 : vector<8x128xf32>
      %155 = arith.mulf %146, %123 : vector<8x128xf32>
      %156 = arith.addf %154, %155 : vector<8x128xf32>
      %c1_93 = arith.constant 1 : index
      %c0_94 = arith.constant 0 : index
      %c0_95 = arith.constant 0 : index
      %157 = vector.load %arg14[%c1_93, %c0_94, %c0_95] : memref<2x8x128xf32, #tpu.memory_space<vmem>>, vector<1x8x128xf32>
      %158 = vector.shape_cast %157 : vector<1x8x128xf32> to vector<8x128xf32>
      %159 = vector.shape_cast %156 : vector<8x128xf32> to vector<1x8x128xf32>
      tpu.vector_store %arg14[%c1_93, %c0_94, %c0_95], %159 {strides = array<i32>} : memref<2x8x128xf32, #tpu.memory_space<vmem>>, vector<1x8x128xf32>,
      %c0_96 = arith.constant 0 : index
      %c0_97 = arith.constant 0 : index
      %c0_98 = arith.constant 0 : index
      %160 = vector.load %arg4[%c0_96, %c0_97, %c0_98] : memref<8x8x128xf32, #tpu.memory_space<vmem>>, vector<8x8x128xf32>
      %161 = arith.truncf %160 : vector<8x8x128xf32> to vector<8x8x128xbf16>
      %162 = arith.truncf %156 : vector<8x128xf32> to vector<8x128xbf16>
      %c0_99 = arith.constant 0 : index
      %c0_100 = arith.constant 0 : index
      %163 = vector.load %arg9[%c0_99, %c0_100] : memref<128x128xbf16, #tpu.memory_space<vmem>>, vector<128x128xbf16>
      %cst_101 = arith.constant dense<0.000000e+00> : vector<8x128xf32>
      %164 = tpu.matmul %162, %163, %cst_101 {dimension_numbers = #tpu.dot_dimension_numbers<[1], [0], [0], [1], [0, 0, 1, 1], [], []>} : vector<8x128xbf16>, vector<128x128xbf16>, vector<8x128xf32> -> vector<8x128xf32>
      %165 = arith.truncf %164 : vector<8x128xf32> to vector<8x128xbf16>
      %166 = vector.shape_cast %165 : vector<8x128xbf16> to vector<8x1x128xbf16>
      "tpu.trace_start"() <{level = 10 : i32, message = "bqh,bsh->bqs"}> : () -> ()
      %cst_102 = arith.constant dense<0.000000e+00> : vector<8x1x8xf32>
      %167 = tpu.matmul %166, %161, %cst_102 {dimension_numbers = #tpu.dot_dimension_numbers<[2], [2], [1], [1], [0, 0, 0, 1, 1, 1], [0], [0]>} : vector<8x1x128xbf16>, vector<8x8x128xbf16>, vector<8x1x8xf32> -> vector<8x1x8xf32>
      "tpu.trace_stop"() : () -> ()
      %cst_103 = arith.constant dense<0xFF800000> : vector<8x1xf32>
      %168 = vector.multi_reduction <maximumf>, %167, %cst_103 [2] : vector<8x1x8xf32> to vector<8x1xf32>
      %169 = vector.shape_cast %168 : vector<8x1xf32> to vector<8x1x1xf32>
      %170 = vector.broadcast %169 : vector<8x1x1xf32> to vector<8x1x8xf32>
      %171 = arith.subf %167, %170 : vector<8x1x8xf32>
      %172 = math.exp %171 : vector<8x1x8xf32>
      %cst_104 = arith.constant dense<0.000000e+00> : vector<8x1xf32>
      %173 = vector.multi_reduction <add>, %172, %cst_104 [2] : vector<8x1x8xf32> to vector<8x1xf32>
      %174 = vector.shape_cast %173 : vector<8x1xf32> to vector<8x1x1xf32>
      %175 = vector.broadcast %174 : vector<8x1x1xf32> to vector<8x1x8xf32>
      %176 = arith.divf %172, %175 : vector<8x1x8xf32>
      %177 = arith.truncf %176 : vector<8x1x8xf32> to vector<8x1x8xbf16>
      "tpu.trace_start"() <{level = 10 : i32, message = "bqs,bsh->bqh"}> : () -> ()
      %cst_105 = arith.constant dense<0.000000e+00> : vector<8x1x128xf32>
      %178 = tpu.matmul %177, %161, %cst_105 {dimension_numbers = #tpu.dot_dimension_numbers<[2], [1], [1], [2], [0, 0, 0, 1, 1, 2], [0], [0]>} : vector<8x1x8xbf16>, vector<8x8x128xbf16>, vector<8x1x128xf32> -> vector<8x1x128xf32>
      "tpu.trace_stop"() : () -> ()
      %179 = vector.shape_cast %178 : vector<8x1x128xf32> to vector<8x128xf32>
      %180 = tpu.concatenate %156, %179 in 1 : vector<8x128xf32>, vector<8x128xf32> -> vector<8x256xf32>
      %181 = arith.truncf %180 : vector<8x256xf32> to vector<8x256xbf16>
      %c0_106 = arith.constant 0 : index
      %c0_107 = arith.constant 0 : index
      %182 = vector.load %arg10[%c0_106, %c0_107] : memref<256x128xbf16, #tpu.memory_space<vmem>>, vector<256x128xbf16>
      %cst_108 = arith.constant dense<0.000000e+00> : vector<8x128xf32>
      %183 = tpu.matmul %181, %182, %cst_108 {dimension_numbers = #tpu.dot_dimension_numbers<[1], [0], [0], [1], [0, 0, 1, 1], [], []>} : vector<8x256xbf16>, vector<256x128xbf16>, vector<8x128xf32> -> vector<8x128xf32>
      %c0_109 = arith.constant 0 : index
      %c0_110 = arith.constant 0 : index
      %184 = vector.load %arg11[%c0_109, %c0_110] : memref<1x128xf32, #tpu.memory_space<vmem>>, vector<1x128xf32>
      %185 = vector.broadcast %184 : vector<1x128xf32> to vector<8x128xf32>
      %186 = arith.addf %183, %185 : vector<8x128xf32>
      %187 = math.tanh %186 : vector<8x128xf32>
      %c0_111 = arith.constant 0 : index
      %c0_112 = arith.constant 0 : index
      %188 = vector.load %arg18[%c0_111, %c0_112] : memref<8x128xf32, #tpu.memory_space<vmem>>, vector<8x128xf32>
      tpu.vector_store %arg18[%c0_111, %c0_112], %187 {strides = array<i32>} : memref<8x128xf32, #tpu.memory_space<vmem>>, vector<8x128xf32>,
    } else {
    }
    %c0 = arith.constant 0 : index
    %c0_1 = arith.constant 0 : index
    %3 = vector.load %arg18[%c0, %c0_1] : memref<8x128xf32, #tpu.memory_space<vmem>>, vector<8x128xf32>
    %4 = arith.truncf %3 : vector<8x128xf32> to vector<8x128xbf16>
    %c0_2 = arith.constant 0 : index
    %c0_3 = arith.constant 0 : index
    %5 = vector.load %arg12[%c0_2, %c0_3] : memref<128x128xbf16, #tpu.memory_space<vmem>>, vector<128x128xbf16>
    %cst = arith.constant dense<0.000000e+00> : vector<8x128xf32>
    %6 = tpu.matmul %4, %5, %cst {dimension_numbers = #tpu.dot_dimension_numbers<[1], [0], [0], [1], [0, 0, 1, 1], [], []>} : vector<8x128xbf16>, vector<128x128xbf16>, vector<8x128xf32> -> vector<8x128xf32>
    %c0_4 = arith.constant 0 : index
    %c0_5 = arith.constant 0 : index
    %7 = vector.load %arg13[%c0_4, %c0_5] : memref<1x128xf32, #tpu.memory_space<vmem>>, vector<1x128xf32>
    %8 = vector.broadcast %7 : vector<1x128xf32> to vector<8x128xf32>
    %9 = arith.addf %6, %8 : vector<8x128xf32>
    %c0_6 = arith.constant 0 : index
    %c0_7 = arith.constant 0 : index
    %10 = vector.load %arg15[%c0_6, %c0_7] : memref<8x128xf32, #tpu.memory_space<vmem>>, vector<8x128xf32>
    tpu.vector_store %arg15[%c0_6, %c0_7], %9 {strides = array<i32>} : memref<8x128xf32, #tpu.memory_space<vmem>>, vector<8x128xf32>,
    return
  }
  func.func @transform_1(%arg0: i32, %arg1: memref<8xi32, #tpu.memory_space<smem>>) -> (i32, i32, i32) {
    %c0_i32 = arith.constant 0 : i32
    %c0_i32_0 = arith.constant 0 : i32
    %c0_i32_1 = arith.constant 0 : i32
    %c0_i32_2 = arith.constant 0 : i32
    return %c0_i32, %c0_i32_0, %c0_i32_1 : i32, i32, i32
  }
  func.func @transform_2(%arg0: i32, %arg1: memref<8xi32, #tpu.memory_space<smem>>) -> (i32, i32, i32) {
    %c0_i32 = arith.constant 0 : i32
    %c0_i32_0 = arith.constant 0 : i32
    %c0_i32_1 = arith.constant 0 : i32
    %c0_i32_2 = arith.constant 0 : i32
    return %c0_i32, %c0_i32_0, %c0_i32_1 : i32, i32, i32
  }
  func.func @transform_3(%arg0: i32, %arg1: memref<8xi32, #tpu.memory_space<smem>>) -> (i32, i32) {
    %c0_i32 = arith.constant 0 : i32
    %c0_i32_0 = arith.constant 0 : i32
    %c0_i32_1 = arith.constant 0 : i32
    return %c0_i32, %c0_i32_0 : i32, i32
  }
  func.func @transform_4(%arg0: i32, %arg1: memref<8xi32, #tpu.memory_space<smem>>) -> (i32, i32) {
    %c0_i32 = arith.constant 0 : i32
    %c0_i32_0 = arith.constant 0 : i32
    %c0_i32_1 = arith.constant 0 : i32
    return %c0_i32, %c0_i32_0 : i32, i32
  }
  func.func @transform_5(%arg0: i32, %arg1: memref<8xi32, #tpu.memory_space<smem>>) -> (i32, i32) {
    %c0_i32 = arith.constant 0 : i32
    %c0_i32_0 = arith.constant 0 : i32
    %c0_i32_1 = arith.constant 0 : i32
    return %c0_i32, %c0_i32_0 : i32, i32
  }
  func.func @transform_6(%arg0: i32, %arg1: memref<8xi32, #tpu.memory_space<smem>>) -> (i32, i32) {
    %c0_i32 = arith.constant 0 : i32
    %c0_i32_0 = arith.constant 0 : i32
    %c0_i32_1 = arith.constant 0 : i32
    return %c0_i32, %c0_i32_0 : i32, i32
  }
  func.func @transform_7(%arg0: i32, %arg1: memref<8xi32, #tpu.memory_space<smem>>) -> (i32, i32) {
    %c0_i32 = arith.constant 0 : i32
    %c0_i32_0 = arith.constant 0 : i32
    %c0_i32_1 = arith.constant 0 : i32
    return %c0_i32, %c0_i32_0 : i32, i32
  }
  func.func @transform_8(%arg0: i32, %arg1: memref<8xi32, #tpu.memory_space<smem>>) -> (i32, i32) {
    %c0_i32 = arith.constant 0 : i32
    %c0_i32_0 = arith.constant 0 : i32
    %c0_i32_1 = arith.constant 0 : i32
    return %c0_i32, %c0_i32_0 : i32, i32
  }
  func.func @transform_9(%arg0: i32, %arg1: memref<8xi32, #tpu.memory_space<smem>>) -> (i32, i32) {
    %c0_i32 = arith.constant 0 : i32
    %c0_i32_0 = arith.constant 0 : i32
    %c0_i32_1 = arith.constant 0 : i32
    return %c0_i32, %c0_i32_0 : i32, i32
  }
  func.func @transform_10(%arg0: i32, %arg1: memref<8xi32, #tpu.memory_space<smem>>) -> (i32, i32) {
    %c0_i32 = arith.constant 0 : i32
    %c0_i32_0 = arith.constant 0 : i32
    return %c0_i32, %arg0 : i32, i32
  }
  func.func @transform_11(%arg0: i32, %arg1: memref<8xi32, #tpu.memory_space<smem>>) -> (i32, i32) {
    %c0_i32 = arith.constant 0 : i32
    %c0_i32_0 = arith.constant 0 : i32
    return %c0_i32, %arg0 : i32, i32
  }
  func.func @transform_12(%arg0: i32, %arg1: memref<8xi32, #tpu.memory_space<smem>>) -> (i32, i32, i32) {
    %c0_i32 = arith.constant 0 : i32
    %c0_i32_0 = arith.constant 0 : i32
    %c0_i32_1 = arith.constant 0 : i32
    %c0_i32_2 = arith.constant 0 : i32
    return %c0_i32, %c0_i32_0, %c0_i32_1 : i32, i32, i32
  }
  func.func @transform_13(%arg0: i32, %arg1: memref<8xi32, #tpu.memory_space<smem>>) -> (i32, i32) {
    %c0_i32 = arith.constant 0 : i32
    %c0_i32_0 = arith.constant 0 : i32
    return %c0_i32, %arg0 : i32, i32
  }
}

</mosaic_0001>

<llo_original>
// kernel: forward.3
$region0: #{forward.3}
  #allocation0 [shape = 'u32[]', space=smem, size = 0x4, offset = 0x4, fixed_abs, tag = 'smem constant byte address 0x4 - core index']
  #allocation1 [shape = 'u32[144,128]{1,0:T(1,128)}', space=vmem, size = 0x12000, scoped, tag = 'internal scratch']
  %s0 = inlined_call_operand.hbm [shape: f32[8,128], index: 0, kind: input, shape index: {}]
  %s1 = inlined_call_operand.vmem [shape: f32[8,128], index: 1, kind: output, shape index: {}]
  %s2 = sld [smem:[#allocation0]]
  $region18: #{forward.3} parent=0
    _
  %s4 = ssub.s32 1, %s2
  %s5 = scalar_select 0, %s4, %s2
  $region1: #{forward.3} parent=0
    #allocation2 [shape = 'u8[4096]{0}', space=vmem, size = 0x1000, scoped, tag = 'input window, operand 0, single buffered']
    #allocation3 [shape = 's32[1]{0}', space=sflag, size = 0x4, scoped, tag = 'scoped memory for forward.3']
    %6 = vsyncpa [#allocation3], 0
    // Predicated region
    $region2: #{forward.3} parent=1 // pred_check
      _
    $region3: #{forward.3} parent=1 // pred_check_branch
      %8 = sbr.rel (0) target = $region5
    $region4: #{forward.3} parent=1 // pred_region
      %s10 = ssub.s32 128, 128
      %11 = vsyncadd [#allocation3], %s10
      %s13 = sshll.u32 [#allocation2], 4
      %s14 = int_to_ptr.vmem [resolvable:$true] %s13
      %16 = dma.hbm_to_vmem [thread:$0]  %s0, 128, %s14, [#allocation3]
    $region5: #{forward.3} parent=1 // pred_fallthru
      _
    // Predicated region
    $region6: #{forward.3} parent=1 // pred_check
      _
    $region7: #{forward.3} parent=1 // pred_check_branch
      %18 = sbr.rel (0) target = $region9
    $region8: #{forward.3} parent=1 // pred_region
      %19 = dma.done [#allocation3], 128
    $region9: #{forward.3} parent=1 // pred_fallthru
      _
    %v20 = vld [vmem:[#allocation2] sm:$0xff]
    %21 = vmax.xlane.f32.xlu0 %v20
    %v22 = vpop.xlane.xlu0 %21
    %v23 = vsub.f32 %v20, %v22
    %v24 = vmul.f32 %v23, 1.442695
    %v25 = vpow.pop %v24
    %26 = vadd.xlane.f32.xlu0 %v25
    %v27 = vpop.xlane.xlu0 %26
    %v28 = vrcp.pop %v27
    %v29 = vmul.f32 %v25, %v28
    %30 = vst [vmem:[%s1] sm:$0xff] %v29
    // Predicated region
    $region10: #{forward.3} parent=1 // pred_check
      _
    $region11: #{forward.3} parent=1 // pred_check_branch
      %32 = sbr.rel (0) target = $region13
    $region12: #{forward.3} parent=1 // pred_region
      _
    $region13: #{forward.3} parent=1 // pred_fallthru
      _
    // Predicated region
    $region14: #{forward.3} parent=1 // pred_check
      _
    $region15: #{forward.3} parent=1 // pred_check_branch
      %34 = sbr.rel (0) target = $region17
    $region16: #{forward.3} parent=1 // pred_region
      _
    $region17: #{forward.3} parent=1 // pred_fallthru
      _
    %35 = vsyncpa [#allocation3], 1

// kernel: forward.2
$region0: #{forward.2}
  #allocation0 [shape = 'u32[]', space=smem, size = 0x4, offset = 0x4, fixed_abs, tag = 'smem constant byte address 0x4 - core index']
  #allocation1 [shape = 'u32[144,128]{1,0:T(1,128)}', space=vmem, size = 0x12000, scoped, tag = 'internal scratch']
  #allocation2 [shape = 'f32[8,128]{1,0:T(8,128)}', space=vmem, size = 0x1000, scoped, tag = 'scratch operand']
  #allocation3 [shape = 's32[8]{0}', space=sflag, size = 0x20, scoped, tag = 'scratch operand']
  #allocation4 [shape = 'f32[8,128]{1,0:T(8,128)}', space=vmem, size = 0x1000, scoped, tag = 'scratch operand']
  #allocation5 [shape = 's32[1]{0}', space=sflag, size = 0x4, scoped, tag = 'scoped memory for forward.2']
  #allocation6 [shape = 'u8[512]{0}', space=smem, size = 0x200, scoped, tag = 'prefetched SMEM operand 0']
  #allocation28 [shape = 's32[]', space=sflag, size = 0x4, offset = 0, fixed_abs, tag = 'sflag constant byte address 0x0 - dummy sync flag']
  #allocation29 [shape = 's32[]', space=sflag, size = 0x4, offset = 0, fixed_abs, tag = 'sflag constant byte address 0x0 - dummy sync flag']
  #allocation30 [shape = 'u32[]', space=smem, size = 0x4, offset = 0x44, fixed_abs, tag = 'smem constant byte address 0x44 - assertion arg 0']
  #allocation31 [shape = 'u32[]', space=smem, size = 0x4, offset = 0x48, fixed_abs, tag = 'smem constant byte address 0x48 - assertion arg 1']
  #allocation32 [shape = 's32[]', space=sflag, size = 0x4, offset = 0, fixed_abs, tag = 'sflag constant byte address 0x0 - dummy sync flag']
  #allocation33 [shape = 's32[]', space=sflag, size = 0x4, offset = 0, fixed_abs, tag = 'sflag constant byte address 0x0 - dummy sync flag']
  #allocation34 [shape = 's32[]', space=sflag, size = 0x4, offset = 0, fixed_abs, tag = 'sflag constant byte address 0x0 - dummy sync flag']
  #allocation35 [shape = 's32[]', space=sflag, size = 0x4, offset = 0, fixed_abs, tag = 'sflag constant byte address 0x0 - dummy sync flag']
  #allocation36 [shape = 's32[]', space=sflag, size = 0x4, offset = 0, fixed_abs, tag = 'sflag constant byte address 0x0 - dummy sync flag']
  #allocation37 [shape = 's32[]', space=sflag, size = 0x4, offset = 0, fixed_abs, tag = 'sflag constant byte address 0x0 - dummy sync flag']
  #allocation38 [shape = 's32[]', space=sflag, size = 0x4, offset = 0, fixed_abs, tag = 'sflag constant byte address 0x0 - dummy sync flag']
  #allocation39 [shape = 's32[]', space=sflag, size = 0x4, offset = 0, fixed_abs, tag = 'sflag constant byte address 0x0 - dummy sync flag']
  #allocation40 [shape = 's32[]', space=sflag, size = 0x4, offset = 0, fixed_abs, tag = 'sflag constant byte address 0x0 - dummy sync flag']
  #allocation41 [shape = 's32[]', space=sflag, size = 0x4, offset = 0, fixed_abs, tag = 'sflag constant byte address 0x0 - dummy sync flag']
  #allocation42 [shape = 's32[]', space=sflag, size = 0x4, offset = 0, fixed_abs, tag = 'sflag constant byte address 0x0 - dummy sync flag']
  #allocation43 [shape = 's32[]', space=sflag, size = 0x4, offset = 0, fixed_abs, tag = 'sflag constant byte address 0x0 - dummy sync flag']
  #allocation44 [shape = 's32[]', space=sflag, size = 0x4, offset = 0, fixed_abs, tag = 'sflag constant byte address 0x0 - dummy sync flag']
  #allocation45 [shape = 's32[]', space=sflag, size = 0x4, offset = 0, fixed_abs, tag = 'sflag constant byte address 0x0 - dummy sync flag']
  %s0 = inlined_call_operand.hbm [shape: s32[8], index: 0, kind: input, shape index: {}]
  %s1 = inlined_call_operand.hbm [shape: f32[40,128], index: 1, kind: input, shape index: {}]
  %s2 = inlined_call_operand.hbm [shape: f32[2,8,128], index: 2, kind: input, shape index: {}]
  %s3 = inlined_call_operand.hbm [shape: f32[8,8,128], index: 3, kind: input, shape index: {}]
  %s4 = inlined_call_operand.hbm [shape: bf16[256,768], index: 4, kind: input, shape index: {}]
  %s5 = inlined_call_operand.hbm [shape: f32[1,768], index: 5, kind: input, shape index: {}]
  %s6 = inlined_call_operand.hbm [shape: bf16[256,768], index: 6, kind: input, shape index: {}]
  %s7 = inlined_call_operand.hbm [shape: f32[1,768], index: 7, kind: input, shape index: {}]
  %s8 = inlined_call_operand.hbm [shape: bf16[128,128], index: 8, kind: input, shape index: {}]
  %s9 = inlined_call_operand.hbm [shape: bf16[256,128], index: 9, kind: input, shape index: {}]
  %s10 = inlined_call_operand.hbm [shape: f32[1,128], index: 10, kind: input, shape index: {}]
  %s11 = inlined_call_operand.hbm [shape: bf16[128,128], index: 11, kind: input, shape index: {}]
  %s12 = inlined_call_operand.hbm [shape: f32[1,128], index: 12, kind: input, shape index: {}]
  %s13 = inlined_call_operand.hbm [shape: f32[2,8,128], index: 13, kind: output, shape index: {0}]
  %s14 = inlined_call_operand.hbm [shape: f32[8,128], index: 14, kind: output, shape index: {1}]
  %15 = xla_tuple %s13, %s14
  %s16 = sld [smem:[#allocation0]]
  $region142: #{forward.2} parent=0
    _
  %s18 = ssub.s32 1, %s16
  %s19 = scalar_select 0, %s18, %s16
  %21 = dma.hbm_to_smem %s0, 16, [#allocation6], [#allocation5]
  %22 = dma.done [#allocation5], 16
  %23 = sfence
  $region1: #{forward.2} parent=0
    #allocation7 [shape = 'u8[8192]{0}', space=vmem, size = 0x2000, scoped, tag = 'input window, operand 2, single buffered']
    #allocation8 [shape = 's32[1]{0}', space=sflag, size = 0x4, scoped, tag = 'scoped memory for forward.2']
    #allocation9 [shape = 's32[1]{0}', space=sflag, size = 0x4, scoped, tag = 'scoped memory for forward.2']
    #allocation10 [shape = 'u8[32768]{0}', space=vmem, size = 0x8000, scoped, tag = 'input window, operand 3, single buffered']
    #allocation11 [shape = 's32[1]{0}', space=sflag, size = 0x4, scoped, tag = 'scoped memory for forward.2']
    #allocation12 [shape = 'u8[393216]{0}', space=vmem, size = 0x60000, scoped, tag = 'input window, operand 4, single buffered']
    #allocation13 [shape = 'u8[3072]{0}', space=vmem, size = 0xc00, scoped, tag = 'input window, operand 5, single buffered']
    #allocation14 [shape = 's32[1]{0}', space=sflag, size = 0x4, scoped, tag = 'scoped memory for forward.2']
    #allocation15 [shape = 'u8[393216]{0}', space=vmem, size = 0x60000, scoped, tag = 'input window, operand 6, single buffered']
    #allocation16 [shape = 'u8[3072]{0}', space=vmem, size = 0xc00, scoped, tag = 'input window, operand 7, single buffered']
    #allocation17 [shape = 's32[1]{0}', space=sflag, size = 0x4, scoped, tag = 'scoped memory for forward.2']
    #allocation18 [shape = 'u8[32768]{0}', space=vmem, size = 0x8000, scoped, tag = 'input window, operand 8, single buffered']
    #allocation19 [shape = 'u8[65536]{0}', space=vmem, size = 0x10000, scoped, tag = 'input window, operand 9, single buffered']
    #allocation20 [shape = 's32[1]{0}', space=sflag, size = 0x4, scoped, tag = 'scoped memory for forward.2']
    #allocation21 [shape = 'u8[512]{0}', space=vmem, size = 0x400, scoped, tag = 'input window, operand 10, single buffered']
    #allocation22 [shape = 'u8[32768]{0}', space=vmem, size = 0x8000, scoped, tag = 'input window, operand 11, single buffered']
    #allocation23 [shape = 's32[1]{0}', space=sflag, size = 0x4, scoped, tag = 'scoped memory for forward.2']
    #allocation24 [shape = 'u8[512]{0}', space=vmem, size = 0x400, scoped, tag = 'input window, operand 12, single buffered']
    #allocation25 [shape = 'u8[8192]{0}', space=vmem, size = 0x2000, scoped, tag = 'output window, operand 0, single buffered']
    #allocation26 [shape = 'u8[4096]{0}', space=vmem, size = 0x1000, scoped, tag = 'output window, operand 1, single buffered']
    #allocation27 [shape = 's32[1]{0}', space=sflag, size = 0x4, scoped, tag = 'scoped memory for forward.2']
    %24 = vsyncpa [#allocation8], 0
    %25 = vsyncpa [#allocation11], 0
    %26 = vsyncpa [#allocation14], 0
    %27 = vsyncpa [#allocation17], 0
    %28 = vsyncpa [#allocation20], 0
    %29 = vsyncpa [#allocation23], 0
    %30 = vsyncpa [#allocation9], 0
    %31 = vsyncpa [#allocation27], 0
    // Predicated region
    $region2: #{forward.2} parent=1 // pred_check
      _
    $region3: #{forward.2} parent=1 // pred_check_branch
      %33 = sbr.rel (0) target = $region5
    $region4: #{forward.2} parent=1 // pred_region
      %s35 = ssub.s32 256, 256
      %36 = vsyncadd [#allocation8], %s35
      %s37 = sshll.u32 [#allocation7], 4
      %s38 = int_to_ptr.vmem [resolvable:$true] %s37
      %43 = dma.hbm_to_vmem [thread:$0]  %s2, 256, %s38, [#allocation8], 128, 128, 8
    $region5: #{forward.2} parent=1 // pred_fallthru
      _
    // Predicated region
    $region6: #{forward.2} parent=1 // pred_check
      _
    $region7: #{forward.2} parent=1 // pred_check_branch
      %45 = sbr.rel (0) target = $region9
    $region8: #{forward.2} parent=1 // pred_region
      %s47 = ssub.s32 1024, 1024
      %48 = vsyncadd [#allocation11], %s47
      %s49 = sshll.u32 [#allocation10], 4
      %s50 = int_to_ptr.vmem [resolvable:$true] %s49
      %55 = dma.hbm_to_vmem [thread:$0]  %s3, 1024, %s50, [#allocation11], 128, 128, 8
    $region9: #{forward.2} parent=1 // pred_fallthru
      _
    // Predicated region
    $region10: #{forward.2} parent=1 // pred_check
      _
    $region11: #{forward.2} parent=1 // pred_check_branch
      %57 = sbr.rel (0) target = $region13
    $region12: #{forward.2} parent=1 // pred_region
      %s59 = ssub.s32 12288, 12288
      %60 = vsyncadd [#allocation11], %s59
      %s61 = sshll.u32 [#allocation12], 4
      %s62 = int_to_ptr.vmem [resolvable:$true] %s61
      %67 = dma.hbm_to_vmem [thread:$0]  %s4, 12288, %s62, [#allocation11], 384, 384, 24
    $region13: #{forward.2} parent=1 // pred_fallthru
      _
    // Predicated region
    $region14: #{forward.2} parent=1 // pred_check
      _
    $region15: #{forward.2} parent=1 // pred_check_branch
      %69 = sbr.rel (0) target = $region17
    $region16: #{forward.2} parent=1 // pred_region
      %s71 = ssub.s32 96, 96
      %72 = vsyncadd [#allocation14], %s71
      %s74 = sshll.u32 [#allocation13], 4
      %s75 = int_to_ptr.vmem [resolvable:$true] %s74
      %77 = dma.hbm_to_vmem [thread:$0]  %s5, 96, %s75, [#allocation14]
    $region17: #{forward.2} parent=1 // pred_fallthru
      _
    // Predicated region
    $region18: #{forward.2} parent=1 // pred_check
      _
    $region19: #{forward.2} parent=1 // pred_check_branch
      %79 = sbr.rel (0) target = $region21
    $region20: #{forward.2} parent=1 // pred_region
      %s81 = ssub.s32 12288, 12288
      %82 = vsyncadd [#allocation14], %s81
      %s83 = sshll.u32 [#allocation15], 4
      %s84 = int_to_ptr.vmem [resolvable:$true] %s83
      %89 = dma.hbm_to_vmem [thread:$0]  %s6, 12288, %s84, [#allocation14], 384, 384, 24
    $region21: #{forward.2} parent=1 // pred_fallthru
      _
    // Predicated region
    $region22: #{forward.2} parent=1 // pred_check
      _
    $region23: #{forward.2} parent=1 // pred_check_branch
      %91 = sbr.rel (0) target = $region25
    $region24: #{forward.2} parent=1 // pred_region
      %s93 = ssub.s32 96, 96
      %94 = vsyncadd [#allocation17], %s93
      %s96 = sshll.u32 [#allocation16], 4
      %s97 = int_to_ptr.vmem [resolvable:$true] %s96
      %99 = dma.hbm_to_vmem [thread:$0]  %s7, 96, %s97, [#allocation17]
    $region25: #{forward.2} parent=1 // pred_fallthru
      _
    // Predicated region
    $region26: #{forward.2} parent=1 // pred_check
      _
    $region27: #{forward.2} parent=1 // pred_check_branch
      %101 = sbr.rel (0) target = $region29
    $region28: #{forward.2} parent=1 // pred_region
      %s103 = ssub.s32 1024, 1024
      %104 = vsyncadd [#allocation17], %s103
      %s105 = sshll.u32 [#allocation18], 4
      %s106 = int_to_ptr.vmem [resolvable:$true] %s105
      %111 = dma.hbm_to_vmem [thread:$0]  %s8, 1024, %s106, [#allocation17], 64, 64, 4
    $region29: #{forward.2} parent=1 // pred_fallthru
      _
    // Predicated region
    $region30: #{forward.2} parent=1 // pred_check
      _
    $region31: #{forward.2} parent=1 // pred_check_branch
      %113 = sbr.rel (0) target = $region33
    $region32: #{forward.2} parent=1 // pred_region
      %s115 = ssub.s32 2048, 2048
      %116 = vsyncadd [#allocation20], %s115
      %s117 = sshll.u32 [#allocation19], 4
      %s118 = int_to_ptr.vmem [resolvable:$true] %s117
      %123 = dma.hbm_to_vmem [thread:$0]  %s9, 2048, %s118, [#allocation20], 64, 64, 4
    $region33: #{forward.2} parent=1 // pred_fallthru
      _
    // Predicated region
    $region34: #{forward.2} parent=1 // pred_check
      _
    $region35: #{forward.2} parent=1 // pred_check_branch
      %125 = sbr.rel (0) target = $region37
    $region36: #{forward.2} parent=1 // pred_region
      %s127 = ssub.s32 16, 16
      %128 = vsyncadd [#allocation20], %s127
      %s130 = sshll.u32 [#allocation21], 4
      %s131 = int_to_ptr.vmem [resolvable:$true] %s130
      %133 = dma.hbm_to_vmem [thread:$0]  %s10, 16, %s131, [#allocation20]
    $region37: #{forward.2} parent=1 // pred_fallthru
      _
    // Predicated region
    $region38: #{forward.2} parent=1 // pred_check
      _
    $region39: #{forward.2} parent=1 // pred_check_branch
      %135 = sbr.rel (0) target = $region41
    $region40: #{forward.2} parent=1 // pred_region
      %s137 = ssub.s32 1024, 1024
      %138 = vsyncadd [#allocation23], %s137
      %s139 = sshll.u32 [#allocation22], 4
      %s140 = int_to_ptr.vmem [resolvable:$true] %s139
      %145 = dma.hbm_to_vmem [thread:$0]  %s11, 1024, %s140, [#allocation23], 64, 64, 4
    $region41: #{forward.2} parent=1 // pred_fallthru
      _
    // Predicated region
    $region42: #{forward.2} parent=1 // pred_check
      _
    $region43: #{forward.2} parent=1 // pred_check_branch
      %147 = sbr.rel (0) target = $region45
    $region44: #{forward.2} parent=1 // pred_region
      %s149 = ssub.s32 16, 16
      %150 = vsyncadd [#allocation23], %s149
      %s152 = sshll.u32 [#allocation24], 4
      %s153 = int_to_ptr.vmem [resolvable:$true] %s152
      %155 = dma.hbm_to_vmem [thread:$0]  %s12, 16, %s153, [#allocation23]
    $region45: #{forward.2} parent=1 // pred_fallthru
      _
    // Predicated region
    $region46: #{forward.2} parent=1 // pred_check
      _
    $region47: #{forward.2} parent=1 // pred_check_branch
      %157 = sbr.rel (0) target = $region49
    $region48: #{forward.2} parent=1 // pred_region
      %158 = dma.done [#allocation8], 256
    $region49: #{forward.2} parent=1 // pred_fallthru
      _
    // Predicated region
    $region50: #{forward.2} parent=1 // pred_check
      _
    $region51: #{forward.2} parent=1 // pred_check_branch
      %160 = sbr.rel (0) target = $region53
    $region52: #{forward.2} parent=1 // pred_region
      %161 = dma.done [#allocation11], 1024
    $region53: #{forward.2} parent=1 // pred_fallthru
      _
    // Predicated region
    $region54: #{forward.2} parent=1 // pred_check
      _
    $region55: #{forward.2} parent=1 // pred_check_branch
      %163 = sbr.rel (0) target = $region57
    $region56: #{forward.2} parent=1 // pred_region
      %164 = dma.done [#allocation11], 12288
    $region57: #{forward.2} parent=1 // pred_fallthru
      _
    // Predicated region
    $region58: #{forward.2} parent=1 // pred_check
      _
    $region59: #{forward.2} parent=1 // pred_check_branch
      %166 = sbr.rel (0) target = $region61
    $region60: #{forward.2} parent=1 // pred_region
      %167 = dma.done [#allocation14], 96
    $region61: #{forward.2} parent=1 // pred_fallthru
      _
    // Predicated region
    $region62: #{forward.2} parent=1 // pred_check
      _
    $region63: #{forward.2} parent=1 // pred_check_branch
      %169 = sbr.rel (0) target = $region65
    $region64: #{forward.2} parent=1 // pred_region
      %170 = dma.done [#allocation14], 12288
    $region65: #{forward.2} parent=1 // pred_fallthru
      _
    // Predicated region
    $region66: #{forward.2} parent=1 // pred_check
      _
    $region67: #{forward.2} parent=1 // pred_check_branch
      %172 = sbr.rel (0) target = $region69
    $region68: #{forward.2} parent=1 // pred_region
      %173 = dma.done [#allocation17], 96
    $region69: #{forward.2} parent=1 // pred_fallthru
      _
    // Predicated region
    $region70: #{forward.2} parent=1 // pred_check
      _
    $region71: #{forward.2} parent=1 // pred_check_branch
      %175 = sbr.rel (0) target = $region73
    $region72: #{forward.2} parent=1 // pred_region
      %176 = dma.done [#allocation17], 1024
    $region73: #{forward.2} parent=1 // pred_fallthru
      _
    // Predicated region
    $region74: #{forward.2} parent=1 // pred_check
      _
    $region75: #{forward.2} parent=1 // pred_check_branch
      %178 = sbr.rel (0) target = $region77
    $region76: #{forward.2} parent=1 // pred_region
      %179 = dma.done [#allocation20], 2048
    $region77: #{forward.2} parent=1 // pred_fallthru
      _
    // Predicated region
    $region78: #{forward.2} parent=1 // pred_check
      _
    $region79: #{forward.2} parent=1 // pred_check_branch
      %181 = sbr.rel (0) target = $region81
    $region80: #{forward.2} parent=1 // pred_region
      %182 = dma.done [#allocation20], 16
    $region81: #{forward.2} parent=1 // pred_fallthru
      _
    // Predicated region
    $region82: #{forward.2} parent=1 // pred_check
      _
    $region83: #{forward.2} parent=1 // pred_check_branch
      %184 = sbr.rel (0) target = $region85
    $region84: #{forward.2} parent=1 // pred_region
      %185 = dma.done [#allocation23], 1024
    $region85: #{forward.2} parent=1 // pred_fallthru
      _
    // Predicated region
    $region86: #{forward.2} parent=1 // pred_check
      _
    $region87: #{forward.2} parent=1 // pred_check_branch
      %187 = sbr.rel (0) target = $region89
    $region88: #{forward.2} parent=1 // pred_region
      %188 = dma.done [#allocation23], 16
    $region89: #{forward.2} parent=1 // pred_fallthru
      _
    %p190 = scmp.eq.s32.totalorder 0, 0
    // Predicated region
    $region90: #{forward.2} parent=1 // pred_check
      %p191 = pneg %p190
    $region91: #{forward.2} parent=1 // pred_check_branch
      %193 = sbr.rel (%p191) target = $region93
    $region92: #{forward.2} parent=1 // pred_region
      %s194 = sld [smem:[#allocation6]]
      %s195 = smul.addr %s194, 16
      %s196 = scalar_lea.hbm %s1, %s195
      // Predicated region
      $region94: #{forward.2} parent=92 // pred_check
        _
      $region95: #{forward.2} parent=92 // pred_check_branch
        %198 = sbr.rel target = $region97
      $region96: #{forward.2} parent=92 // pred_region
        %199 = sst [smem:[#allocation30]] [#allocation29]
        %200 = sst [smem:[#allocation31]] [#allocation28]
      $region97: #{forward.2} parent=92 // pred_fallthru
        _
      %202 = shalt.err (0)
      %s204 = sshll.u32 [#allocation2], 4
      %s205 = int_to_ptr.vmem [resolvable:$true] %s204
      %207 = dma.hbm_to_vmem [thread:$0]  %s196, 16, %s205, [#allocation3]
      %s208 = sld [smem:[#allocation6 + $0x1]]
      %s209 = smul.addr %s208, 16
      %s210 = scalar_lea.hbm %s1, %s209
      %s211 = scalar_lea.vmem [#allocation2], 1
      %s212 = scalar_lea.sflag [#allocation3], 1
      // Predicated region
      $region98: #{forward.2} parent=92 // pred_check
        _
      $region99: #{forward.2} parent=92 // pred_check_branch
        %214 = sbr.rel target = $region101
      $region100: #{forward.2} parent=92 // pred_region
        %215 = sst [smem:[#allocation30]] [#allocation33]
        %216 = sst [smem:[#allocation31]] [#allocation32]
      $region101: #{forward.2} parent=92 // pred_fallthru
        _
      %218 = shalt.err (0)
      %s220 = sshll.u32 %s211, 4
      %s221 = int_to_ptr.vmem [resolvable:$true] %s220
      %223 = dma.hbm_to_vmem [thread:$0]  %s210, 16, %s221, %s212
      %s224 = sld [smem:[#allocation6 + $0x2]]
      %s225 = smul.addr %s224, 16
      %s226 = scalar_lea.hbm %s1, %s225
      %s227 = scalar_lea.vmem [#allocation2], 2
      %s228 = scalar_lea.sflag [#allocation3], 2
      // Predicated region
      $region102: #{forward.2} parent=92 // pred_check
        _
      $region103: #{forward.2} parent=92 // pred_check_branch
        %230 = sbr.rel target = $region105
      $region104: #{forward.2} parent=92 // pred_region
        %231 = sst [smem:[#allocation30]] [#allocation35]
        %232 = sst [smem:[#allocation31]] [#allocation34]
      $region105: #{forward.2} parent=92 // pred_fallthru
        _
      %234 = shalt.err (0)
      %s236 = sshll.u32 %s227, 4
      %s237 = int_to_ptr.vmem [resolvable:$true] %s236
      %239 = dma.hbm_to_vmem [thread:$0]  %s226, 16, %s237, %s228
      %s240 = sld [smem:[#allocation6 + $0x3]]
      %s241 = smul.addr %s240, 16
      %s242 = scalar_lea.hbm %s1, %s241
      %s243 = scalar_lea.vmem [#allocation2], 3
      %s244 = scalar_lea.sflag [#allocation3], 3
      // Predicated region
      $region106: #{forward.2} parent=92 // pred_check
        _
      $region107: #{forward.2} parent=92 // pred_check_branch
        %246 = sbr.rel target = $region109
      $region108: #{forward.2} parent=92 // pred_region
        %247 = sst [smem:[#allocation30]] [#allocation37]
        %248 = sst [smem:[#allocation31]] [#allocation36]
      $region109: #{forward.2} parent=92 // pred_fallthru
        _
      %250 = shalt.err (0)
      %s252 = sshll.u32 %s243, 4
      %s253 = int_to_ptr.vmem [resolvable:$true] %s252
      %255 = dma.hbm_to_vmem [thread:$0]  %s242, 16, %s253, %s244
      %s256 = sld [smem:[#allocation6 + $0x4]]
      %s257 = smul.addr %s256, 16
      %s258 = scalar_lea.hbm %s1, %s257
      %s259 = scalar_lea.vmem [#allocation2], 4
      %s260 = scalar_lea.sflag [#allocation3], 4
      // Predicated region
      $region110: #{forward.2} parent=92 // pred_check
        _
      $region111: #{forward.2} parent=92 // pred_check_branch
        %262 = sbr.rel target = $region113
      $region112: #{forward.2} parent=92 // pred_region
        %263 = sst [smem:[#allocation30]] [#allocation39]
        %264 = sst [smem:[#allocation31]] [#allocation38]
      $region113: #{forward.2} parent=92 // pred_fallthru
        _
      %266 = shalt.err (0)
      %s268 = sshll.u32 %s259, 4
      %s269 = int_to_ptr.vmem [resolvable:$true] %s268
      %271 = dma.hbm_to_vmem [thread:$0]  %s258, 16, %s269, %s260
      %s272 = sld [smem:[#allocation6 + $0x5]]
      %s273 = smul.addr %s272, 16
      %s274 = scalar_lea.hbm %s1, %s273
      %s275 = scalar_lea.vmem [#allocation2], 5
      %s276 = scalar_lea.sflag [#allocation3], 5
      // Predicated region
      $region114: #{forward.2} parent=92 // pred_check
        _
      $region115: #{forward.2} parent=92 // pred_check_branch
        %278 = sbr.rel target = $region117
      $region116: #{forward.2} parent=92 // pred_region
        %279 = sst [smem:[#allocation30]] [#allocation41]
        %280 = sst [smem:[#allocation31]] [#allocation40]
      $region117: #{forward.2} parent=92 // pred_fallthru
        _
      %282 = shalt.err (0)
      %s284 = sshll.u32 %s275, 4
      %s285 = int_to_ptr.vmem [resolvable:$true] %s284
      %287 = dma.hbm_to_vmem [thread:$0]  %s274, 16, %s285, %s276
      %s288 = sld [smem:[#allocation6 + $0x6]]
      %s289 = smul.addr %s288, 16
      %s290 = scalar_lea.hbm %s1, %s289
      %s291 = scalar_lea.vmem [#allocation2], 6
      %s292 = scalar_lea.sflag [#allocation3], 6
      // Predicated region
      $region118: #{forward.2} parent=92 // pred_check
        _
      $region119: #{forward.2} parent=92 // pred_check_branch
        %294 = sbr.rel target = $region121
      $region120: #{forward.2} parent=92 // pred_region
        %295 = sst [smem:[#allocation30]] [#allocation43]
        %296 = sst [smem:[#allocation31]] [#allocation42]
      $region121: #{forward.2} parent=92 // pred_fallthru
        _
      %298 = shalt.err (0)
      %s300 = sshll.u32 %s291, 4
      %s301 = int_to_ptr.vmem [resolvable:$true] %s300
      %303 = dma.hbm_to_vmem [thread:$0]  %s290, 16, %s301, %s292
      %s304 = sld [smem:[#allocation6 + $0x7]]
      %s305 = smul.addr %s304, 16
      %s306 = scalar_lea.hbm %s1, %s305
      %s307 = scalar_lea.vmem [#allocation2], 7
      %s308 = scalar_lea.sflag [#allocation3], 7
      // Predicated region
      $region122: #{forward.2} parent=92 // pred_check
        _
      $region123: #{forward.2} parent=92 // pred_check_branch
        %310 = sbr.rel target = $region125
      $region124: #{forward.2} parent=92 // pred_region
        %311 = sst [smem:[#allocation30]] [#allocation45]
        %312 = sst [smem:[#allocation31]] [#allocation44]
      $region125: #{forward.2} parent=92 // pred_fallthru
        _
      %314 = shalt.err (0)
      %s316 = sshll.u32 %s307, 4
      %s317 = int_to_ptr.vmem [resolvable:$true] %s316
      %319 = dma.hbm_to_vmem [thread:$0]  %s306, 16, %s317, %s308
      %s320 = smul.u32 1, 1
      %s321 = sshll.u32 %s320, 4
      %322 = dma.done [#allocation3], %s321
      %s323 = sshll.u32 %s320, 4
      %324 = dma.done %s212, %s323
      %s325 = sshll.u32 %s320, 4
      %326 = dma.done %s228, %s325
      %s327 = sshll.u32 %s320, 4
      %328 = dma.done %s244, %s327
      %s329 = sshll.u32 %s320, 4
      %330 = dma.done %s260, %s329
      %s331 = sshll.u32 %s320, 4
      %332 = dma.done %s276, %s331
      %s333 = sshll.u32 %s320, 4
      %334 = dma.done %s292, %s333
      %s335 = sshll.u32 %s320, 4
      %336 = dma.done %s308, %s335
      %v337 = vld [vmem:[#allocation2] sm:$0xff]
      %v338 = vld [vmem:[#allocation7] sm:$0xff]
      %v339 = vpack.c.bf16 %v337, %v337
      %v340 = vpack.c.bf16 %v338, %v338
      %v341 = vld [vmem:[#allocation12] sm:$0xff]
      %v342 = vld [vmem:[#allocation12 + $0x8] sm:$0xff]
      %v343 = vld [vmem:[#allocation12 + $0x10] sm:$0xff]
      %v344 = vld [vmem:[#allocation12 + $0x18] sm:$0xff]
      %v345 = vld [vmem:[#allocation12 + $0x20] sm:$0xff]
      %v346 = vld [vmem:[#allocation12 + $0x28] sm:$0xff]
      %v347 = vld [vmem:[#allocation12 + $0x30] sm:$0xff]
      %v348 = vld [vmem:[#allocation12 + $0x38] sm:$0xff]
      %v349 = vld [vmem:[#allocation12 + $0x40] sm:$0xff]
      %v350 = vld [vmem:[#allocation12 + $0x48] sm:$0xff]
      %v351 = vld [vmem:[#allocation12 + $0x50] sm:$0xff]
      %v352 = vld [vmem:[#allocation12 + $0x58] sm:$0xff]
      %v353 = vld [vmem:[#allocation12 + $0x60] sm:$0xff]
      %v354 = vld [vmem:[#allocation12 + $0x68] sm:$0xff]
      %v355 = vld [vmem:[#allocation12 + $0x70] sm:$0xff]
      %v356 = vld [vmem:[#allocation12 + $0x78] sm:$0xff]
      %v357 = vld [vmem:[#allocation12 + $0x80] sm:$0xff]
      %v358 = vld [vmem:[#allocation12 + $0x88] sm:$0xff]
      %v359 = vld [vmem:[#allocation12 + $0x90] sm:$0xff]
      %v360 = vld [vmem:[#allocation12 + $0x98] sm:$0xff]
      %v361 = vld [vmem:[#allocation12 + $0xa0] sm:$0xff]
      %v362 = vld [vmem:[#allocation12 + $0xa8] sm:$0xff]
      %v363 = vld [vmem:[#allocation12 + $0xb0] sm:$0xff]
      %v364 = vld [vmem:[#allocation12 + $0xb8] sm:$0xff]
      %v365 = vld [vmem:[#allocation12 + $0xc0] sm:$0xff]
      %v366 = vld [vmem:[#allocation12 + $0xc8] sm:$0xff]
      %v367 = vld [vmem:[#allocation12 + $0xd0] sm:$0xff]
      %v368 = vld [vmem:[#allocation12 + $0xd8] sm:$0xff]
      %v369 = vld [vmem:[#allocation12 + $0xe0] sm:$0xff]
      %v370 = vld [vmem:[#allocation12 + $0xe8] sm:$0xff]
      %v371 = vld [vmem:[#allocation12 + $0xf0] sm:$0xff]
      %v372 = vld [vmem:[#allocation12 + $0xf8] sm:$0xff]
      %v373 = vld [vmem:[#allocation12 + $0x100] sm:$0xff]
      %v374 = vld [vmem:[#allocation12 + $0x108] sm:$0xff]
      %v375 = vld [vmem:[#allocation12 + $0x110] sm:$0xff]
      %v376 = vld [vmem:[#allocation12 + $0x118] sm:$0xff]
      %v377 = vld [vmem:[#allocation12 + $0x120] sm:$0xff]
      %v378 = vld [vmem:[#allocation12 + $0x128] sm:$0xff]
      %v379 = vld [vmem:[#allocation12 + $0x130] sm:$0xff]
      %v380 = vld [vmem:[#allocation12 + $0x138] sm:$0xff]
      %v381 = vld [vmem:[#allocation12 + $0x140] sm:$0xff]
      %v382 = vld [vmem:[#allocation12 + $0x148] sm:$0xff]
      %v383 = vld [vmem:[#allocation12 + $0x150] sm:$0xff]
      %v384 = vld [vmem:[#allocation12 + $0x158] sm:$0xff]
      %v385 = vld [vmem:[#allocation12 + $0x160] sm:$0xff]
      %v386 = vld [vmem:[#allocation12 + $0x168] sm:$0xff]
      %v387 = vld [vmem:[#allocation12 + $0x170] sm:$0xff]
      %v388 = vld [vmem:[#allocation12 + $0x178] sm:$0xff]
      %v389 = vld [vmem:[#allocation12 + $0x180] sm:$0xff]
      %v390 = vld [vmem:[#allocation12 + $0x188] sm:$0xff]
      %v391 = vld [vmem:[#allocation12 + $0x190] sm:$0xff]
      %v392 = vld [vmem:[#allocation12 + $0x198] sm:$0xff]
      %v393 = vld [vmem:[#allocation12 + $0x1a0] sm:$0xff]
      %v394 = vld [vmem:[#allocation12 + $0x1a8] sm:$0xff]
      %v395 = vld [vmem:[#allocation12 + $0x1b0] sm:$0xff]
      %v396 = vld [vmem:[#allocation12 + $0x1b8] sm:$0xff]
      %v397 = vld [vmem:[#allocation12 + $0x1c0] sm:$0xff]
      %v398 = vld [vmem:[#allocation12 + $0x1c8] sm:$0xff]
      %v399 = vld [vmem:[#allocation12 + $0x1d0] sm:$0xff]
      %v400 = vld [vmem:[#allocation12 + $0x1d8] sm:$0xff]
      %v401 = vld [vmem:[#allocation12 + $0x1e0] sm:$0xff]
      %v402 = vld [vmem:[#allocation12 + $0x1e8] sm:$0xff]
      %v403 = vld [vmem:[#allocation12 + $0x1f0] sm:$0xff]
      %v404 = vld [vmem:[#allocation12 + $0x1f8] sm:$0xff]
      %v405 = vld [vmem:[#allocation12 + $0x200] sm:$0xff]
      %v406 = vld [vmem:[#allocation12 + $0x208] sm:$0xff]
      %v407 = vld [vmem:[#allocation12 + $0x210] sm:$0xff]
      %v408 = vld [vmem:[#allocation12 + $0x218] sm:$0xff]
      %v409 = vld [vmem:[#allocation12 + $0x220] sm:$0xff]
      %v410 = vld [vmem:[#allocation12 + $0x228] sm:$0xff]
      %v411 = vld [vmem:[#allocation12 + $0x230] sm:$0xff]
      %v412 = vld [vmem:[#allocation12 + $0x238] sm:$0xff]
      %v413 = vld [vmem:[#allocation12 + $0x240] sm:$0xff]
      %v414 = vld [vmem:[#allocation12 + $0x248] sm:$0xff]
      %v415 = vld [vmem:[#allocation12 + $0x250] sm:$0xff]
      %v416 = vld [vmem:[#allocation12 + $0x258] sm:$0xff]
      %v417 = vld [vmem:[#allocation12 + $0x260] sm:$0xff]
      %v418 = vld [vmem:[#allocation12 + $0x268] sm:$0xff]
      %v419 = vld [vmem:[#allocation12 + $0x270] sm:$0xff]
      %v420 = vld [vmem:[#allocation12 + $0x278] sm:$0xff]
      %v421 = vld [vmem:[#allocation12 + $0x280] sm:$0xff]
      %v422 = vld [vmem:[#allocation12 + $0x288] sm:$0xff]
      %v423 = vld [vmem:[#allocation12 + $0x290] sm:$0xff]
      %v424 = vld [vmem:[#allocation12 + $0x298] sm:$0xff]
      %v425 = vld [vmem:[#allocation12 + $0x2a0] sm:$0xff]
      %v426 = vld [vmem:[#allocation12 + $0x2a8] sm:$0xff]
      %v427 = vld [vmem:[#allocation12 + $0x2b0] sm:$0xff]
      %v428 = vld [vmem:[#allocation12 + $0x2b8] sm:$0xff]
      %v429 = vld [vmem:[#allocation12 + $0x2c0] sm:$0xff]
      %v430 = vld [vmem:[#allocation12 + $0x2c8] sm:$0xff]
      %v431 = vld [vmem:[#allocation12 + $0x2d0] sm:$0xff]
      %v432 = vld [vmem:[#allocation12 + $0x2d8] sm:$0xff]
      %v433 = vld [vmem:[#allocation12 + $0x2e0] sm:$0xff]
      %v434 = vld [vmem:[#allocation12 + $0x2e8] sm:$0xff]
      %v435 = vld [vmem:[#allocation12 + $0x2f0] sm:$0xff]
      %v436 = vld [vmem:[#allocation12 + $0x2f8] sm:$0xff]
      %v437 = vld [vmem:[#allocation13] sm:$0x3f]
      %v439 = vlaneseq
      %v440 = vshrl.u32 %v439, 7
      %v441 = vsub.s32 0, %v440
      %v442 = vrot.slane %v437, %v441
      %v443 = vlaneseq
      %v444 = vshrl.u32 %v443, 7
      %v445 = vsub.s32 1, %v444
      %v446 = vrot.slane %v437, %v445
      %v447 = vlaneseq
      %v448 = vshrl.u32 %v447, 7
      %v449 = vsub.s32 2, %v448
      %v450 = vrot.slane %v437, %v449
      %v451 = vlaneseq
      %v452 = vshrl.u32 %v451, 7
      %v453 = vsub.s32 3, %v452
      %v454 = vrot.slane %v437, %v453
      %v455 = vlaneseq
      %v456 = vshrl.u32 %v455, 7
      %v457 = vsub.s32 4, %v456
      %v458 = vrot.slane %v437, %v457
      %v459 = vlaneseq
      %v460 = vshrl.u32 %v459, 7
      %v461 = vsub.s32 5, %v460
      %v462 = vrot.slane %v437, %v461
      %v565 = vunpack.c.l.b16 %v341
      %v566 = vunpack.c.h.b16 %v341
      %v567 = vunpack.c.l.b16 %v342
      %v568 = vunpack.c.h.b16 %v342
      %v569 = vunpack.c.l.b16 %v343
      %v570 = vunpack.c.h.b16 %v343
      %v571 = vunpack.c.l.b16 %v344
      %v572 = vunpack.c.h.b16 %v344
      %v573 = vunpack.c.l.b16 %v345
      %v574 = vunpack.c.h.b16 %v345
      %v575 = vunpack.c.l.b16 %v346
      %v576 = vunpack.c.h.b16 %v346
      %v577 = vunpack.c.l.b16 %v347
      %v578 = vunpack.c.h.b16 %v347
      %v579 = vunpack.c.l.b16 %v348
      %v580 = vunpack.c.h.b16 %v348
      %v581 = vunpack.c.l.b16 %v349
      %v582 = vunpack.c.h.b16 %v349
      %v583 = vunpack.c.l.b16 %v350
      %v584 = vunpack.c.h.b16 %v350
      %v585 = vunpack.c.l.b16 %v351
      %v586 = vunpack.c.h.b16 %v351
      %v587 = vunpack.c.l.b16 %v352
      %v588 = vunpack.c.h.b16 %v352
      %v589 = vunpack.c.l.b16 %v353
      %v590 = vunpack.c.h.b16 %v353
      %v591 = vunpack.c.l.b16 %v354
      %v592 = vunpack.c.h.b16 %v354
      %v593 = vunpack.c.l.b16 %v355
      %v594 = vunpack.c.h.b16 %v355
      %v595 = vunpack.c.l.b16 %v356
      %v596 = vunpack.c.h.b16 %v356
      %v597 = vunpack.c.l.b16 %v357
      %v598 = vunpack.c.h.b16 %v357
      %v599 = vunpack.c.l.b16 %v358
      %v600 = vunpack.c.h.b16 %v358
      %v601 = vunpack.c.l.b16 %v359
      %v602 = vunpack.c.h.b16 %v359
      %v603 = vunpack.c.l.b16 %v360
      %v604 = vunpack.c.h.b16 %v360
      %v605 = vunpack.c.l.b16 %v361
      %v606 = vunpack.c.h.b16 %v361
      %v607 = vunpack.c.l.b16 %v362
      %v608 = vunpack.c.h.b16 %v362
      %v609 = vunpack.c.l.b16 %v363
      %v610 = vunpack.c.h.b16 %v363
      %v611 = vunpack.c.l.b16 %v364
      %v612 = vunpack.c.h.b16 %v364
      %v613 = vunpack.c.l.b16 %v365
      %v614 = vunpack.c.h.b16 %v365
      %v615 = vunpack.c.l.b16 %v366
      %v616 = vunpack.c.h.b16 %v366
      %v617 = vunpack.c.l.b16 %v367
      %v618 = vunpack.c.h.b16 %v367
      %v619 = vunpack.c.l.b16 %v368
      %v620 = vunpack.c.h.b16 %v368
      %v621 = vunpack.c.l.b16 %v369
      %v622 = vunpack.c.h.b16 %v369
      %v623 = vunpack.c.l.b16 %v370
      %v624 = vunpack.c.h.b16 %v370
      %v625 = vunpack.c.l.b16 %v371
      %v626 = vunpack.c.h.b16 %v371
      %v627 = vunpack.c.l.b16 %v372
      %v628 = vunpack.c.h.b16 %v372
      %v629 = vunpack.c.l.b16 %v373
      %v630 = vunpack.c.h.b16 %v373
      %v631 = vunpack.c.l.b16 %v374
      %v632 = vunpack.c.h.b16 %v374
      %v633 = vunpack.c.l.b16 %v375
      %v634 = vunpack.c.h.b16 %v375
      %v635 = vunpack.c.l.b16 %v376
      %v636 = vunpack.c.h.b16 %v376
      %v637 = vunpack.c.l.b16 %v377
      %v638 = vunpack.c.h.b16 %v377
      %v639 = vunpack.c.l.b16 %v378
      %v640 = vunpack.c.h.b16 %v378
      %v641 = vunpack.c.l.b16 %v379
      %v642 = vunpack.c.h.b16 %v379
      %v643 = vunpack.c.l.b16 %v380
      %v644 = vunpack.c.h.b16 %v380
      %v645 = vunpack.c.l.b16 %v381
      %v646 = vunpack.c.h.b16 %v381
      %v647 = vunpack.c.l.b16 %v382
      %v648 = vunpack.c.h.b16 %v382
      %v649 = vunpack.c.l.b16 %v383
      %v650 = vunpack.c.h.b16 %v383
      %v651 = vunpack.c.l.b16 %v384
      %v652 = vunpack.c.h.b16 %v384
      %v653 = vunpack.c.l.b16 %v385
      %v654 = vunpack.c.h.b16 %v385
      %v655 = vunpack.c.l.b16 %v386
      %v656 = vunpack.c.h.b16 %v386
      %v657 = vunpack.c.l.b16 %v387
      %v658 = vunpack.c.h.b16 %v387
      %v659 = vunpack.c.l.b16 %v388
      %v660 = vunpack.c.h.b16 %v388
      %v661 = vunpack.c.l.b16 %v389
      %v662 = vunpack.c.h.b16 %v389
      %v663 = vunpack.c.l.b16 %v390
      %v664 = vunpack.c.h.b16 %v390
      %v665 = vunpack.c.l.b16 %v391
      %v666 = vunpack.c.h.b16 %v391
      %v667 = vunpack.c.l.b16 %v392
      %v668 = vunpack.c.h.b16 %v392
      %v669 = vunpack.c.l.b16 %v393
      %v670 = vunpack.c.h.b16 %v393
      %v671 = vunpack.c.l.b16 %v394
      %v672 = vunpack.c.h.b16 %v394
      %v673 = vunpack.c.l.b16 %v395
      %v674 = vunpack.c.h.b16 %v395
      %v675 = vunpack.c.l.b16 %v396
      %v676 = vunpack.c.h.b16 %v396
      %v677 = vunpack.c.l.b16 %v397
      %v678 = vunpack.c.h.b16 %v397
      %v679 = vunpack.c.l.b16 %v398
      %v680 = vunpack.c.h.b16 %v398
      %v681 = vunpack.c.l.b16 %v399
      %v682 = vunpack.c.h.b16 %v399
      %v683 = vunpack.c.l.b16 %v400
      %v684 = vunpack.c.h.b16 %v400
      %v685 = vunpack.c.l.b16 %v401
      %v686 = vunpack.c.h.b16 %v401
      %v687 = vunpack.c.l.b16 %v402
      %v688 = vunpack.c.h.b16 %v402
      %v689 = vunpack.c.l.b16 %v403
      %v690 = vunpack.c.h.b16 %v403
      %v691 = vunpack.c.l.b16 %v404
      %v692 = vunpack.c.h.b16 %v404
      %v693 = vunpack.c.l.b16 %v405
      %v694 = vunpack.c.h.b16 %v405
      %v695 = vunpack.c.l.b16 %v406
      %v696 = vunpack.c.h.b16 %v406
      %v697 = vunpack.c.l.b16 %v407
      %v698 = vunpack.c.h.b16 %v407
      %v699 = vunpack.c.l.b16 %v408
      %v700 = vunpack.c.h.b16 %v408
      %v701 = vunpack.c.l.b16 %v409
      %v702 = vunpack.c.h.b16 %v409
      %v703 = vunpack.c.l.b16 %v410
      %v704 = vunpack.c.h.b16 %v410
      %v705 = vunpack.c.l.b16 %v411
      %v706 = vunpack.c.h.b16 %v411
      %v707 = vunpack.c.l.b16 %v412
      %v708 = vunpack.c.h.b16 %v412
      %v709 = vunpack.c.l.b16 %v413
      %v710 = vunpack.c.h.b16 %v413
      %v711 = vunpack.c.l.b16 %v414
      %v712 = vunpack.c.h.b16 %v414
      %v713 = vunpack.c.l.b16 %v415
      %v714 = vunpack.c.h.b16 %v415
      %v715 = vunpack.c.l.b16 %v416
      %v716 = vunpack.c.h.b16 %v416
      %v717 = vunpack.c.l.b16 %v417
      %v718 = vunpack.c.h.b16 %v417
      %v719 = vunpack.c.l.b16 %v418
      %v720 = vunpack.c.h.b16 %v418
      %v721 = vunpack.c.l.b16 %v419
      %v722 = vunpack.c.h.b16 %v419
      %v723 = vunpack.c.l.b16 %v420
      %v724 = vunpack.c.h.b16 %v420
      %v725 = vunpack.c.l.b16 %v421
      %v726 = vunpack.c.h.b16 %v421
      %v727 = vunpack.c.l.b16 %v422
      %v728 = vunpack.c.h.b16 %v422
      %v729 = vunpack.c.l.b16 %v423
      %v730 = vunpack.c.h.b16 %v423
      %v731 = vunpack.c.l.b16 %v424
      %v732 = vunpack.c.h.b16 %v424
      %v733 = vunpack.c.l.b16 %v425
      %v734 = vunpack.c.h.b16 %v425
      %v735 = vunpack.c.l.b16 %v426
      %v736 = vunpack.c.h.b16 %v426
      %v737 = vunpack.c.l.b16 %v427
      %v738 = vunpack.c.h.b16 %v427
      %v739 = vunpack.c.l.b16 %v428
      %v740 = vunpack.c.h.b16 %v428
      %v741 = vunpack.c.l.b16 %v429
      %v742 = vunpack.c.h.b16 %v429
      %v743 = vunpack.c.l.b16 %v430
      %v744 = vunpack.c.h.b16 %v430
      %v745 = vunpack.c.l.b16 %v431
      %v746 = vunpack.c.h.b16 %v431
      %v747 = vunpack.c.l.b16 %v432
      %v748 = vunpack.c.h.b16 %v432
      %v749 = vunpack.c.l.b16 %v433
      %v750 = vunpack.c.h.b16 %v433
      %v751 = vunpack.c.l.b16 %v434
      %v752 = vunpack.c.h.b16 %v434
      %v753 = vunpack.c.l.b16 %v435
      %v754 = vunpack.c.h.b16 %v435
      %v755 = vunpack.c.l.b16 %v436
      %v756 = vunpack.c.h.b16 %v436
      %v757 = vpack.c.b16 %v571, %v565
      %v758 = vpack.c.b16 %v572, %v566
      %v759 = vpack.c.b16 %v573, %v567
      %v760 = vpack.c.b16 %v574, %v568
      %v761 = vpack.c.b16 %v575, %v569
      %v762 = vpack.c.b16 %v576, %v570
      %v763 = vpack.c.b16 %v583, %v577
      %v764 = vpack.c.b16 %v584, %v578
      %v765 = vpack.c.b16 %v585, %v579
      %v766 = vpack.c.b16 %v586, %v580
      %v767 = vpack.c.b16 %v587, %v581
      %v768 = vpack.c.b16 %v588, %v582
      %v769 = vpack.c.b16 %v595, %v589
      %v770 = vpack.c.b16 %v596, %v590
      %v771 = vpack.c.b16 %v597, %v591
      %v772 = vpack.c.b16 %v598, %v592
      %v773 = vpack.c.b16 %v599, %v593
      %v774 = vpack.c.b16 %v600, %v594
      %v775 = vpack.c.b16 %v607, %v601
      %v776 = vpack.c.b16 %v608, %v602
      %v777 = vpack.c.b16 %v609, %v603
      %v778 = vpack.c.b16 %v610, %v604
      %v779 = vpack.c.b16 %v611, %v605
      %v780 = vpack.c.b16 %v612, %v606
      %v781 = vpack.c.b16 %v619, %v613
      %v782 = vpack.c.b16 %v620, %v614
      %v783 = vpack.c.b16 %v621, %v615
      %v784 = vpack.c.b16 %v622, %v616
      %v785 = vpack.c.b16 %v623, %v617
      %v786 = vpack.c.b16 %v624, %v618
      %v787 = vpack.c.b16 %v631, %v625
      %v788 = vpack.c.b16 %v632, %v626
      %v789 = vpack.c.b16 %v633, %v627
      %v790 = vpack.c.b16 %v634, %v628
      %v791 = vpack.c.b16 %v635, %v629
      %v792 = vpack.c.b16 %v636, %v630
      %v793 = vpack.c.b16 %v643, %v637
      %v794 = vpack.c.b16 %v644, %v638
      %v795 = vpack.c.b16 %v645, %v639
      %v796 = vpack.c.b16 %v646, %v640
      %v797 = vpack.c.b16 %v647, %v641
      %v798 = vpack.c.b16 %v648, %v642
      %v799 = vpack.c.b16 %v655, %v649
      %v800 = vpack.c.b16 %v656, %v650
      %v801 = vpack.c.b16 %v657, %v651
      %v802 = vpack.c.b16 %v658, %v652
      %v803 = vpack.c.b16 %v659, %v653
      %v804 = vpack.c.b16 %v660, %v654
      %v805 = vpack.c.b16 %v667, %v661
      %v806 = vpack.c.b16 %v668, %v662
      %v807 = vpack.c.b16 %v669, %v663
      %v808 = vpack.c.b16 %v670, %v664
      %v809 = vpack.c.b16 %v671, %v665
      %v810 = vpack.c.b16 %v672, %v666
      %v811 = vpack.c.b16 %v679, %v673
      %v812 = vpack.c.b16 %v680, %v674
      %v813 = vpack.c.b16 %v681, %v675
      %v814 = vpack.c.b16 %v682, %v676
      %v815 = vpack.c.b16 %v683, %v677
      %v816 = vpack.c.b16 %v684, %v678
      %v817 = vpack.c.b16 %v691, %v685
      %v818 = vpack.c.b16 %v692, %v686
      %v819 = vpack.c.b16 %v693, %v687
      %v820 = vpack.c.b16 %v694, %v688
      %v821 = vpack.c.b16 %v695, %v689
      %v822 = vpack.c.b16 %v696, %v690
      %v823 = vpack.c.b16 %v703, %v697
      %v824 = vpack.c.b16 %v704, %v698
      %v825 = vpack.c.b16 %v705, %v699
      %v826 = vpack.c.b16 %v706, %v700
      %v827 = vpack.c.b16 %v707, %v701
      %v828 = vpack.c.b16 %v708, %v702
      %v829 = vpack.c.b16 %v715, %v709
      %v830 = vpack.c.b16 %v716, %v710
      %v831 = vpack.c.b16 %v717, %v711
      %v832 = vpack.c.b16 %v718, %v712
      %v833 = vpack.c.b16 %v719, %v713
      %v834 = vpack.c.b16 %v720, %v714
      %v835 = vpack.c.b16 %v727, %v721
      %v836 = vpack.c.b16 %v728, %v722
      %v837 = vpack.c.b16 %v729, %v723
      %v838 = vpack.c.b16 %v730, %v724
      %v839 = vpack.c.b16 %v731, %v725
      %v840 = vpack.c.b16 %v732, %v726
      %v841 = vpack.c.b16 %v739, %v733
      %v842 = vpack.c.b16 %v740, %v734
      %v843 = vpack.c.b16 %v741, %v735
      %v844 = vpack.c.b16 %v742, %v736
      %v845 = vpack.c.b16 %v743, %v737
      %v846 = vpack.c.b16 %v744, %v738
      %v847 = vpack.c.b16 %v751, %v745
      %v848 = vpack.c.b16 %v752, %v746
      %v849 = vpack.c.b16 %v753, %v747
      %v850 = vpack.c.b16 %v754, %v748
      %v851 = vpack.c.b16 %v755, %v749
      %v852 = vpack.c.b16 %v756, %v750
      %949 = vmatprep.subr.bf16.mxu0 %v758
      %950 = vmatpush1.bf16.msra.mxu0 %v757
      %951 = vmatprep.subr.bf16.mxu0 %v764
      %952 = vmatpush1.bf16.msra.mxu0 %v763
      %953 = vmatprep.subr.bf16.mxu0 %v770
      %954 = vmatpush1.bf16.msra.mxu0 %v769
      %955 = vmatprep.subr.bf16.mxu0 %v776
      %956 = vmatpush1.bf16.msra.mxu0 %v775
      %957 = vmatprep.subr.bf16.mxu0 %v782
      %958 = vmatpush1.bf16.msra.mxu0 %v781
      %959 = vmatprep.subr.bf16.mxu0 %v788
      %960 = vmatpush1.bf16.msra.mxu0 %v787
      %961 = vmatprep.subr.bf16.mxu0 %v794
      %962 = vmatpush1.bf16.msra.mxu0 %v793
      %963 = vmatprep.subr.bf16.mxu0 %v800
      %964 = vmatpush1.bf16.msra.mxu0 %v799
      %965 = vmatprep.subr.bf16.mxu0 %v806
      %966 = vmatpush1.bf16.msra.mxu0 %v805
      %967 = vmatprep.subr.bf16.mxu0 %v812
      %968 = vmatpush1.bf16.msra.mxu0 %v811
      %969 = vmatprep.subr.bf16.mxu0 %v818
      %970 = vmatpush1.bf16.msra.mxu0 %v817
      %971 = vmatprep.subr.bf16.mxu0 %v824
      %972 = vmatpush1.bf16.msra.mxu0 %v823
      %973 = vmatprep.subr.bf16.mxu0 %v830
      %974 = vmatpush1.bf16.msra.mxu0 %v829
      %975 = vmatprep.subr.bf16.mxu0 %v836
      %976 = vmatpush1.bf16.msra.mxu0 %v835
      %977 = vmatprep.subr.bf16.mxu0 %v842
      %978 = vmatpush1.bf16.msra.mxu0 %v841
      %979 = vmatprep.subr.bf16.mxu0 %v848
      %980 = vmatpush1.bf16.msra.mxu0 %v847
      %981 = vmatprep.mubr.bf16.mxu0 %v340
      %982 = vmatmul.mubr.bf16.gmra.mrb[0].mxu0 %v339
      %v983 = vpop.f32.mrb[0].mxu0
      %v984 = vadd.f32 %v442, %v983
      %v985 = vpop.f32.mrb[0].mxu0
      %v986 = vadd.f32 %v446, %v985
      %v987 = vpop.f32.mrb[0].mxu0
      %v988 = vpop.f32.mrb[0].mxu0
      %989 = vdwg.mxu0
      %990 = vmatprep.subr.bf16.mxu0 %v760
      %991 = vmatpush1.bf16.msra.mxu0 %v759
      %992 = vmatprep.subr.bf16.mxu0 %v766
      %993 = vmatpush1.bf16.msra.mxu0 %v765
      %994 = vmatprep.subr.bf16.mxu0 %v772
      %995 = vmatpush1.bf16.msra.mxu0 %v771
      %996 = vmatprep.subr.bf16.mxu0 %v778
      %997 = vmatpush1.bf16.msra.mxu0 %v777
      %998 = vmatprep.subr.bf16.mxu0 %v784
      %999 = vmatpush1.bf16.msra.mxu0 %v783
      %1000 = vmatprep.subr.bf16.mxu0 %v790
      %1001 = vmatpush1.bf16.msra.mxu0 %v789
      %1002 = vmatprep.subr.bf16.mxu0 %v796
      %1003 = vmatpush1.bf16.msra.mxu0 %v795
      %1004 = vmatprep.subr.bf16.mxu0 %v802
      %1005 = vmatpush1.bf16.msra.mxu0 %v801
      %1006 = vmatprep.subr.bf16.mxu0 %v808
      %1007 = vmatpush1.bf16.msra.mxu0 %v807
      %1008 = vmatprep.subr.bf16.mxu0 %v814
      %1009 = vmatpush1.bf16.msra.mxu0 %v813
      %1010 = vmatprep.subr.bf16.mxu0 %v820
      %1011 = vmatpush1.bf16.msra.mxu0 %v819
      %1012 = vmatprep.subr.bf16.mxu0 %v826
      %1013 = vmatpush1.bf16.msra.mxu0 %v825
      %1014 = vmatprep.subr.bf16.mxu0 %v832
      %1015 = vmatpush1.bf16.msra.mxu0 %v831
      %1016 = vmatprep.subr.bf16.mxu0 %v838
      %1017 = vmatpush1.bf16.msra.mxu0 %v837
      %1018 = vmatprep.subr.bf16.mxu0 %v844
      %1019 = vmatpush1.bf16.msra.mxu0 %v843
      %1020 = vmatprep.subr.bf16.mxu0 %v850
      %1021 = vmatpush1.bf16.msra.mxu0 %v849
      %1022 = vmatprep.mubr.bf16.mxu0 %v340
      %1023 = vmatmul.mubr.bf16.gmra.mrb[0].mxu0 %v339
      %v1024 = vpop.f32.mrb[0].mxu0
      %v1025 = vadd.f32 %v450, %v1024
      %v1026 = vpop.f32.mrb[0].mxu0
      %v1027 = vadd.f32 %v454, %v1026
      %v1028 = vpop.f32.mrb[0].mxu0
      %v1029 = vpop.f32.mrb[0].mxu0
      %1030 = vdwg.mxu0
      %1031 = vmatprep.subr.bf16.mxu0 %v762
      %1032 = vmatpush1.bf16.msra.mxu0 %v761
      %1033 = vmatprep.subr.bf16.mxu0 %v768
      %1034 = vmatpush1.bf16.msra.mxu0 %v767
      %1035 = vmatprep.subr.bf16.mxu0 %v774
      %1036 = vmatpush1.bf16.msra.mxu0 %v773
      %1037 = vmatprep.subr.bf16.mxu0 %v780
      %1038 = vmatpush1.bf16.msra.mxu0 %v779
      %1039 = vmatprep.subr.bf16.mxu0 %v786
      %1040 = vmatpush1.bf16.msra.mxu0 %v785
      %1041 = vmatprep.subr.bf16.mxu0 %v792
      %1042 = vmatpush1.bf16.msra.mxu0 %v791
      %1043 = vmatprep.subr.bf16.mxu0 %v798
      %1044 = vmatpush1.bf16.msra.mxu0 %v797
      %1045 = vmatprep.subr.bf16.mxu0 %v804
      %1046 = vmatpush1.bf16.msra.mxu0 %v803
      %1047 = vmatprep.subr.bf16.mxu0 %v810
      %1048 = vmatpush1.bf16.msra.mxu0 %v809
      %1049 = vmatprep.subr.bf16.mxu0 %v816
      %1050 = vmatpush1.bf16.msra.mxu0 %v815
      %1051 = vmatprep.subr.bf16.mxu0 %v822
      %1052 = vmatpush1.bf16.msra.mxu0 %v821
      %1053 = vmatprep.subr.bf16.mxu0 %v828
      %1054 = vmatpush1.bf16.msra.mxu0 %v827
      %1055 = vmatprep.subr.bf16.mxu0 %v834
      %1056 = vmatpush1.bf16.msra.mxu0 %v833
      %1057 = vmatprep.subr.bf16.mxu0 %v840
      %1058 = vmatpush1.bf16.msra.mxu0 %v839
      %1059 = vmatprep.subr.bf16.mxu0 %v846
      %1060 = vmatpush1.bf16.msra.mxu0 %v845
      %1061 = vmatprep.subr.bf16.mxu0 %v852
      %1062 = vmatpush1.bf16.msra.mxu0 %v851
      %1063 = vmatprep.mubr.bf16.mxu0 %v340
      %1064 = vmatmul.mubr.bf16.gmra.mrb[0].mxu0 %v339
      %v1065 = vpop.f32.mrb[0].mxu0
      %v1066 = vadd.f32 %v458, %v1065
      %v1067 = vpop.f32.mrb[0].mxu0
      %v1068 = vadd.f32 %v462, %v1067
      %v1069 = vpop.f32.mrb[0].mxu0
      %v1070 = vpop.f32.mrb[0].mxu0
      %1071 = vdwg.mxu0
      %v1072 = vadd.f32 %v984, %v1027
      %v1073 = vxor.u32 %v1072, 2147483648
      %v1074 = vmul.f32 %v1073, 1.442695
      %v1075 = vpow.pop %v1074
      %v1076 = vadd.f32 %v1075, 1.0
      %v1077 = vrcp.pop %v1076
      %v1078 = vmul.f32 1.0, %v1077
      %v1079 = vadd.f32 %v986, %v1066
      %v1080 = vxor.u32 %v1079, 2147483648
      %v1081 = vmul.f32 %v1080, 1.442695
      %v1082 = vpow.pop %v1081
      %v1083 = vadd.f32 %v1082, 1.0
      %v1084 = vrcp.pop %v1083
      %v1085 = vmul.f32 1.0, %v1084
      %v1086 = vmul.f32 %v1078, %v1068
      %v1087 = vadd.f32 %v1025, %v1086
      %v1088 = vtanh.pop %v1087
      %v1089 = vsub.f32 1.0, %v1085
      %v1090 = vmul.f32 %v1089, %v1088
      %v1091 = vmul.f32 %v1085, %v338
      %v1092 = vadd.f32 %v1090, %v1091
      %1093 = vst [vmem:[#allocation25] sm:$0xff] %v1092
      %s1094 = scalar_lea.vmem [#allocation7], 8
      %v1095 = vld [vmem:[%s1094] sm:$0xff]
      %v1096 = vpack.c.bf16 %v1092, %v1092
      %v1097 = vpack.c.bf16 %v1095, %v1095
      %v1098 = vld [vmem:[#allocation15] sm:$0xff]
      %v1099 = vld [vmem:[#allocation15 + $0x8] sm:$0xff]
      %v1100 = vld [vmem:[#allocation15 + $0x10] sm:$0xff]
      %v1101 = vld [vmem:[#allocation15 + $0x18] sm:$0xff]
      %v1102 = vld [vmem:[#allocation15 + $0x20] sm:$0xff]
      %v1103 = vld [vmem:[#allocation15 + $0x28] sm:$0xff]
      %v1104 = vld [vmem:[#allocation15 + $0x30] sm:$0xff]
      %v1105 = vld [vmem:[#allocation15 + $0x38] sm:$0xff]
      %v1106 = vld [vmem:[#allocation15 + $0x40] sm:$0xff]
      %v1107 = vld [vmem:[#allocation15 + $0x48] sm:$0xff]
      %v1108 = vld [vmem:[#allocation15 + $0x50] sm:$0xff]
      %v1109 = vld [vmem:[#allocation15 + $0x58] sm:$0xff]
      %v1110 = vld [vmem:[#allocation15 + $0x60] sm:$0xff]
      %v1111 = vld [vmem:[#allocation15 + $0x68] sm:$0xff]
      %v1112 = vld [vmem:[#allocation15 + $0x70] sm:$0xff]
      %v1113 = vld [vmem:[#allocation15 + $0x78] sm:$0xff]
      %v1114 = vld [vmem:[#allocation15 + $0x80] sm:$0xff]
      %v1115 = vld [vmem:[#allocation15 + $0x88] sm:$0xff]
      %v1116 = vld [vmem:[#allocation15 + $0x90] sm:$0xff]
      %v1117 = vld [vmem:[#allocation15 + $0x98] sm:$0xff]
      %v1118 = vld [vmem:[#allocation15 + $0xa0] sm:$0xff]
      %v1119 = vld [vmem:[#allocation15 + $0xa8] sm:$0xff]
      %v1120 = vld [vmem:[#allocation15 + $0xb0] sm:$0xff]
      %v1121 = vld [vmem:[#allocation15 + $0xb8] sm:$0xff]
      %v1122 = vld [vmem:[#allocation15 + $0xc0] sm:$0xff]
      %v1123 = vld [vmem:[#allocation15 + $0xc8] sm:$0xff]
      %v1124 = vld [vmem:[#allocation15 + $0xd0] sm:$0xff]
      %v1125 = vld [vmem:[#allocation15 + $0xd8] sm:$0xff]
      %v1126 = vld [vmem:[#allocation15 + $0xe0] sm:$0xff]
      %v1127 = vld [vmem:[#allocation15 + $0xe8] sm:$0xff]
      %v1128 = vld [vmem:[#allocation15 + $0xf0] sm:$0xff]
      %v1129 = vld [vmem:[#allocation15 + $0xf8] sm:$0xff]
      %v1130 = vld [vmem:[#allocation15 + $0x100] sm:$0xff]
      %v1131 = vld [vmem:[#allocation15 + $0x108] sm:$0xff]
      %v1132 = vld [vmem:[#allocation15 + $0x110] sm:$0xff]
      %v1133 = vld [vmem:[#allocation15 + $0x118] sm:$0xff]
      %v1134 = vld [vmem:[#allocation15 + $0x120] sm:$0xff]
      %v1135 = vld [vmem:[#allocation15 + $0x128] sm:$0xff]
      %v1136 = vld [vmem:[#allocation15 + $0x130] sm:$0xff]
      %v1137 = vld [vmem:[#allocation15 + $0x138] sm:$0xff]
      %v1138 = vld [vmem:[#allocation15 + $0x140] sm:$0xff]
      %v1139 = vld [vmem:[#allocation15 + $0x148] sm:$0xff]
      %v1140 = vld [vmem:[#allocation15 + $0x150] sm:$0xff]
      %v1141 = vld [vmem:[#allocation15 + $0x158] sm:$0xff]
      %v1142 = vld [vmem:[#allocation15 + $0x160] sm:$0xff]
      %v1143 = vld [vmem:[#allocation15 + $0x168] sm:$0xff]
      %v1144 = vld [vmem:[#allocation15 + $0x170] sm:$0xff]
      %v1145 = vld [vmem:[#allocation15 + $0x178] sm:$0xff]
      %v1146 = vld [vmem:[#allocation15 + $0x180] sm:$0xff]
      %v1147 = vld [vmem:[#allocation15 + $0x188] sm:$0xff]
      %v1148 = vld [vmem:[#allocation15 + $0x190] sm:$0xff]
      %v1149 = vld [vmem:[#allocation15 + $0x198] sm:$0xff]
      %v1150 = vld [vmem:[#allocation15 + $0x1a0] sm:$0xff]
      %v1151 = vld [vmem:[#allocation15 + $0x1a8] sm:$0xff]
      %v1152 = vld [vmem:[#allocation15 + $0x1b0] sm:$0xff]
      %v1153 = vld [vmem:[#allocation15 + $0x1b8] sm:$0xff]
      %v1154 = vld [vmem:[#allocation15 + $0x1c0] sm:$0xff]
      %v1155 = vld [vmem:[#allocation15 + $0x1c8] sm:$0xff]
      %v1156 = vld [vmem:[#allocation15 + $0x1d0] sm:$0xff]
      %v1157 = vld [vmem:[#allocation15 + $0x1d8] sm:$0xff]
      %v1158 = vld [vmem:[#allocation15 + $0x1e0] sm:$0xff]
      %v1159 = vld [vmem:[#allocation15 + $0x1e8] sm:$0xff]
      %v1160 = vld [vmem:[#allocation15 + $0x1f0] sm:$0xff]
      %v1161 = vld [vmem:[#allocation15 + $0x1f8] sm:$0xff]
      %v1162 = vld [vmem:[#allocation15 + $0x200] sm:$0xff]
      %v1163 = vld [vmem:[#allocation15 + $0x208] sm:$0xff]
      %v1164 = vld [vmem:[#allocation15 + $0x210] sm:$0xff]
      %v1165 = vld [vmem:[#allocation15 + $0x218] sm:$0xff]
      %v1166 = vld [vmem:[#allocation15 + $0x220] sm:$0xff]
      %v1167 = vld [vmem:[#allocation15 + $0x228] sm:$0xff]
      %v1168 = vld [vmem:[#allocation15 + $0x230] sm:$0xff]
      %v1169 = vld [vmem:[#allocation15 + $0x238] sm:$0xff]
      %v1170 = vld [vmem:[#allocation15 + $0x240] sm:$0xff]
      %v1171 = vld [vmem:[#allocation15 + $0x248] sm:$0xff]
      %v1172 = vld [vmem:[#allocation15 + $0x250] sm:$0xff]
      %v1173 = vld [vmem:[#allocation15 + $0x258] sm:$0xff]
      %v1174 = vld [vmem:[#allocation15 + $0x260] sm:$0xff]
      %v1175 = vld [vmem:[#allocation15 + $0x268] sm:$0xff]
      %v1176 = vld [vmem:[#allocation15 + $0x270] sm:$0xff]
      %v1177 = vld [vmem:[#allocation15 + $0x278] sm:$0xff]
      %v1178 = vld [vmem:[#allocation15 + $0x280] sm:$0xff]
      %v1179 = vld [vmem:[#allocation15 + $0x288] sm:$0xff]
      %v1180 = vld [vmem:[#allocation15 + $0x290] sm:$0xff]
      %v1181 = vld [vmem:[#allocation15 + $0x298] sm:$0xff]
      %v1182 = vld [vmem:[#allocation15 + $0x2a0] sm:$0xff]
      %v1183 = vld [vmem:[#allocation15 + $0x2a8] sm:$0xff]
      %v1184 = vld [vmem:[#allocation15 + $0x2b0] sm:$0xff]
      %v1185 = vld [vmem:[#allocation15 + $0x2b8] sm:$0xff]
      %v1186 = vld [vmem:[#allocation15 + $0x2c0] sm:$0xff]
      %v1187 = vld [vmem:[#allocation15 + $0x2c8] sm:$0xff]
      %v1188 = vld [vmem:[#allocation15 + $0x2d0] sm:$0xff]
      %v1189 = vld [vmem:[#allocation15 + $0x2d8] sm:$0xff]
      %v1190 = vld [vmem:[#allocation15 + $0x2e0] sm:$0xff]
      %v1191 = vld [vmem:[#allocation15 + $0x2e8] sm:$0xff]
      %v1192 = vld [vmem:[#allocation15 + $0x2f0] sm:$0xff]
      %v1193 = vld [vmem:[#allocation15 + $0x2f8] sm:$0xff]
      %v1194 = vld [vmem:[#allocation16] sm:$0x3f]
      %v1196 = vlaneseq
      %v1197 = vshrl.u32 %v1196, 7
      %v1198 = vsub.s32 0, %v1197
      %v1199 = vrot.slane %v1194, %v1198
      %v1200 = vlaneseq
      %v1201 = vshrl.u32 %v1200, 7
      %v1202 = vsub.s32 1, %v1201
      %v1203 = vrot.slane %v1194, %v1202
      %v1204 = vlaneseq
      %v1205 = vshrl.u32 %v1204, 7
      %v1206 = vsub.s32 2, %v1205
      %v1207 = vrot.slane %v1194, %v1206
      %v1208 = vlaneseq
      %v1209 = vshrl.u32 %v1208, 7
      %v1210 = vsub.s32 3, %v1209
      %v1211 = vrot.slane %v1194, %v1210
      %v1212 = vlaneseq
      %v1213 = vshrl.u32 %v1212, 7
      %v1214 = vsub.s32 4, %v1213
      %v1215 = vrot.slane %v1194, %v1214
      %v1216 = vlaneseq
      %v1217 = vshrl.u32 %v1216, 7
      %v1218 = vsub.s32 5, %v1217
      %v1219 = vrot.slane %v1194, %v1218
      %v1322 = vunpack.c.l.b16 %v1098
      %v1323 = vunpack.c.h.b16 %v1098
      %v1324 = vunpack.c.l.b16 %v1099
      %v1325 = vunpack.c.h.b16 %v1099
      %v1326 = vunpack.c.l.b16 %v1100
      %v1327 = vunpack.c.h.b16 %v1100
      %v1328 = vunpack.c.l.b16 %v1101
      %v1329 = vunpack.c.h.b16 %v1101
      %v1330 = vunpack.c.l.b16 %v1102
      %v1331 = vunpack.c.h.b16 %v1102
      %v1332 = vunpack.c.l.b16 %v1103
      %v1333 = vunpack.c.h.b16 %v1103
      %v1334 = vunpack.c.l.b16 %v1104
      %v1335 = vunpack.c.h.b16 %v1104
      %v1336 = vunpack.c.l.b16 %v1105
      %v1337 = vunpack.c.h.b16 %v1105
      %v1338 = vunpack.c.l.b16 %v1106
      %v1339 = vunpack.c.h.b16 %v1106
      %v1340 = vunpack.c.l.b16 %v1107
      %v1341 = vunpack.c.h.b16 %v1107
      %v1342 = vunpack.c.l.b16 %v1108
      %v1343 = vunpack.c.h.b16 %v1108
      %v1344 = vunpack.c.l.b16 %v1109
      %v1345 = vunpack.c.h.b16 %v1109
      %v1346 = vunpack.c.l.b16 %v1110
      %v1347 = vunpack.c.h.b16 %v1110
      %v1348 = vunpack.c.l.b16 %v1111
      %v1349 = vunpack.c.h.b16 %v1111
      %v1350 = vunpack.c.l.b16 %v1112
      %v1351 = vunpack.c.h.b16 %v1112
      %v1352 = vunpack.c.l.b16 %v1113
      %v1353 = vunpack.c.h.b16 %v1113
      %v1354 = vunpack.c.l.b16 %v1114
      %v1355 = vunpack.c.h.b16 %v1114
      %v1356 = vunpack.c.l.b16 %v1115
      %v1357 = vunpack.c.h.b16 %v1115
      %v1358 = vunpack.c.l.b16 %v1116
      %v1359 = vunpack.c.h.b16 %v1116
      %v1360 = vunpack.c.l.b16 %v1117
      %v1361 = vunpack.c.h.b16 %v1117
      %v1362 = vunpack.c.l.b16 %v1118
      %v1363 = vunpack.c.h.b16 %v1118
      %v1364 = vunpack.c.l.b16 %v1119
      %v1365 = vunpack.c.h.b16 %v1119
      %v1366 = vunpack.c.l.b16 %v1120
      %v1367 = vunpack.c.h.b16 %v1120
      %v1368 = vunpack.c.l.b16 %v1121
      %v1369 = vunpack.c.h.b16 %v1121
      %v1370 = vunpack.c.l.b16 %v1122
      %v1371 = vunpack.c.h.b16 %v1122
      %v1372 = vunpack.c.l.b16 %v1123
      %v1373 = vunpack.c.h.b16 %v1123
      %v1374 = vunpack.c.l.b16 %v1124
      %v1375 = vunpack.c.h.b16 %v1124
      %v1376 = vunpack.c.l.b16 %v1125
      %v1377 = vunpack.c.h.b16 %v1125
      %v1378 = vunpack.c.l.b16 %v1126
      %v1379 = vunpack.c.h.b16 %v1126
      %v1380 = vunpack.c.l.b16 %v1127
      %v1381 = vunpack.c.h.b16 %v1127
      %v1382 = vunpack.c.l.b16 %v1128
      %v1383 = vunpack.c.h.b16 %v1128
      %v1384 = vunpack.c.l.b16 %v1129
      %v1385 = vunpack.c.h.b16 %v1129
      %v1386 = vunpack.c.l.b16 %v1130
      %v1387 = vunpack.c.h.b16 %v1130
      %v1388 = vunpack.c.l.b16 %v1131
      %v1389 = vunpack.c.h.b16 %v1131
      %v1390 = vunpack.c.l.b16 %v1132
      %v1391 = vunpack.c.h.b16 %v1132
      %v1392 = vunpack.c.l.b16 %v1133
      %v1393 = vunpack.c.h.b16 %v1133
      %v1394 = vunpack.c.l.b16 %v1134
      %v1395 = vunpack.c.h.b16 %v1134
      %v1396 = vunpack.c.l.b16 %v1135
      %v1397 = vunpack.c.h.b16 %v1135
      %v1398 = vunpack.c.l.b16 %v1136
      %v1399 = vunpack.c.h.b16 %v1136
      %v1400 = vunpack.c.l.b16 %v1137
      %v1401 = vunpack.c.h.b16 %v1137
      %v1402 = vunpack.c.l.b16 %v1138
      %v1403 = vunpack.c.h.b16 %v1138
      %v1404 = vunpack.c.l.b16 %v1139
      %v1405 = vunpack.c.h.b16 %v1139
      %v1406 = vunpack.c.l.b16 %v1140
      %v1407 = vunpack.c.h.b16 %v1140
      %v1408 = vunpack.c.l.b16 %v1141
      %v1409 = vunpack.c.h.b16 %v1141
      %v1410 = vunpack.c.l.b16 %v1142
      %v1411 = vunpack.c.h.b16 %v1142
      %v1412 = vunpack.c.l.b16 %v1143
      %v1413 = vunpack.c.h.b16 %v1143
      %v1414 = vunpack.c.l.b16 %v1144
      %v1415 = vunpack.c.h.b16 %v1144
      %v1416 = vunpack.c.l.b16 %v1145
      %v1417 = vunpack.c.h.b16 %v1145
      %v1418 = vunpack.c.l.b16 %v1146
      %v1419 = vunpack.c.h.b16 %v1146
      %v1420 = vunpack.c.l.b16 %v1147
      %v1421 = vunpack.c.h.b16 %v1147
      %v1422 = vunpack.c.l.b16 %v1148
      %v1423 = vunpack.c.h.b16 %v1148
      %v1424 = vunpack.c.l.b16 %v1149
      %v1425 = vunpack.c.h.b16 %v1149
      %v1426 = vunpack.c.l.b16 %v1150
      %v1427 = vunpack.c.h.b16 %v1150
      %v1428 = vunpack.c.l.b16 %v1151
      %v1429 = vunpack.c.h.b16 %v1151
      %v1430 = vunpack.c.l.b16 %v1152
      %v1431 = vunpack.c.h.b16 %v1152
      %v1432 = vunpack.c.l.b16 %v1153
      %v1433 = vunpack.c.h.b16 %v1153
      %v1434 = vunpack.c.l.b16 %v1154
      %v1435 = vunpack.c.h.b16 %v1154
      %v1436 = vunpack.c.l.b16 %v1155
      %v1437 = vunpack.c.h.b16 %v1155
      %v1438 = vunpack.c.l.b16 %v1156
      %v1439 = vunpack.c.h.b16 %v1156
      %v1440 = vunpack.c.l.b16 %v1157
      %v1441 = vunpack.c.h.b16 %v1157
      %v1442 = vunpack.c.l.b16 %v1158
      %v1443 = vunpack.c.h.b16 %v1158
      %v1444 = vunpack.c.l.b16 %v1159
      %v1445 = vunpack.c.h.b16 %v1159
      %v1446 = vunpack.c.l.b16 %v1160
      %v1447 = vunpack.c.h.b16 %v1160
      %v1448 = vunpack.c.l.b16 %v1161
      %v1449 = vunpack.c.h.b16 %v1161
      %v1450 = vunpack.c.l.b16 %v1162
      %v1451 = vunpack.c.h.b16 %v1162
      %v1452 = vunpack.c.l.b16 %v1163
      %v1453 = vunpack.c.h.b16 %v1163
      %v1454 = vunpack.c.l.b16 %v1164
      %v1455 = vunpack.c.h.b16 %v1164
      %v1456 = vunpack.c.l.b16 %v1165
      %v1457 = vunpack.c.h.b16 %v1165
      %v1458 = vunpack.c.l.b16 %v1166
      %v1459 = vunpack.c.h.b16 %v1166
      %v1460 = vunpack.c.l.b16 %v1167
      %v1461 = vunpack.c.h.b16 %v1167
      %v1462 = vunpack.c.l.b16 %v1168
      %v1463 = vunpack.c.h.b16 %v1168
      %v1464 = vunpack.c.l.b16 %v1169
      %v1465 = vunpack.c.h.b16 %v1169
      %v1466 = vunpack.c.l.b16 %v1170
      %v1467 = vunpack.c.h.b16 %v1170
      %v1468 = vunpack.c.l.b16 %v1171
      %v1469 = vunpack.c.h.b16 %v1171
      %v1470 = vunpack.c.l.b16 %v1172
      %v1471 = vunpack.c.h.b16 %v1172
      %v1472 = vunpack.c.l.b16 %v1173
      %v1473 = vunpack.c.h.b16 %v1173
      %v1474 = vunpack.c.l.b16 %v1174
      %v1475 = vunpack.c.h.b16 %v1174
      %v1476 = vunpack.c.l.b16 %v1175
      %v1477 = vunpack.c.h.b16 %v1175
      %v1478 = vunpack.c.l.b16 %v1176
      %v1479 = vunpack.c.h.b16 %v1176
      %v1480 = vunpack.c.l.b16 %v1177
      %v1481 = vunpack.c.h.b16 %v1177
      %v1482 = vunpack.c.l.b16 %v1178
      %v1483 = vunpack.c.h.b16 %v1178
      %v1484 = vunpack.c.l.b16 %v1179
      %v1485 = vunpack.c.h.b16 %v1179
      %v1486 = vunpack.c.l.b16 %v1180
      %v1487 = vunpack.c.h.b16 %v1180
      %v1488 = vunpack.c.l.b16 %v1181
      %v1489 = vunpack.c.h.b16 %v1181
      %v1490 = vunpack.c.l.b16 %v1182
      %v1491 = vunpack.c.h.b16 %v1182
      %v1492 = vunpack.c.l.b16 %v1183
      %v1493 = vunpack.c.h.b16 %v1183
      %v1494 = vunpack.c.l.b16 %v1184
      %v1495 = vunpack.c.h.b16 %v1184
      %v1496 = vunpack.c.l.b16 %v1185
      %v1497 = vunpack.c.h.b16 %v1185
      %v1498 = vunpack.c.l.b16 %v1186
      %v1499 = vunpack.c.h.b16 %v1186
      %v1500 = vunpack.c.l.b16 %v1187
      %v1501 = vunpack.c.h.b16 %v1187
      %v1502 = vunpack.c.l.b16 %v1188
      %v1503 = vunpack.c.h.b16 %v1188
      %v1504 = vunpack.c.l.b16 %v1189
      %v1505 = vunpack.c.h.b16 %v1189
      %v1506 = vunpack.c.l.b16 %v1190
      %v1507 = vunpack.c.h.b16 %v1190
      %v1508 = vunpack.c.l.b16 %v1191
      %v1509 = vunpack.c.h.b16 %v1191
      %v1510 = vunpack.c.l.b16 %v1192
      %v1511 = vunpack.c.h.b16 %v1192
      %v1512 = vunpack.c.l.b16 %v1193
      %v1513 = vunpack.c.h.b16 %v1193
      %v1514 = vpack.c.b16 %v1328, %v1322
      %v1515 = vpack.c.b16 %v1329, %v1323
      %v1516 = vpack.c.b16 %v1330, %v1324
      %v1517 = vpack.c.b16 %v1331, %v1325
      %v1518 = vpack.c.b16 %v1332, %v1326
      %v1519 = vpack.c.b16 %v1333, %v1327
      %v1520 = vpack.c.b16 %v1340, %v1334
      %v1521 = vpack.c.b16 %v1341, %v1335
      %v1522 = vpack.c.b16 %v1342, %v1336
      %v1523 = vpack.c.b16 %v1343, %v1337
      %v1524 = vpack.c.b16 %v1344, %v1338
      %v1525 = vpack.c.b16 %v1345, %v1339
      %v1526 = vpack.c.b16 %v1352, %v1346
      %v1527 = vpack.c.b16 %v1353, %v1347
      %v1528 = vpack.c.b16 %v1354, %v1348
      %v1529 = vpack.c.b16 %v1355, %v1349
      %v1530 = vpack.c.b16 %v1356, %v1350
      %v1531 = vpack.c.b16 %v1357, %v1351
      %v1532 = vpack.c.b16 %v1364, %v1358
      %v1533 = vpack.c.b16 %v1365, %v1359
      %v1534 = vpack.c.b16 %v1366, %v1360
      %v1535 = vpack.c.b16 %v1367, %v1361
      %v1536 = vpack.c.b16 %v1368, %v1362
      %v1537 = vpack.c.b16 %v1369, %v1363
      %v1538 = vpack.c.b16 %v1376, %v1370
      %v1539 = vpack.c.b16 %v1377, %v1371
      %v1540 = vpack.c.b16 %v1378, %v1372
      %v1541 = vpack.c.b16 %v1379, %v1373
      %v1542 = vpack.c.b16 %v1380, %v1374
      %v1543 = vpack.c.b16 %v1381, %v1375
      %v1544 = vpack.c.b16 %v1388, %v1382
      %v1545 = vpack.c.b16 %v1389, %v1383
      %v1546 = vpack.c.b16 %v1390, %v1384
      %v1547 = vpack.c.b16 %v1391, %v1385
      %v1548 = vpack.c.b16 %v1392, %v1386
      %v1549 = vpack.c.b16 %v1393, %v1387
      %v1550 = vpack.c.b16 %v1400, %v1394
      %v1551 = vpack.c.b16 %v1401, %v1395
      %v1552 = vpack.c.b16 %v1402, %v1396
      %v1553 = vpack.c.b16 %v1403, %v1397
      %v1554 = vpack.c.b16 %v1404, %v1398
      %v1555 = vpack.c.b16 %v1405, %v1399
      %v1556 = vpack.c.b16 %v1412, %v1406
      %v1557 = vpack.c.b16 %v1413, %v1407
      %v1558 = vpack.c.b16 %v1414, %v1408
      %v1559 = vpack.c.b16 %v1415, %v1409
      %v1560 = vpack.c.b16 %v1416, %v1410
      %v1561 = vpack.c.b16 %v1417, %v1411
      %v1562 = vpack.c.b16 %v1424, %v1418
      %v1563 = vpack.c.b16 %v1425, %v1419
      %v1564 = vpack.c.b16 %v1426, %v1420
      %v1565 = vpack.c.b16 %v1427, %v1421
      %v1566 = vpack.c.b16 %v1428, %v1422
      %v1567 = vpack.c.b16 %v1429, %v1423
      %v1568 = vpack.c.b16 %v1436, %v1430
      %v1569 = vpack.c.b16 %v1437, %v1431
      %v1570 = vpack.c.b16 %v1438, %v1432
      %v1571 = vpack.c.b16 %v1439, %v1433
      %v1572 = vpack.c.b16 %v1440, %v1434
      %v1573 = vpack.c.b16 %v1441, %v1435
      %v1574 = vpack.c.b16 %v1448, %v1442
      %v1575 = vpack.c.b16 %v1449, %v1443
      %v1576 = vpack.c.b16 %v1450, %v1444
      %v1577 = vpack.c.b16 %v1451, %v1445
      %v1578 = vpack.c.b16 %v1452, %v1446
      %v1579 = vpack.c.b16 %v1453, %v1447
      %v1580 = vpack.c.b16 %v1460, %v1454
      %v1581 = vpack.c.b16 %v1461, %v1455
      %v1582 = vpack.c.b16 %v1462, %v1456
      %v1583 = vpack.c.b16 %v1463, %v1457
      %v1584 = vpack.c.b16 %v1464, %v1458
      %v1585 = vpack.c.b16 %v1465, %v1459
      %v1586 = vpack.c.b16 %v1472, %v1466
      %v1587 = vpack.c.b16 %v1473, %v1467
      %v1588 = vpack.c.b16 %v1474, %v1468
      %v1589 = vpack.c.b16 %v1475, %v1469
      %v1590 = vpack.c.b16 %v1476, %v1470
      %v1591 = vpack.c.b16 %v1477, %v1471
      %v1592 = vpack.c.b16 %v1484, %v1478
      %v1593 = vpack.c.b16 %v1485, %v1479
      %v1594 = vpack.c.b16 %v1486, %v1480
      %v1595 = vpack.c.b16 %v1487, %v1481
      %v1596 = vpack.c.b16 %v1488, %v1482
      %v1597 = vpack.c.b16 %v1489, %v1483
      %v1598 = vpack.c.b16 %v1496, %v1490
      %v1599 = vpack.c.b16 %v1497, %v1491
      %v1600 = vpack.c.b16 %v1498, %v1492
      %v1601 = vpack.c.b16 %v1499, %v1493
      %v1602 = vpack.c.b16 %v1500, %v1494
      %v1603 = vpack.c.b16 %v1501, %v1495
      %v1604 = vpack.c.b16 %v1508, %v1502
      %v1605 = vpack.c.b16 %v1509, %v1503
      %v1606 = vpack.c.b16 %v1510, %v1504
      %v1607 = vpack.c.b16 %v1511, %v1505
      %v1608 = vpack.c.b16 %v1512, %v1506
      %v1609 = vpack.c.b16 %v1513, %v1507
      %1706 = vmatprep.subr.bf16.mxu0 %v1515
      %1707 = vmatpush1.bf16.msra.mxu0 %v1514
      %1708 = vmatprep.subr.bf16.mxu0 %v1521
      %1709 = vmatpush1.bf16.msra.mxu0 %v1520
      %1710 = vmatprep.subr.bf16.mxu0 %v1527
      %1711 = vmatpush1.bf16.msra.mxu0 %v1526
      %1712 = vmatprep.subr.bf16.mxu0 %v1533
      %1713 = vmatpush1.bf16.msra.mxu0 %v1532
      %1714 = vmatprep.subr.bf16.mxu0 %v1539
      %1715 = vmatpush1.bf16.msra.mxu0 %v1538
      %1716 = vmatprep.subr.bf16.mxu0 %v1545
      %1717 = vmatpush1.bf16.msra.mxu0 %v1544
      %1718 = vmatprep.subr.bf16.mxu0 %v1551
      %1719 = vmatpush1.bf16.msra.mxu0 %v1550
      %1720 = vmatprep.subr.bf16.mxu0 %v1557
      %1721 = vmatpush1.bf16.msra.mxu0 %v1556
      %1722 = vmatprep.subr.bf16.mxu0 %v1563
      %1723 = vmatpush1.bf16.msra.mxu0 %v1562
      %1724 = vmatprep.subr.bf16.mxu0 %v1569
      %1725 = vmatpush1.bf16.msra.mxu0 %v1568
      %1726 = vmatprep.subr.bf16.mxu0 %v1575
      %1727 = vmatpush1.bf16.msra.mxu0 %v1574
      %1728 = vmatprep.subr.bf16.mxu0 %v1581
      %1729 = vmatpush1.bf16.msra.mxu0 %v1580
      %1730 = vmatprep.subr.bf16.mxu0 %v1587
      %1731 = vmatpush1.bf16.msra.mxu0 %v1586
      %1732 = vmatprep.subr.bf16.mxu0 %v1593
      %1733 = vmatpush1.bf16.msra.mxu0 %v1592
      %1734 = vmatprep.subr.bf16.mxu0 %v1599
      %1735 = vmatpush1.bf16.msra.mxu0 %v1598
      %1736 = vmatprep.subr.bf16.mxu0 %v1605
      %1737 = vmatpush1.bf16.msra.mxu0 %v1604
      %1738 = vmatprep.mubr.bf16.mxu0 %v1097
      %1739 = vmatmul.mubr.bf16.gmra.mrb[0].mxu0 %v1096
      %v1740 = vpop.f32.mrb[0].mxu0
      %v1741 = vadd.f32 %v1199, %v1740
      %v1742 = vpop.f32.mrb[0].mxu0
      %v1743 = vadd.f32 %v1203, %v1742
      %v1744 = vpop.f32.mrb[0].mxu0
      %v1745 = vpop.f32.mrb[0].mxu0
      %1746 = vdwg.mxu0
      %1747 = vmatprep.subr.bf16.mxu0 %v1517
      %1748 = vmatpush1.bf16.msra.mxu0 %v1516
      %1749 = vmatprep.subr.bf16.mxu0 %v1523
      %1750 = vmatpush1.bf16.msra.mxu0 %v1522
      %1751 = vmatprep.subr.bf16.mxu0 %v1529
      %1752 = vmatpush1.bf16.msra.mxu0 %v1528
      %1753 = vmatprep.subr.bf16.mxu0 %v1535
      %1754 = vmatpush1.bf16.msra.mxu0 %v1534
      %1755 = vmatprep.subr.bf16.mxu0 %v1541
      %1756 = vmatpush1.bf16.msra.mxu0 %v1540
      %1757 = vmatprep.subr.bf16.mxu0 %v1547
      %1758 = vmatpush1.bf16.msra.mxu0 %v1546
      %1759 = vmatprep.subr.bf16.mxu0 %v1553
      %1760 = vmatpush1.bf16.msra.mxu0 %v1552
      %1761 = vmatprep.subr.bf16.mxu0 %v1559
      %1762 = vmatpush1.bf16.msra.mxu0 %v1558
      %1763 = vmatprep.subr.bf16.mxu0 %v1565
      %1764 = vmatpush1.bf16.msra.mxu0 %v1564
      %1765 = vmatprep.subr.bf16.mxu0 %v1571
      %1766 = vmatpush1.bf16.msra.mxu0 %v1570
      %1767 = vmatprep.subr.bf16.mxu0 %v1577
      %1768 = vmatpush1.bf16.msra.mxu0 %v1576
      %1769 = vmatprep.subr.bf16.mxu0 %v1583
      %1770 = vmatpush1.bf16.msra.mxu0 %v1582
      %1771 = vmatprep.subr.bf16.mxu0 %v1589
      %1772 = vmatpush1.bf16.msra.mxu0 %v1588
      %1773 = vmatprep.subr.bf16.mxu0 %v1595
      %1774 = vmatpush1.bf16.msra.mxu0 %v1594
      %1775 = vmatprep.subr.bf16.mxu0 %v1601
      %1776 = vmatpush1.bf16.msra.mxu0 %v1600
      %1777 = vmatprep.subr.bf16.mxu0 %v1607
      %1778 = vmatpush1.bf16.msra.mxu0 %v1606
      %1779 = vmatprep.mubr.bf16.mxu0 %v1097
      %1780 = vmatmul.mubr.bf16.gmra.mrb[0].mxu0 %v1096
      %v1781 = vpop.f32.mrb[0].mxu0
      %v1782 = vadd.f32 %v1207, %v1781
      %v1783 = vpop.f32.mrb[0].mxu0
      %v1784 = vadd.f32 %v1211, %v1783
      %v1785 = vpop.f32.mrb[0].mxu0
      %v1786 = vpop.f32.mrb[0].mxu0
      %1787 = vdwg.mxu0
      %1788 = vmatprep.subr.bf16.mxu0 %v1519
      %1789 = vmatpush1.bf16.msra.mxu0 %v1518
      %1790 = vmatprep.subr.bf16.mxu0 %v1525
      %1791 = vmatpush1.bf16.msra.mxu0 %v1524
      %1792 = vmatprep.subr.bf16.mxu0 %v1531
      %1793 = vmatpush1.bf16.msra.mxu0 %v1530
      %1794 = vmatprep.subr.bf16.mxu0 %v1537
      %1795 = vmatpush1.bf16.msra.mxu0 %v1536
      %1796 = vmatprep.subr.bf16.mxu0 %v1543
      %1797 = vmatpush1.bf16.msra.mxu0 %v1542
      %1798 = vmatprep.subr.bf16.mxu0 %v1549
      %1799 = vmatpush1.bf16.msra.mxu0 %v1548
      %1800 = vmatprep.subr.bf16.mxu0 %v1555
      %1801 = vmatpush1.bf16.msra.mxu0 %v1554
      %1802 = vmatprep.subr.bf16.mxu0 %v1561
      %1803 = vmatpush1.bf16.msra.mxu0 %v1560
      %1804 = vmatprep.subr.bf16.mxu0 %v1567
      %1805 = vmatpush1.bf16.msra.mxu0 %v1566
      %1806 = vmatprep.subr.bf16.mxu0 %v1573
      %1807 = vmatpush1.bf16.msra.mxu0 %v1572
      %1808 = vmatprep.subr.bf16.mxu0 %v1579
      %1809 = vmatpush1.bf16.msra.mxu0 %v1578
      %1810 = vmatprep.subr.bf16.mxu0 %v1585
      %1811 = vmatpush1.bf16.msra.mxu0 %v1584
      %1812 = vmatprep.subr.bf16.mxu0 %v1591
      %1813 = vmatpush1.bf16.msra.mxu0 %v1590
      %1814 = vmatprep.subr.bf16.mxu0 %v1597
      %1815 = vmatpush1.bf16.msra.mxu0 %v1596
      %1816 = vmatprep.subr.bf16.mxu0 %v1603
      %1817 = vmatpush1.bf16.msra.mxu0 %v1602
      %1818 = vmatprep.subr.bf16.mxu0 %v1609
      %1819 = vmatpush1.bf16.msra.mxu0 %v1608
      %1820 = vmatprep.mubr.bf16.mxu0 %v1097
      %1821 = vmatmul.mubr.bf16.gmra.mrb[0].mxu0 %v1096
      %v1822 = vpop.f32.mrb[0].mxu0
      %v1823 = vadd.f32 %v1215, %v1822
      %v1824 = vpop.f32.mrb[0].mxu0
      %v1825 = vadd.f32 %v1219, %v1824
      %v1826 = vpop.f32.mrb[0].mxu0
      %v1827 = vpop.f32.mrb[0].mxu0
      %1828 = vdwg.mxu0
      %v1829 = vadd.f32 %v1741, %v1784
      %v1830 = vxor.u32 %v1829, 2147483648
      %v1831 = vmul.f32 %v1830, 1.442695
      %v1832 = vpow.pop %v1831
      %v1833 = vadd.f32 %v1832, 1.0
      %v1834 = vrcp.pop %v1833
      %v1835 = vmul.f32 1.0, %v1834
      %v1836 = vadd.f32 %v1743, %v1823
      %v1837 = vxor.u32 %v1836, 2147483648
      %v1838 = vmul.f32 %v1837, 1.442695
      %v1839 = vpow.pop %v1838
      %v1840 = vadd.f32 %v1839, 1.0
      %v1841 = vrcp.pop %v1840
      %v1842 = vmul.f32 1.0, %v1841
      %v1843 = vmul.f32 %v1835, %v1825
      %v1844 = vadd.f32 %v1782, %v1843
      %v1845 = vtanh.pop %v1844
      %v1846 = vsub.f32 1.0, %v1842
      %v1847 = vmul.f32 %v1846, %v1845
      %v1848 = vmul.f32 %v1842, %v1095
      %v1849 = vadd.f32 %v1847, %v1848
      %s1850 = scalar_lea.vmem [#allocation25], 8
      %1851 = vst [vmem:[%s1850] sm:$0xff] %v1849
      %v1852 = vld [vmem:[#allocation10] sm:$0xff]
      %v1853 = vld [vmem:[#allocation10 + $0x8] sm:$0xff]
      %v1854 = vld [vmem:[#allocation10 + $0x10] sm:$0xff]
      %v1855 = vld [vmem:[#allocation10 + $0x18] sm:$0xff]
      %v1856 = vld [vmem:[#allocation10 + $0x20] sm:$0xff]
      %v1857 = vld [vmem:[#allocation10 + $0x28] sm:$0xff]
      %v1858 = vld [vmem:[#allocation10 + $0x30] sm:$0xff]
      %v1859 = vld [vmem:[#allocation10 + $0x38] sm:$0xff]
      %v1860 = vpack.c.bf16 %v1852, %v1852
      %v1861 = vpack.c.bf16 %v1853, %v1853
      %v1862 = vpack.c.bf16 %v1854, %v1854
      %v1863 = vpack.c.bf16 %v1855, %v1855
      %v1864 = vpack.c.bf16 %v1856, %v1856
      %v1865 = vpack.c.bf16 %v1857, %v1857
      %v1866 = vpack.c.bf16 %v1858, %v1858
      %v1867 = vpack.c.bf16 %v1859, %v1859
      %v1868 = vpack.c.bf16 %v1849, %v1849
      %v1869 = vld [vmem:[#allocation18] sm:$0xf]
      %v1870 = vld [vmem:[#allocation18 + $0x4] sm:$0xf]
      %v1871 = vld [vmem:[#allocation18 + $0x8] sm:$0xf]
      %v1872 = vld [vmem:[#allocation18 + $0xc] sm:$0xf]
      %v1873 = vld [vmem:[#allocation18 + $0x10] sm:$0xf]
      %v1874 = vld [vmem:[#allocation18 + $0x14] sm:$0xf]
      %v1875 = vld [vmem:[#allocation18 + $0x18] sm:$0xf]
      %v1876 = vld [vmem:[#allocation18 + $0x1c] sm:$0xf]
      %v1877 = vld [vmem:[#allocation18 + $0x20] sm:$0xf]
      %v1878 = vld [vmem:[#allocation18 + $0x24] sm:$0xf]
      %v1879 = vld [vmem:[#allocation18 + $0x28] sm:$0xf]
      %v1880 = vld [vmem:[#allocation18 + $0x2c] sm:$0xf]
      %v1881 = vld [vmem:[#allocation18 + $0x30] sm:$0xf]
      %v1882 = vld [vmem:[#allocation18 + $0x34] sm:$0xf]
      %v1883 = vld [vmem:[#allocation18 + $0x38] sm:$0xf]
      %v1884 = vld [vmem:[#allocation18 + $0x3c] sm:$0xf]
      %v1901 = vunpack.c.l.b16 %v1869
      %v1902 = vunpack.c.l.b16 %v1870
      %v1903 = vunpack.c.l.b16 %v1871
      %v1904 = vunpack.c.l.b16 %v1872
      %v1905 = vunpack.c.l.b16 %v1873
      %v1906 = vunpack.c.l.b16 %v1874
      %v1907 = vunpack.c.l.b16 %v1875
      %v1908 = vunpack.c.l.b16 %v1876
      %v1909 = vunpack.c.l.b16 %v1877
      %v1910 = vunpack.c.l.b16 %v1878
      %v1911 = vunpack.c.l.b16 %v1879
      %v1912 = vunpack.c.l.b16 %v1880
      %v1913 = vunpack.c.l.b16 %v1881
      %v1914 = vunpack.c.l.b16 %v1882
      %v1915 = vunpack.c.l.b16 %v1883
      %v1916 = vunpack.c.l.b16 %v1884
      %v1917 = vpack.c.b16 %v1902, %v1901
      %v1918 = vpack.c.b16 %v1904, %v1903
      %v1919 = vpack.c.b16 %v1906, %v1905
      %v1920 = vpack.c.b16 %v1908, %v1907
      %v1921 = vpack.c.b16 %v1910, %v1909
      %v1922 = vpack.c.b16 %v1912, %v1911
      %v1923 = vpack.c.b16 %v1914, %v1913
      %v1924 = vpack.c.b16 %v1916, %v1915
      %1933 = vmatprep.subr.bf16.mxu0 0
      %1934 = vmatpush1.bf16.msra.mxu0 %v1917
      %1935 = vmatprep.subr.bf16.mxu0 0
      %1936 = vmatpush1.bf16.msra.mxu0 %v1918
      %1937 = vmatprep.subr.bf16.mxu0 0
      %1938 = vmatpush1.bf16.msra.mxu0 %v1919
      %1939 = vmatprep.subr.bf16.mxu0 0
      %1940 = vmatpush1.bf16.msra.mxu0 %v1920
      %1941 = vmatprep.subr.bf16.mxu0 0
      %1942 = vmatpush1.bf16.msra.mxu0 %v1921
      %1943 = vmatprep.subr.bf16.mxu0 0
      %1944 = vmatpush1.bf16.msra.mxu0 %v1922
      %1945 = vmatprep.subr.bf16.mxu0 0
      %1946 = vmatpush1.bf16.msra.mxu0 %v1923
      %1947 = vmatprep.subr.bf16.mxu0 0
      %1948 = vmatpush1.bf16.msra.mxu0 %v1924
      %1949 = vmatprep.subr.bf16.mxu0 0
      %1950 = vmatpush1.bf16.msra.mxu0 0
      %1951 = vmatprep.subr.bf16.mxu0 0
      %1952 = vmatpush1.bf16.msra.mxu0 0
      %1953 = vmatprep.subr.bf16.mxu0 0
      %1954 = vmatpush1.bf16.msra.mxu0 0
      %1955 = vmatprep.subr.bf16.mxu0 0
      %1956 = vmatpush1.bf16.msra.mxu0 0
      %1957 = vmatprep.subr.bf16.mxu0 0
      %1958 = vmatpush1.bf16.msra.mxu0 0
      %1959 = vmatprep.subr.bf16.mxu0 0
      %1960 = vmatpush1.bf16.msra.mxu0 0
      %1961 = vmatprep.subr.bf16.mxu0 0
      %1962 = vmatpush1.bf16.msra.mxu0 0
      %1963 = vmatprep.subr.bf16.mxu0 0
      %1964 = vmatpush1.bf16.msra.mxu0 0
      %1965 = vmatprep.mubr.bf16.mxu0 0
      %1966 = vmatmul.mubr.bf16.gmra.mrb[0].mxu0 %v1868
      %v1967 = vpop.f32.mrb[0].mxu0
      %v1968 = vadd.f32 0.0, %v1967
      %v1969 = vpop.f32.mrb[0].mxu0
      %v1970 = vpop.f32.mrb[0].mxu0
      %v1971 = vpop.f32.mrb[0].mxu0
      %1972 = vdwg.mxu0
      %v1973 = vpack.c.bf16 %v1968, %v1968
      %v1976 = vunpack.c.l.s4 1966171168
      %v1977 = vunpack.c.0.s8 %v1976
      %v1978 = vlaneseq
      %v1979 = vshrl.u32 %v1978, 7
      %v1980 = vsub.s32 %v1977, %v1979
      %v1981 = vrot.slane %v1973, %v1980
      %v1982 = vcombine.high %v1981, %v1981
      %v1984 = vunpack.c.l.s4 1966171168
      %v1985 = vunpack.c.0.s8 %v1984
      %v1986 = vlaneseq
      %v1987 = vshrl.u32 %v1986, 7
      %v1988 = vsub.s32 %v1985, %v1987
      %v1989 = vrot.slane %v1981, %v1988
      %v1991 = vunpack.c.l.s4 1966171168
      %v1992 = vunpack.c.0.s8 %v1991
      %v1993 = vlaneseq
      %v1994 = vshrl.u32 %v1993, 7
      %v1995 = vsub.s32 %v1992, %v1994
      %v1996 = vrot.slane %v1982, %v1995
      %v1997 = vcombine.high %v1989, %v1989
      %v1998 = vcombine.high %v1996, %v1996
      %v1999 = vunpack.i.l.s16 %v1989
      %v2000 = vunpack.i.h.s16 %v1989
      %v2001 = vunpack.i.l.s16 %v1996
      %v2002 = vunpack.i.h.s16 %v1996
      %v2003 = vunpack.i.l.s16 %v1997
      %v2004 = vunpack.i.h.s16 %v1997
      %v2005 = vunpack.i.l.s16 %v1998
      %v2006 = vunpack.i.h.s16 %v1998
      %v2007 = vpack.i.b16 %v1999, %v1999
      %v2008 = vlaneseq
      %v2009 = vshrl.u32 %v2008, 7
      %v2010 = vsub.s32 0, %v2009
      %v2011 = vrot.slane %v2007, %v2010
      %2013 = vmatprep.subr.bf16.mxu0 0
      %2014 = vmatpush1.bf16.xpose.msra.mxu0 %v1860
      %2015 = vmatprep.subr.bf16.mxu0 0
      %2016 = vmatpush1.bf16.xpose.msra.mxu0 0
      %2017 = vmatprep.subr.bf16.mxu0 0
      %2018 = vmatpush1.bf16.xpose.msra.mxu0 0
      %2019 = vmatprep.subr.bf16.mxu0 0
      %2020 = vmatpush1.bf16.xpose.msra.mxu0 0
      %2021 = vmatprep.subr.bf16.mxu0 0
      %2022 = vmatpush1.bf16.xpose.msra.mxu0 0
      %2023 = vmatprep.subr.bf16.mxu0 0
      %2024 = vmatpush1.bf16.xpose.msra.mxu0 0
      %2025 = vmatprep.subr.bf16.mxu0 0
      %2026 = vmatpush1.bf16.xpose.msra.mxu0 0
      %2027 = vmatprep.subr.bf16.mxu0 0
      %2028 = vmatpush1.bf16.xpose.msra.mxu0 0
      %2029 = vmatprep.subr.bf16.mxu0 0
      %2030 = vmatpush1.bf16.xpose.msra.mxu0 0
      %2031 = vmatprep.subr.bf16.mxu0 0
      %2032 = vmatpush1.bf16.xpose.msra.mxu0 0
      %2033 = vmatprep.subr.bf16.mxu0 0
      %2034 = vmatpush1.bf16.xpose.msra.mxu0 0
      %2035 = vmatprep.subr.bf16.mxu0 0
      %2036 = vmatpush1.bf16.xpose.msra.mxu0 0
      %2037 = vmatprep.subr.bf16.mxu0 0
      %2038 = vmatpush1.bf16.xpose.msra.mxu0 0
      %2039 = vmatprep.subr.bf16.mxu0 0
      %2040 = vmatpush1.bf16.xpose.msra.mxu0 0
      %2041 = vmatprep.subr.bf16.mxu0 0
      %2042 = vmatpush1.bf16.xpose.msra.mxu0 0
      %2043 = vmatprep.subr.bf16.mxu0 0
      %2044 = vmatpush1.bf16.xpose.msra.mxu0 0
      %2045 = vmatprep.mubr.bf16.mxu0 0
      %2046 = vmatmul.mubr.bf16.gmra.mrb[0].mxu0 %v2011
      %v2047 = vpop.f32.mrb[0].mxu0
      %v2048 = vadd.f32 0.0, %v2047
      %v2049 = vpop.f32.mrb[0].mxu0
      %v2050 = vpop.f32.mrb[0].mxu0
      %v2051 = vpop.f32.mrb[0].mxu0
      %2052 = vdwg.mxu0
      %v2053 = vpack.i.b16 %v2000, %v2000
      %v2054 = vlaneseq
      %v2055 = vshrl.u32 %v2054, 7
      %v2056 = vsub.s32 0, %v2055
      %v2057 = vrot.slane %v2053, %v2056
      %2059 = vmatprep.subr.bf16.mxu0 0
      %2060 = vmatpush1.bf16.xpose.msra.mxu0 %v1861
      %2061 = vmatprep.subr.bf16.mxu0 0
      %2062 = vmatpush1.bf16.xpose.msra.mxu0 0
      %2063 = vmatprep.subr.bf16.mxu0 0
      %2064 = vmatpush1.bf16.xpose.msra.mxu0 0
      %2065 = vmatprep.subr.bf16.mxu0 0
      %2066 = vmatpush1.bf16.xpose.msra.mxu0 0
      %2067 = vmatprep.subr.bf16.mxu0 0
      %2068 = vmatpush1.bf16.xpose.msra.mxu0 0
      %2069 = vmatprep.subr.bf16.mxu0 0
      %2070 = vmatpush1.bf16.xpose.msra.mxu0 0
      %2071 = vmatprep.subr.bf16.mxu0 0
      %2072 = vmatpush1.bf16.xpose.msra.mxu0 0
      %2073 = vmatprep.subr.bf16.mxu0 0
      %2074 = vmatpush1.bf16.xpose.msra.mxu0 0
      %2075 = vmatprep.subr.bf16.mxu0 0
      %2076 = vmatpush1.bf16.xpose.msra.mxu0 0
      %2077 = vmatprep.subr.bf16.mxu0 0
      %2078 = vmatpush1.bf16.xpose.msra.mxu0 0
      %2079 = vmatprep.subr.bf16.mxu0 0
      %2080 = vmatpush1.bf16.xpose.msra.mxu0 0
      %2081 = vmatprep.subr.bf16.mxu0 0
      %2082 = vmatpush1.bf16.xpose.msra.mxu0 0
      %2083 = vmatprep.subr.bf16.mxu0 0
      %2084 = vmatpush1.bf16.xpose.msra.mxu0 0
      %2085 = vmatprep.subr.bf16.mxu0 0
      %2086 = vmatpush1.bf16.xpose.msra.mxu0 0
      %2087 = vmatprep.subr.bf16.mxu0 0
      %2088 = vmatpush1.bf16.xpose.msra.mxu0 0
      %2089 = vmatprep.subr.bf16.mxu0 0
      %2090 = vmatpush1.bf16.xpose.msra.mxu0 0
      %2091 = vmatprep.mubr.bf16.mxu0 0
      %2092 = vmatmul.mubr.bf16.gmra.mrb[0].mxu0 %v2057
      %v2093 = vpop.f32.mrb[0].mxu0
      %v2094 = vadd.f32 0.0, %v2093
      %v2095 = vpop.f32.mrb[0].mxu0
      %v2096 = vpop.f32.mrb[0].mxu0
      %v2097 = vpop.f32.mrb[0].mxu0
      %2098 = vdwg.mxu0
      %v2099 = vpack.i.b16 %v2001, %v2001
      %v2100 = vlaneseq
      %v2101 = vshrl.u32 %v2100, 7
      %v2102 = vsub.s32 0, %v2101
      %v2103 = vrot.slane %v2099, %v2102
      %2105 = vmatprep.subr.bf16.mxu0 0
      %2106 = vmatpush1.bf16.xpose.msra.mxu0 %v1862
      %2107 = vmatprep.subr.bf16.mxu0 0
      %2108 = vmatpush1.bf16.xpose.msra.mxu0 0
      %2109 = vmatprep.subr.bf16.mxu0 0
      %2110 = vmatpush1.bf16.xpose.msra.mxu0 0
      %2111 = vmatprep.subr.bf16.mxu0 0
      %2112 = vmatpush1.bf16.xpose.msra.mxu0 0
      %2113 = vmatprep.subr.bf16.mxu0 0
      %2114 = vmatpush1.bf16.xpose.msra.mxu0 0
      %2115 = vmatprep.subr.bf16.mxu0 0
      %2116 = vmatpush1.bf16.xpose.msra.mxu0 0
      %2117 = vmatprep.subr.bf16.mxu0 0
      %2118 = vmatpush1.bf16.xpose.msra.mxu0 0
      %2119 = vmatprep.subr.bf16.mxu0 0
      %2120 = vmatpush1.bf16.xpose.msra.mxu0 0
      %2121 = vmatprep.subr.bf16.mxu0 0
      %2122 = vmatpush1.bf16.xpose.msra.mxu0 0
      %2123 = vmatprep.subr.bf16.mxu0 0
      %2124 = vmatpush1.bf16.xpose.msra.mxu0 0
      %2125 = vmatprep.subr.bf16.mxu0 0
      %2126 = vmatpush1.bf16.xpose.msra.mxu0 0
      %2127 = vmatprep.subr.bf16.mxu0 0
      %2128 = vmatpush1.bf16.xpose.msra.mxu0 0
      %2129 = vmatprep.subr.bf16.mxu0 0
      %2130 = vmatpush1.bf16.xpose.msra.mxu0 0
      %2131 = vmatprep.subr.bf16.mxu0 0
      %2132 = vmatpush1.bf16.xpose.msra.mxu0 0
      %2133 = vmatprep.subr.bf16.mxu0 0
      %2134 = vmatpush1.bf16.xpose.msra.mxu0 0
      %2135 = vmatprep.subr.bf16.mxu0 0
      %2136 = vmatpush1.bf16.xpose.msra.mxu0 0
      %2137 = vmatprep.mubr.bf16.mxu0 0
      %2138 = vmatmul.mubr.bf16.gmra.mrb[0].mxu0 %v2103
      %v2139 = vpop.f32.mrb[0].mxu0
      %v2140 = vadd.f32 0.0, %v2139
      %v2141 = vpop.f32.mrb[0].mxu0
      %v2142 = vpop.f32.mrb[0].mxu0
      %v2143 = vpop.f32.mrb[0].mxu0
      %2144 = vdwg.mxu0
      %v2145 = vpack.i.b16 %v2002, %v2002
      %v2146 = vlaneseq
      %v2147 = vshrl.u32 %v2146, 7
      %v2148 = vsub.s32 0, %v2147
      %v2149 = vrot.slane %v2145, %v2148
      %2151 = vmatprep.subr.bf16.mxu0 0
      %2152 = vmatpush1.bf16.xpose.msra.mxu0 %v1863
      %2153 = vmatprep.subr.bf16.mxu0 0
      %2154 = vmatpush1.bf16.xpose.msra.mxu0 0
      %2155 = vmatprep.subr.bf16.mxu0 0
      %2156 = vmatpush1.bf16.xpose.msra.mxu0 0
      %2157 = vmatprep.subr.bf16.mxu0 0
      %2158 = vmatpush1.bf16.xpose.msra.mxu0 0
      %2159 = vmatprep.subr.bf16.mxu0 0
      %2160 = vmatpush1.bf16.xpose.msra.mxu0 0
      %2161 = vmatprep.subr.bf16.mxu0 0
      %2162 = vmatpush1.bf16.xpose.msra.mxu0 0
      %2163 = vmatprep.subr.bf16.mxu0 0
      %2164 = vmatpush1.bf16.xpose.msra.mxu0 0
      %2165 = vmatprep.subr.bf16.mxu0 0
      %2166 = vmatpush1.bf16.xpose.msra.mxu0 0
      %2167 = vmatprep.subr.bf16.mxu0 0
      %2168 = vmatpush1.bf16.xpose.msra.mxu0 0
      %2169 = vmatprep.subr.bf16.mxu0 0
      %2170 = vmatpush1.bf16.xpose.msra.mxu0 0
      %2171 = vmatprep.subr.bf16.mxu0 0
      %2172 = vmatpush1.bf16.xpose.msra.mxu0 0
      %2173 = vmatprep.subr.bf16.mxu0 0
      %2174 = vmatpush1.bf16.xpose.msra.mxu0 0
      %2175 = vmatprep.subr.bf16.mxu0 0
      %2176 = vmatpush1.bf16.xpose.msra.mxu0 0
      %2177 = vmatprep.subr.bf16.mxu0 0
      %2178 = vmatpush1.bf16.xpose.msra.mxu0 0
      %2179 = vmatprep.subr.bf16.mxu0 0
      %2180 = vmatpush1.bf16.xpose.msra.mxu0 0
      %2181 = vmatprep.subr.bf16.mxu0 0
      %2182 = vmatpush1.bf16.xpose.msra.mxu0 0
      %2183 = vmatprep.mubr.bf16.mxu0 0
      %2184 = vmatmul.mubr.bf16.gmra.mrb[0].mxu0 %v2149
      %v2185 = vpop.f32.mrb[0].mxu0
      %v2186 = vadd.f32 0.0, %v2185
      %v2187 = vpop.f32.mrb[0].mxu0
      %v2188 = vpop.f32.mrb[0].mxu0
      %v2189 = vpop.f32.mrb[0].mxu0
      %2190 = vdwg.mxu0
      %v2191 = vpack.i.b16 %v2003, %v2003
      %v2192 = vlaneseq
      %v2193 = vshrl.u32 %v2192, 7
      %v2194 = vsub.s32 0, %v2193
      %v2195 = vrot.slane %v2191, %v2194
      %2197 = vmatprep.subr.bf16.mxu0 0
      %2198 = vmatpush1.bf16.xpose.msra.mxu0 %v1864
      %2199 = vmatprep.subr.bf16.mxu0 0
      %2200 = vmatpush1.bf16.xpose.msra.mxu0 0
      %2201 = vmatprep.subr.bf16.mxu0 0
      %2202 = vmatpush1.bf16.xpose.msra.mxu0 0
      %2203 = vmatprep.subr.bf16.mxu0 0
      %2204 = vmatpush1.bf16.xpose.msra.mxu0 0
      %2205 = vmatprep.subr.bf16.mxu0 0
      %2206 = vmatpush1.bf16.xpose.msra.mxu0 0
      %2207 = vmatprep.subr.bf16.mxu0 0
      %2208 = vmatpush1.bf16.xpose.msra.mxu0 0
      %2209 = vmatprep.subr.bf16.mxu0 0
      %2210 = vmatpush1.bf16.xpose.msra.mxu0 0
      %2211 = vmatprep.subr.bf16.mxu0 0
      %2212 = vmatpush1.bf16.xpose.msra.mxu0 0
      %2213 = vmatprep.subr.bf16.mxu0 0
      %2214 = vmatpush1.bf16.xpose.msra.mxu0 0
      %2215 = vmatprep.subr.bf16.mxu0 0
      %2216 = vmatpush1.bf16.xpose.msra.mxu0 0
      %2217 = vmatprep.subr.bf16.mxu0 0
      %2218 = vmatpush1.bf16.xpose.msra.mxu0 0
      %2219 = vmatprep.subr.bf16.mxu0 0
      %2220 = vmatpush1.bf16.xpose.msra.mxu0 0
      %2221 = vmatprep.subr.bf16.mxu0 0
      %2222 = vmatpush1.bf16.xpose.msra.mxu0 0
      %2223 = vmatprep.subr.bf16.mxu0 0
      %2224 = vmatpush1.bf16.xpose.msra.mxu0 0
      %2225 = vmatprep.subr.bf16.mxu0 0
      %2226 = vmatpush1.bf16.xpose.msra.mxu0 0
      %2227 = vmatprep.subr.bf16.mxu0 0
      %2228 = vmatpush1.bf16.xpose.msra.mxu0 0
      %2229 = vmatprep.mubr.bf16.mxu0 0
      %2230 = vmatmul.mubr.bf16.gmra.mrb[0].mxu0 %v2195
      %v2231 = vpop.f32.mrb[0].mxu0
      %v2232 = vadd.f32 0.0, %v2231
      %v2233 = vpop.f32.mrb[0].mxu0
      %v2234 = vpop.f32.mrb[0].mxu0
      %v2235 = vpop.f32.mrb[0].mxu0
      %2236 = vdwg.mxu0
      %v2237 = vpack.i.b16 %v2004, %v2004
      %v2238 = vlaneseq
      %v2239 = vshrl.u32 %v2238, 7
      %v2240 = vsub.s32 0, %v2239
      %v2241 = vrot.slane %v2237, %v2240
      %2243 = vmatprep.subr.bf16.mxu0 0
      %2244 = vmatpush1.bf16.xpose.msra.mxu0 %v1865
      %2245 = vmatprep.subr.bf16.mxu0 0
      %2246 = vmatpush1.bf16.xpose.msra.mxu0 0
      %2247 = vmatprep.subr.bf16.mxu0 0
      %2248 = vmatpush1.bf16.xpose.msra.mxu0 0
      %2249 = vmatprep.subr.bf16.mxu0 0
      %2250 = vmatpush1.bf16.xpose.msra.mxu0 0
      %2251 = vmatprep.subr.bf16.mxu0 0
      %2252 = vmatpush1.bf16.xpose.msra.mxu0 0
      %2253 = vmatprep.subr.bf16.mxu0 0
      %2254 = vmatpush1.bf16.xpose.msra.mxu0 0
      %2255 = vmatprep.subr.bf16.mxu0 0
      %2256 = vmatpush1.bf16.xpose.msra.mxu0 0
      %2257 = vmatprep.subr.bf16.mxu0 0
      %2258 = vmatpush1.bf16.xpose.msra.mxu0 0
      %2259 = vmatprep.subr.bf16.mxu0 0
      %2260 = vmatpush1.bf16.xpose.msra.mxu0 0
      %2261 = vmatprep.subr.bf16.mxu0 0
      %2262 = vmatpush1.bf16.xpose.msra.mxu0 0
      %2263 = vmatprep.subr.bf16.mxu0 0
      %2264 = vmatpush1.bf16.xpose.msra.mxu0 0
      %2265 = vmatprep.subr.bf16.mxu0 0
      %2266 = vmatpush1.bf16.xpose.msra.mxu0 0
      %2267 = vmatprep.subr.bf16.mxu0 0
      %2268 = vmatpush1.bf16.xpose.msra.mxu0 0
      %2269 = vmatprep.subr.bf16.mxu0 0
      %2270 = vmatpush1.bf16.xpose.msra.mxu0 0
      %2271 = vmatprep.subr.bf16.mxu0 0
      %2272 = vmatpush1.bf16.xpose.msra.mxu0 0
      %2273 = vmatprep.subr.bf16.mxu0 0
      %2274 = vmatpush1.bf16.xpose.msra.mxu0 0
      %2275 = vmatprep.mubr.bf16.mxu0 0
      %2276 = vmatmul.mubr.bf16.gmra.mrb[0].mxu0 %v2241
      %v2277 = vpop.f32.mrb[0].mxu0
      %v2278 = vadd.f32 0.0, %v2277
      %v2279 = vpop.f32.mrb[0].mxu0
      %v2280 = vpop.f32.mrb[0].mxu0
      %v2281 = vpop.f32.mrb[0].mxu0
      %2282 = vdwg.mxu0
      %v2283 = vpack.i.b16 %v2005, %v2005
      %v2284 = vlaneseq
      %v2285 = vshrl.u32 %v2284, 7
      %v2286 = vsub.s32 0, %v2285
      %v2287 = vrot.slane %v2283, %v2286
      %2289 = vmatprep.subr.bf16.mxu0 0
      %2290 = vmatpush1.bf16.xpose.msra.mxu0 %v1866
      %2291 = vmatprep.subr.bf16.mxu0 0
      %2292 = vmatpush1.bf16.xpose.msra.mxu0 0
      %2293 = vmatprep.subr.bf16.mxu0 0
      %2294 = vmatpush1.bf16.xpose.msra.mxu0 0
      %2295 = vmatprep.subr.bf16.mxu0 0
      %2296 = vmatpush1.bf16.xpose.msra.mxu0 0
      %2297 = vmatprep.subr.bf16.mxu0 0
      %2298 = vmatpush1.bf16.xpose.msra.mxu0 0
      %2299 = vmatprep.subr.bf16.mxu0 0
      %2300 = vmatpush1.bf16.xpose.msra.mxu0 0
      %2301 = vmatprep.subr.bf16.mxu0 0
      %2302 = vmatpush1.bf16.xpose.msra.mxu0 0
      %2303 = vmatprep.subr.bf16.mxu0 0
      %2304 = vmatpush1.bf16.xpose.msra.mxu0 0
      %2305 = vmatprep.subr.bf16.mxu0 0
      %2306 = vmatpush1.bf16.xpose.msra.mxu0 0
      %2307 = vmatprep.subr.bf16.mxu0 0
      %2308 = vmatpush1.bf16.xpose.msra.mxu0 0
      %2309 = vmatprep.subr.bf16.mxu0 0
      %2310 = vmatpush1.bf16.xpose.msra.mxu0 0
      %2311 = vmatprep.subr.bf16.mxu0 0
      %2312 = vmatpush1.bf16.xpose.msra.mxu0 0
      %2313 = vmatprep.subr.bf16.mxu0 0
      %2314 = vmatpush1.bf16.xpose.msra.mxu0 0
      %2315 = vmatprep.subr.bf16.mxu0 0
      %2316 = vmatpush1.bf16.xpose.msra.mxu0 0
      %2317 = vmatprep.subr.bf16.mxu0 0
      %2318 = vmatpush1.bf16.xpose.msra.mxu0 0
      %2319 = vmatprep.subr.bf16.mxu0 0
      %2320 = vmatpush1.bf16.xpose.msra.mxu0 0
      %2321 = vmatprep.mubr.bf16.mxu0 0
      %2322 = vmatmul.mubr.bf16.gmra.mrb[0].mxu0 %v2287
      %v2323 = vpop.f32.mrb[0].mxu0
      %v2324 = vadd.f32 0.0, %v2323
      %v2325 = vpop.f32.mrb[0].mxu0
      %v2326 = vpop.f32.mrb[0].mxu0
      %v2327 = vpop.f32.mrb[0].mxu0
      %2328 = vdwg.mxu0
      %v2329 = vpack.i.b16 %v2006, %v2006
      %v2330 = vlaneseq
      %v2331 = vshrl.u32 %v2330, 7
      %v2332 = vsub.s32 0, %v2331
      %v2333 = vrot.slane %v2329, %v2332
      %2335 = vmatprep.subr.bf16.mxu0 0
      %2336 = vmatpush1.bf16.xpose.msra.mxu0 %v1867
      %2337 = vmatprep.subr.bf16.mxu0 0
      %2338 = vmatpush1.bf16.xpose.msra.mxu0 0
      %2339 = vmatprep.subr.bf16.mxu0 0
      %2340 = vmatpush1.bf16.xpose.msra.mxu0 0
      %2341 = vmatprep.subr.bf16.mxu0 0
      %2342 = vmatpush1.bf16.xpose.msra.mxu0 0
      %2343 = vmatprep.subr.bf16.mxu0 0
      %2344 = vmatpush1.bf16.xpose.msra.mxu0 0
      %2345 = vmatprep.subr.bf16.mxu0 0
      %2346 = vmatpush1.bf16.xpose.msra.mxu0 0
      %2347 = vmatprep.subr.bf16.mxu0 0
      %2348 = vmatpush1.bf16.xpose.msra.mxu0 0
      %2349 = vmatprep.subr.bf16.mxu0 0
      %2350 = vmatpush1.bf16.xpose.msra.mxu0 0
      %2351 = vmatprep.subr.bf16.mxu0 0
      %2352 = vmatpush1.bf16.xpose.msra.mxu0 0
      %2353 = vmatprep.subr.bf16.mxu0 0
      %2354 = vmatpush1.bf16.xpose.msra.mxu0 0
      %2355 = vmatprep.subr.bf16.mxu0 0
      %2356 = vmatpush1.bf16.xpose.msra.mxu0 0
      %2357 = vmatprep.subr.bf16.mxu0 0
      %2358 = vmatpush1.bf16.xpose.msra.mxu0 0
      %2359 = vmatprep.subr.bf16.mxu0 0
      %2360 = vmatpush1.bf16.xpose.msra.mxu0 0
      %2361 = vmatprep.subr.bf16.mxu0 0
      %2362 = vmatpush1.bf16.xpose.msra.mxu0 0
      %2363 = vmatprep.subr.bf16.mxu0 0
      %2364 = vmatpush1.bf16.xpose.msra.mxu0 0
      %2365 = vmatprep.subr.bf16.mxu0 0
      %2366 = vmatpush1.bf16.xpose.msra.mxu0 0
      %2367 = vmatprep.mubr.bf16.mxu0 0
      %2368 = vmatmul.mubr.bf16.gmra.mrb[0].mxu0 %v2333
      %v2369 = vpop.f32.mrb[0].mxu0
      %v2370 = vadd.f32 0.0, %v2369
      %v2371 = vpop.f32.mrb[0].mxu0
      %v2372 = vpop.f32.mrb[0].mxu0
      %v2373 = vpop.f32.mrb[0].mxu0
      %2374 = vdwg.mxu0
      %vm2375 = vcmask 57344
      %v2376 = vsel %vm2375, %v2048, -inf
      %2377 = vmax.xlane.f32.xlu0 %v2376
      %v2378 = vpop.xlane.xlu0 %2377
      %v2379 = vsel %vm2375, %v2094, -inf
      %2380 = vmax.xlane.f32.xlu0 %v2379
      %v2381 = vpop.xlane.xlu0 %2380
      %v2382 = vsel %vm2375, %v2140, -inf
      %2383 = vmax.xlane.f32.xlu0 %v2382
      %v2384 = vpop.xlane.xlu0 %2383
      %v2385 = vsel %vm2375, %v2186, -inf
      %2386 = vmax.xlane.f32.xlu0 %v2385
      %v2387 = vpop.xlane.xlu0 %2386
      %v2388 = vsel %vm2375, %v2232, -inf
      %2389 = vmax.xlane.f32.xlu0 %v2388
      %v2390 = vpop.xlane.xlu0 %2389
      %v2391 = vsel %vm2375, %v2278, -inf
      %2392 = vmax.xlane.f32.xlu0 %v2391
      %v2393 = vpop.xlane.xlu0 %2392
      %v2394 = vsel %vm2375, %v2324, -inf
      %2395 = vmax.xlane.f32.xlu0 %v2394
      %v2396 = vpop.xlane.xlu0 %2395
      %v2397 = vsel %vm2375, %v2370, -inf
      %2398 = vmax.xlane.f32.xlu0 %v2397
      %v2399 = vpop.xlane.xlu0 %2398
      %v2400 = vsub.f32 %v2048, %v2378
      %v2401 = vsub.f32 %v2094, %v2381
      %v2402 = vsub.f32 %v2140, %v2384
      %v2403 = vsub.f32 %v2186, %v2387
      %v2404 = vsub.f32 %v2232, %v2390
      %v2405 = vsub.f32 %v2278, %v2393
      %v2406 = vsub.f32 %v2324, %v2396
      %v2407 = vsub.f32 %v2370, %v2399
      %v2408 = vmul.f32 %v2400, 1.442695
      %v2409 = vpow.pop %v2408
      %v2410 = vmul.f32 %v2401, 1.442695
      %v2411 = vpow.pop %v2410
      %v2412 = vmul.f32 %v2402, 1.442695
      %v2413 = vpow.pop %v2412
      %v2414 = vmul.f32 %v2403, 1.442695
      %v2415 = vpow.pop %v2414
      %v2416 = vmul.f32 %v2404, 1.442695
      %v2417 = vpow.pop %v2416
      %v2418 = vmul.f32 %v2405, 1.442695
      %v2419 = vpow.pop %v2418
      %v2420 = vmul.f32 %v2406, 1.442695
      %v2421 = vpow.pop %v2420
      %v2422 = vmul.f32 %v2407, 1.442695
      %v2423 = vpow.pop %v2422
      %v2424 = vsel %vm2375, %v2409, 0.0
      %2425 = vadd.xlane.f32.xlu0 %v2424
      %v2426 = vpop.xlane.xlu0 %2425
      %v2427 = vsel %vm2375, %v2411, 0.0
      %2428 = vadd.xlane.f32.xlu0 %v2427
      %v2429 = vpop.xlane.xlu0 %2428
      %v2430 = vsel %vm2375, %v2413, 0.0
      %2431 = vadd.xlane.f32.xlu0 %v2430
      %v2432 = vpop.xlane.xlu0 %2431
      %v2433 = vsel %vm2375, %v2415, 0.0
      %2434 = vadd.xlane.f32.xlu0 %v2433
      %v2435 = vpop.xlane.xlu0 %2434
      %v2436 = vsel %vm2375, %v2417, 0.0
      %2437 = vadd.xlane.f32.xlu0 %v2436
      %v2438 = vpop.xlane.xlu0 %2437
      %v2439 = vsel %vm2375, %v2419, 0.0
      %2440 = vadd.xlane.f32.xlu0 %v2439
      %v2441 = vpop.xlane.xlu0 %2440
      %v2442 = vsel %vm2375, %v2421, 0.0
      %2443 = vadd.xlane.f32.xlu0 %v2442
      %v2444 = vpop.xlane.xlu0 %2443
      %v2445 = vsel %vm2375, %v2423, 0.0
      %2446 = vadd.xlane.f32.xlu0 %v2445
      %v2447 = vpop.xlane.xlu0 %2446
      %v2448 = vrcp.pop %v2426
      %v2449 = vmul.f32 %v2409, %v2448
      %v2450 = vrcp.pop %v2429
      %v2451 = vmul.f32 %v2411, %v2450
      %v2452 = vrcp.pop %v2432
      %v2453 = vmul.f32 %v2413, %v2452
      %v2454 = vrcp.pop %v2435
      %v2455 = vmul.f32 %v2415, %v2454
      %v2456 = vrcp.pop %v2438
      %v2457 = vmul.f32 %v2417, %v2456
      %v2458 = vrcp.pop %v2441
      %v2459 = vmul.f32 %v2419, %v2458
      %v2460 = vrcp.pop %v2444
      %v2461 = vmul.f32 %v2421, %v2460
      %v2462 = vrcp.pop %v2447
      %v2463 = vmul.f32 %v2423, %v2462
      %v2464 = vpack.c.bf16 %v2449, %v2449
      %v2465 = vpack.c.bf16 %v2451, %v2451
      %v2466 = vpack.c.bf16 %v2453, %v2453
      %v2467 = vpack.c.bf16 %v2455, %v2455
      %v2468 = vpack.c.bf16 %v2457, %v2457
      %v2469 = vpack.c.bf16 %v2459, %v2459
      %v2470 = vpack.c.bf16 %v2461, %v2461
      %v2471 = vpack.c.bf16 %v2463, %v2463
      %vm2472 = vcmask 64512
      %v2474 = vsel %vm2472, %v2464, 0
      %vm2476 = vcmask 1043456
      %v2478 = vsel %vm2476, %v1860, 0
      %2480 = vmatprep.subr.bf16.mxu0 0
      %2481 = vmatpush1.bf16.msra.mxu0 %v2478
      %2482 = vmatprep.subr.bf16.mxu0 0
      %2483 = vmatpush1.bf16.msra.mxu0 0
      %2484 = vmatprep.subr.bf16.mxu0 0
      %2485 = vmatpush1.bf16.msra.mxu0 0
      %2486 = vmatprep.subr.bf16.mxu0 0
      %2487 = vmatpush1.bf16.msra.mxu0 0
      %2488 = vmatprep.subr.bf16.mxu0 0
      %2489 = vmatpush1.bf16.msra.mxu0 0
      %2490 = vmatprep.subr.bf16.mxu0 0
      %2491 = vmatpush1.bf16.msra.mxu0 0
      %2492 = vmatprep.subr.bf16.mxu0 0
      %2493 = vmatpush1.bf16.msra.mxu0 0
      %2494 = vmatprep.subr.bf16.mxu0 0
      %2495 = vmatpush1.bf16.msra.mxu0 0
      %2496 = vmatprep.subr.bf16.mxu0 0
      %2497 = vmatpush1.bf16.msra.mxu0 0
      %2498 = vmatprep.subr.bf16.mxu0 0
      %2499 = vmatpush1.bf16.msra.mxu0 0
      %2500 = vmatprep.subr.bf16.mxu0 0
      %2501 = vmatpush1.bf16.msra.mxu0 0
      %2502 = vmatprep.subr.bf16.mxu0 0
      %2503 = vmatpush1.bf16.msra.mxu0 0
      %2504 = vmatprep.subr.bf16.mxu0 0
      %2505 = vmatpush1.bf16.msra.mxu0 0
      %2506 = vmatprep.subr.bf16.mxu0 0
      %2507 = vmatpush1.bf16.msra.mxu0 0
      %2508 = vmatprep.subr.bf16.mxu0 0
      %2509 = vmatpush1.bf16.msra.mxu0 0
      %2510 = vmatprep.subr.bf16.mxu0 0
      %2511 = vmatpush1.bf16.msra.mxu0 0
      %2512 = vmatprep.mubr.bf16.mxu0 0
      %2513 = vmatmul.mubr.bf16.gmra.mrb[0].mxu0 %v2474
      %v2514 = vpop.f32.mrb[0].mxu0
      %v2515 = vadd.f32 0.0, %v2514
      %v2516 = vpop.f32.mrb[0].mxu0
      %v2517 = vpop.f32.mrb[0].mxu0
      %v2518 = vpop.f32.mrb[0].mxu0
      %2519 = vdwg.mxu0
      %v2521 = vsel %vm2472, %v2465, 0
      %v2524 = vsel %vm2476, %v1861, 0
      %2526 = vmatprep.subr.bf16.mxu0 0
      %2527 = vmatpush1.bf16.msra.mxu0 %v2524
      %2528 = vmatprep.subr.bf16.mxu0 0
      %2529 = vmatpush1.bf16.msra.mxu0 0
      %2530 = vmatprep.subr.bf16.mxu0 0
      %2531 = vmatpush1.bf16.msra.mxu0 0
      %2532 = vmatprep.subr.bf16.mxu0 0
      %2533 = vmatpush1.bf16.msra.mxu0 0
      %2534 = vmatprep.subr.bf16.mxu0 0
      %2535 = vmatpush1.bf16.msra.mxu0 0
      %2536 = vmatprep.subr.bf16.mxu0 0
      %2537 = vmatpush1.bf16.msra.mxu0 0
      %2538 = vmatprep.subr.bf16.mxu0 0
      %2539 = vmatpush1.bf16.msra.mxu0 0
      %2540 = vmatprep.subr.bf16.mxu0 0
      %2541 = vmatpush1.bf16.msra.mxu0 0
      %2542 = vmatprep.subr.bf16.mxu0 0
      %2543 = vmatpush1.bf16.msra.mxu0 0
      %2544 = vmatprep.subr.bf16.mxu0 0
      %2545 = vmatpush1.bf16.msra.mxu0 0
      %2546 = vmatprep.subr.bf16.mxu0 0
      %2547 = vmatpush1.bf16.msra.mxu0 0
      %2548 = vmatprep.subr.bf16.mxu0 0
      %2549 = vmatpush1.bf16.msra.mxu0 0
      %2550 = vmatprep.subr.bf16.mxu0 0
      %2551 = vmatpush1.bf16.msra.mxu0 0
      %2552 = vmatprep.subr.bf16.mxu0 0
      %2553 = vmatpush1.bf16.msra.mxu0 0
      %2554 = vmatprep.subr.bf16.mxu0 0
      %2555 = vmatpush1.bf16.msra.mxu0 0
      %2556 = vmatprep.subr.bf16.mxu0 0
      %2557 = vmatpush1.bf16.msra.mxu0 0
      %2558 = vmatprep.mubr.bf16.mxu0 0
      %2559 = vmatmul.mubr.bf16.gmra.mrb[0].mxu0 %v2521
      %v2560 = vpop.f32.mrb[0].mxu0
      %v2561 = vadd.f32 0.0, %v2560
      %v2562 = vpop.f32.mrb[0].mxu0
      %v2563 = vpop.f32.mrb[0].mxu0
      %v2564 = vpop.f32.mrb[0].mxu0
      %2565 = vdwg.mxu0
      %v2567 = vsel %vm2472, %v2466, 0
      %v2570 = vsel %vm2476, %v1862, 0
      %2572 = vmatprep.subr.bf16.mxu0 0
      %2573 = vmatpush1.bf16.msra.mxu0 %v2570
      %2574 = vmatprep.subr.bf16.mxu0 0
      %2575 = vmatpush1.bf16.msra.mxu0 0
      %2576 = vmatprep.subr.bf16.mxu0 0
      %2577 = vmatpush1.bf16.msra.mxu0 0
      %2578 = vmatprep.subr.bf16.mxu0 0
      %2579 = vmatpush1.bf16.msra.mxu0 0
      %2580 = vmatprep.subr.bf16.mxu0 0
      %2581 = vmatpush1.bf16.msra.mxu0 0
      %2582 = vmatprep.subr.bf16.mxu0 0
      %2583 = vmatpush1.bf16.msra.mxu0 0
      %2584 = vmatprep.subr.bf16.mxu0 0
      %2585 = vmatpush1.bf16.msra.mxu0 0
      %2586 = vmatprep.subr.bf16.mxu0 0
      %2587 = vmatpush1.bf16.msra.mxu0 0
      %2588 = vmatprep.subr.bf16.mxu0 0
      %2589 = vmatpush1.bf16.msra.mxu0 0
      %2590 = vmatprep.subr.bf16.mxu0 0
      %2591 = vmatpush1.bf16.msra.mxu0 0
      %2592 = vmatprep.subr.bf16.mxu0 0
      %2593 = vmatpush1.bf16.msra.mxu0 0
      %2594 = vmatprep.subr.bf16.mxu0 0
      %2595 = vmatpush1.bf16.msra.mxu0 0
      %2596 = vmatprep.subr.bf16.mxu0 0
      %2597 = vmatpush1.bf16.msra.mxu0 0
      %2598 = vmatprep.subr.bf16.mxu0 0
      %2599 = vmatpush1.bf16.msra.mxu0 0
      %2600 = vmatprep.subr.bf16.mxu0 0
      %2601 = vmatpush1.bf16.msra.mxu0 0
      %2602 = vmatprep.subr.bf16.mxu0 0
      %2603 = vmatpush1.bf16.msra.mxu0 0
      %2604 = vmatprep.mubr.bf16.mxu0 0
      %2605 = vmatmul.mubr.bf16.gmra.mrb[0].mxu0 %v2567
      %v2606 = vpop.f32.mrb[0].mxu0
      %v2607 = vadd.f32 0.0, %v2606
      %v2608 = vpop.f32.mrb[0].mxu0
      %v2609 = vpop.f32.mrb[0].mxu0
      %v2610 = vpop.f32.mrb[0].mxu0
      %2611 = vdwg.mxu0
      %v2613 = vsel %vm2472, %v2467, 0
      %v2616 = vsel %vm2476, %v1863, 0
      %2618 = vmatprep.subr.bf16.mxu0 0
      %2619 = vmatpush1.bf16.msra.mxu0 %v2616
      %2620 = vmatprep.subr.bf16.mxu0 0
      %2621 = vmatpush1.bf16.msra.mxu0 0
      %2622 = vmatprep.subr.bf16.mxu0 0
      %2623 = vmatpush1.bf16.msra.mxu0 0
      %2624 = vmatprep.subr.bf16.mxu0 0
      %2625 = vmatpush1.bf16.msra.mxu0 0
      %2626 = vmatprep.subr.bf16.mxu0 0
      %2627 = vmatpush1.bf16.msra.mxu0 0
      %2628 = vmatprep.subr.bf16.mxu0 0
      %2629 = vmatpush1.bf16.msra.mxu0 0
      %2630 = vmatprep.subr.bf16.mxu0 0
      %2631 = vmatpush1.bf16.msra.mxu0 0
      %2632 = vmatprep.subr.bf16.mxu0 0
      %2633 = vmatpush1.bf16.msra.mxu0 0
      %2634 = vmatprep.subr.bf16.mxu0 0
      %2635 = vmatpush1.bf16.msra.mxu0 0
      %2636 = vmatprep.subr.bf16.mxu0 0
      %2637 = vmatpush1.bf16.msra.mxu0 0
      %2638 = vmatprep.subr.bf16.mxu0 0
      %2639 = vmatpush1.bf16.msra.mxu0 0
      %2640 = vmatprep.subr.bf16.mxu0 0
      %2641 = vmatpush1.bf16.msra.mxu0 0
      %2642 = vmatprep.subr.bf16.mxu0 0
      %2643 = vmatpush1.bf16.msra.mxu0 0
      %2644 = vmatprep.subr.bf16.mxu0 0
      %2645 = vmatpush1.bf16.msra.mxu0 0
      %2646 = vmatprep.subr.bf16.mxu0 0
      %2647 = vmatpush1.bf16.msra.mxu0 0
      %2648 = vmatprep.subr.bf16.mxu0 0
      %2649 = vmatpush1.bf16.msra.mxu0 0
      %2650 = vmatprep.mubr.bf16.mxu0 0
      %2651 = vmatmul.mubr.bf16.gmra.mrb[0].mxu0 %v2613
      %v2652 = vpop.f32.mrb[0].mxu0
      %v2653 = vadd.f32 0.0, %v2652
      %v2654 = vpop.f32.mrb[0].mxu0
      %v2655 = vpop.f32.mrb[0].mxu0
      %v2656 = vpop.f32.mrb[0].mxu0
      %2657 = vdwg.mxu0
      %v2659 = vsel %vm2472, %v2468, 0
      %v2662 = vsel %vm2476, %v1864, 0
      %2664 = vmatprep.subr.bf16.mxu0 0
      %2665 = vmatpush1.bf16.msra.mxu0 %v2662
      %2666 = vmatprep.subr.bf16.mxu0 0
      %2667 = vmatpush1.bf16.msra.mxu0 0
      %2668 = vmatprep.subr.bf16.mxu0 0
      %2669 = vmatpush1.bf16.msra.mxu0 0
      %2670 = vmatprep.subr.bf16.mxu0 0
      %2671 = vmatpush1.bf16.msra.mxu0 0
      %2672 = vmatprep.subr.bf16.mxu0 0
      %2673 = vmatpush1.bf16.msra.mxu0 0
      %2674 = vmatprep.subr.bf16.mxu0 0
      %2675 = vmatpush1.bf16.msra.mxu0 0
      %2676 = vmatprep.subr.bf16.mxu0 0
      %2677 = vmatpush1.bf16.msra.mxu0 0
      %2678 = vmatprep.subr.bf16.mxu0 0
      %2679 = vmatpush1.bf16.msra.mxu0 0
      %2680 = vmatprep.subr.bf16.mxu0 0
      %2681 = vmatpush1.bf16.msra.mxu0 0
      %2682 = vmatprep.subr.bf16.mxu0 0
      %2683 = vmatpush1.bf16.msra.mxu0 0
      %2684 = vmatprep.subr.bf16.mxu0 0
      %2685 = vmatpush1.bf16.msra.mxu0 0
      %2686 = vmatprep.subr.bf16.mxu0 0
      %2687 = vmatpush1.bf16.msra.mxu0 0
      %2688 = vmatprep.subr.bf16.mxu0 0
      %2689 = vmatpush1.bf16.msra.mxu0 0
      %2690 = vmatprep.subr.bf16.mxu0 0
      %2691 = vmatpush1.bf16.msra.mxu0 0
      %2692 = vmatprep.subr.bf16.mxu0 0
      %2693 = vmatpush1.bf16.msra.mxu0 0
      %2694 = vmatprep.subr.bf16.mxu0 0
      %2695 = vmatpush1.bf16.msra.mxu0 0
      %2696 = vmatprep.mubr.bf16.mxu0 0
      %2697 = vmatmul.mubr.bf16.gmra.mrb[0].mxu0 %v2659
      %v2698 = vpop.f32.mrb[0].mxu0
      %v2699 = vadd.f32 0.0, %v2698
      %v2700 = vpop.f32.mrb[0].mxu0
      %v2701 = vpop.f32.mrb[0].mxu0
      %v2702 = vpop.f32.mrb[0].mxu0
      %2703 = vdwg.mxu0
      %v2705 = vsel %vm2472, %v2469, 0
      %v2708 = vsel %vm2476, %v1865, 0
      %2710 = vmatprep.subr.bf16.mxu0 0
      %2711 = vmatpush1.bf16.msra.mxu0 %v2708
      %2712 = vmatprep.subr.bf16.mxu0 0
      %2713 = vmatpush1.bf16.msra.mxu0 0
      %2714 = vmatprep.subr.bf16.mxu0 0
      %2715 = vmatpush1.bf16.msra.mxu0 0
      %2716 = vmatprep.subr.bf16.mxu0 0
      %2717 = vmatpush1.bf16.msra.mxu0 0
      %2718 = vmatprep.subr.bf16.mxu0 0
      %2719 = vmatpush1.bf16.msra.mxu0 0
      %2720 = vmatprep.subr.bf16.mxu0 0
      %2721 = vmatpush1.bf16.msra.mxu0 0
      %2722 = vmatprep.subr.bf16.mxu0 0
      %2723 = vmatpush1.bf16.msra.mxu0 0
      %2724 = vmatprep.subr.bf16.mxu0 0
      %2725 = vmatpush1.bf16.msra.mxu0 0
      %2726 = vmatprep.subr.bf16.mxu0 0
      %2727 = vmatpush1.bf16.msra.mxu0 0
      %2728 = vmatprep.subr.bf16.mxu0 0
      %2729 = vmatpush1.bf16.msra.mxu0 0
      %2730 = vmatprep.subr.bf16.mxu0 0
      %2731 = vmatpush1.bf16.msra.mxu0 0
      %2732 = vmatprep.subr.bf16.mxu0 0
      %2733 = vmatpush1.bf16.msra.mxu0 0
      %2734 = vmatprep.subr.bf16.mxu0 0
      %2735 = vmatpush1.bf16.msra.mxu0 0
      %2736 = vmatprep.subr.bf16.mxu0 0
      %2737 = vmatpush1.bf16.msra.mxu0 0
      %2738 = vmatprep.subr.bf16.mxu0 0
      %2739 = vmatpush1.bf16.msra.mxu0 0
      %2740 = vmatprep.subr.bf16.mxu0 0
      %2741 = vmatpush1.bf16.msra.mxu0 0
      %2742 = vmatprep.mubr.bf16.mxu0 0
      %2743 = vmatmul.mubr.bf16.gmra.mrb[0].mxu0 %v2705
      %v2744 = vpop.f32.mrb[0].mxu0
      %v2745 = vadd.f32 0.0, %v2744
      %v2746 = vpop.f32.mrb[0].mxu0
      %v2747 = vpop.f32.mrb[0].mxu0
      %v2748 = vpop.f32.mrb[0].mxu0
      %2749 = vdwg.mxu0
      %v2751 = vsel %vm2472, %v2470, 0
      %v2754 = vsel %vm2476, %v1866, 0
      %2756 = vmatprep.subr.bf16.mxu0 0
      %2757 = vmatpush1.bf16.msra.mxu0 %v2754
      %2758 = vmatprep.subr.bf16.mxu0 0
      %2759 = vmatpush1.bf16.msra.mxu0 0
      %2760 = vmatprep.subr.bf16.mxu0 0
      %2761 = vmatpush1.bf16.msra.mxu0 0
      %2762 = vmatprep.subr.bf16.mxu0 0
      %2763 = vmatpush1.bf16.msra.mxu0 0
      %2764 = vmatprep.subr.bf16.mxu0 0
      %2765 = vmatpush1.bf16.msra.mxu0 0
      %2766 = vmatprep.subr.bf16.mxu0 0
      %2767 = vmatpush1.bf16.msra.mxu0 0
      %2768 = vmatprep.subr.bf16.mxu0 0
      %2769 = vmatpush1.bf16.msra.mxu0 0
      %2770 = vmatprep.subr.bf16.mxu0 0
      %2771 = vmatpush1.bf16.msra.mxu0 0
      %2772 = vmatprep.subr.bf16.mxu0 0
      %2773 = vmatpush1.bf16.msra.mxu0 0
      %2774 = vmatprep.subr.bf16.mxu0 0
      %2775 = vmatpush1.bf16.msra.mxu0 0
      %2776 = vmatprep.subr.bf16.mxu0 0
      %2777 = vmatpush1.bf16.msra.mxu0 0
      %2778 = vmatprep.subr.bf16.mxu0 0
      %2779 = vmatpush1.bf16.msra.mxu0 0
      %2780 = vmatprep.subr.bf16.mxu0 0
      %2781 = vmatpush1.bf16.msra.mxu0 0
      %2782 = vmatprep.subr.bf16.mxu0 0
      %2783 = vmatpush1.bf16.msra.mxu0 0
      %2784 = vmatprep.subr.bf16.mxu0 0
      %2785 = vmatpush1.bf16.msra.mxu0 0
      %2786 = vmatprep.subr.bf16.mxu0 0
      %2787 = vmatpush1.bf16.msra.mxu0 0
      %2788 = vmatprep.mubr.bf16.mxu0 0
      %2789 = vmatmul.mubr.bf16.gmra.mrb[0].mxu0 %v2751
      %v2790 = vpop.f32.mrb[0].mxu0
      %v2791 = vadd.f32 0.0, %v2790
      %v2792 = vpop.f32.mrb[0].mxu0
      %v2793 = vpop.f32.mrb[0].mxu0
      %v2794 = vpop.f32.mrb[0].mxu0
      %2795 = vdwg.mxu0
      %v2797 = vsel %vm2472, %v2471, 0
      %v2800 = vsel %vm2476, %v1867, 0
      %2802 = vmatprep.subr.bf16.mxu0 0
      %2803 = vmatpush1.bf16.msra.mxu0 %v2800
      %2804 = vmatprep.subr.bf16.mxu0 0
      %2805 = vmatpush1.bf16.msra.mxu0 0
      %2806 = vmatprep.subr.bf16.mxu0 0
      %2807 = vmatpush1.bf16.msra.mxu0 0
      %2808 = vmatprep.subr.bf16.mxu0 0
      %2809 = vmatpush1.bf16.msra.mxu0 0
      %2810 = vmatprep.subr.bf16.mxu0 0
      %2811 = vmatpush1.bf16.msra.mxu0 0
      %2812 = vmatprep.subr.bf16.mxu0 0
      %2813 = vmatpush1.bf16.msra.mxu0 0
      %2814 = vmatprep.subr.bf16.mxu0 0
      %2815 = vmatpush1.bf16.msra.mxu0 0
      %2816 = vmatprep.subr.bf16.mxu0 0
      %2817 = vmatpush1.bf16.msra.mxu0 0
      %2818 = vmatprep.subr.bf16.mxu0 0
      %2819 = vmatpush1.bf16.msra.mxu0 0
      %2820 = vmatprep.subr.bf16.mxu0 0
      %2821 = vmatpush1.bf16.msra.mxu0 0
      %2822 = vmatprep.subr.bf16.mxu0 0
      %2823 = vmatpush1.bf16.msra.mxu0 0
      %2824 = vmatprep.subr.bf16.mxu0 0
      %2825 = vmatpush1.bf16.msra.mxu0 0
      %2826 = vmatprep.subr.bf16.mxu0 0
      %2827 = vmatpush1.bf16.msra.mxu0 0
      %2828 = vmatprep.subr.bf16.mxu0 0
      %2829 = vmatpush1.bf16.msra.mxu0 0
      %2830 = vmatprep.subr.bf16.mxu0 0
      %2831 = vmatpush1.bf16.msra.mxu0 0
      %2832 = vmatprep.subr.bf16.mxu0 0
      %2833 = vmatpush1.bf16.msra.mxu0 0
      %2834 = vmatprep.mubr.bf16.mxu0 0
      %2835 = vmatmul.mubr.bf16.gmra.mrb[0].mxu0 %v2797
      %v2836 = vpop.f32.mrb[0].mxu0
      %v2837 = vadd.f32 0.0, %v2836
      %v2838 = vpop.f32.mrb[0].mxu0
      %v2839 = vpop.f32.mrb[0].mxu0
      %v2840 = vpop.f32.mrb[0].mxu0
      %2841 = vdwg.mxu0
      %v2850 = vrot.slane %v2561, 7
      %vm2851 = vcmask 1041409
      %v2852 = vsel %vm2851, %v2850, %v2515
      %v2853 = vrot.slane %v2607, 6
      %vm2854 = vcmask 1042434
      %v2855 = vsel %vm2854, %v2853, %v2852
      %v2856 = vrot.slane %v2653, 5
      %vm2857 = vcmask 1043459
      %v2858 = vsel %vm2857, %v2856, %v2855
      %v2859 = vrot.slane %v2699, 4
      %vm2860 = vcmask 1044484
      %v2861 = vsel %vm2860, %v2859, %v2858
      %v2862 = vrot.slane %v2745, 3
      %vm2863 = vcmask 1045509
      %v2864 = vsel %vm2863, %v2862, %v2861
      %v2865 = vrot.slane %v2791, 2
      %vm2866 = vcmask 1046534
      %v2867 = vsel %vm2866, %v2865, %v2864
      %v2868 = vrot.slane %v2837, 1
      %vm2869 = vcmask 1047559
      %v2870 = vsel %vm2869, %v2868, %v2867
      %v2872 = vpack.c.bf16 %v2870, %v2870
      %v2873 = vld [vmem:[#allocation19] sm:$0xf]
      %v2874 = vld [vmem:[#allocation19 + $0x4] sm:$0xf]
      %v2875 = vld [vmem:[#allocation19 + $0x8] sm:$0xf]
      %v2876 = vld [vmem:[#allocation19 + $0xc] sm:$0xf]
      %v2877 = vld [vmem:[#allocation19 + $0x10] sm:$0xf]
      %v2878 = vld [vmem:[#allocation19 + $0x14] sm:$0xf]
      %v2879 = vld [vmem:[#allocation19 + $0x18] sm:$0xf]
      %v2880 = vld [vmem:[#allocation19 + $0x1c] sm:$0xf]
      %v2881 = vld [vmem:[#allocation19 + $0x20] sm:$0xf]
      %v2882 = vld [vmem:[#allocation19 + $0x24] sm:$0xf]
      %v2883 = vld [vmem:[#allocation19 + $0x28] sm:$0xf]
      %v2884 = vld [vmem:[#allocation19 + $0x2c] sm:$0xf]
      %v2885 = vld [vmem:[#allocation19 + $0x30] sm:$0xf]
      %v2886 = vld [vmem:[#allocation19 + $0x34] sm:$0xf]
      %v2887 = vld [vmem:[#allocation19 + $0x38] sm:$0xf]
      %v2888 = vld [vmem:[#allocation19 + $0x3c] sm:$0xf]
      %v2889 = vld [vmem:[#allocation19 + $0x40] sm:$0xf]
      %v2890 = vld [vmem:[#allocation19 + $0x44] sm:$0xf]
      %v2891 = vld [vmem:[#allocation19 + $0x48] sm:$0xf]
      %v2892 = vld [vmem:[#allocation19 + $0x4c] sm:$0xf]
      %v2893 = vld [vmem:[#allocation19 + $0x50] sm:$0xf]
      %v2894 = vld [vmem:[#allocation19 + $0x54] sm:$0xf]
      %v2895 = vld [vmem:[#allocation19 + $0x58] sm:$0xf]
      %v2896 = vld [vmem:[#allocation19 + $0x5c] sm:$0xf]
      %v2897 = vld [vmem:[#allocation19 + $0x60] sm:$0xf]
      %v2898 = vld [vmem:[#allocation19 + $0x64] sm:$0xf]
      %v2899 = vld [vmem:[#allocation19 + $0x68] sm:$0xf]
      %v2900 = vld [vmem:[#allocation19 + $0x6c] sm:$0xf]
      %v2901 = vld [vmem:[#allocation19 + $0x70] sm:$0xf]
      %v2902 = vld [vmem:[#allocation19 + $0x74] sm:$0xf]
      %v2903 = vld [vmem:[#allocation19 + $0x78] sm:$0xf]
      %v2904 = vld [vmem:[#allocation19 + $0x7c] sm:$0xf]
      %v2905 = vld [vmem:[#allocation21] sm:$0x1]
      %v2907 = vlaneseq
      %v2908 = vshrl.u32 %v2907, 7
      %v2909 = vsub.s32 0, %v2908
      %v2910 = vrot.slane %v2905, %v2909
      %v2944 = vunpack.c.l.b16 %v2873
      %v2945 = vunpack.c.l.b16 %v2874
      %v2946 = vunpack.c.l.b16 %v2875
      %v2947 = vunpack.c.l.b16 %v2876
      %v2948 = vunpack.c.l.b16 %v2877
      %v2949 = vunpack.c.l.b16 %v2878
      %v2950 = vunpack.c.l.b16 %v2879
      %v2951 = vunpack.c.l.b16 %v2880
      %v2952 = vunpack.c.l.b16 %v2881
      %v2953 = vunpack.c.l.b16 %v2882
      %v2954 = vunpack.c.l.b16 %v2883
      %v2955 = vunpack.c.l.b16 %v2884
      %v2956 = vunpack.c.l.b16 %v2885
      %v2957 = vunpack.c.l.b16 %v2886
      %v2958 = vunpack.c.l.b16 %v2887
      %v2959 = vunpack.c.l.b16 %v2888
      %v2960 = vunpack.c.l.b16 %v2889
      %v2961 = vunpack.c.l.b16 %v2890
      %v2962 = vunpack.c.l.b16 %v2891
      %v2963 = vunpack.c.l.b16 %v2892
      %v2964 = vunpack.c.l.b16 %v2893
      %v2965 = vunpack.c.l.b16 %v2894
      %v2966 = vunpack.c.l.b16 %v2895
      %v2967 = vunpack.c.l.b16 %v2896
      %v2968 = vunpack.c.l.b16 %v2897
      %v2969 = vunpack.c.l.b16 %v2898
      %v2970 = vunpack.c.l.b16 %v2899
      %v2971 = vunpack.c.l.b16 %v2900
      %v2972 = vunpack.c.l.b16 %v2901
      %v2973 = vunpack.c.l.b16 %v2902
      %v2974 = vunpack.c.l.b16 %v2903
      %v2975 = vunpack.c.l.b16 %v2904
      %v2976 = vpack.c.b16 %v2945, %v2944
      %v2977 = vpack.c.b16 %v2947, %v2946
      %v2978 = vpack.c.b16 %v2949, %v2948
      %v2979 = vpack.c.b16 %v2951, %v2950
      %v2980 = vpack.c.b16 %v2953, %v2952
      %v2981 = vpack.c.b16 %v2955, %v2954
      %v2982 = vpack.c.b16 %v2957, %v2956
      %v2983 = vpack.c.b16 %v2959, %v2958
      %v2984 = vpack.c.b16 %v2961, %v2960
      %v2985 = vpack.c.b16 %v2963, %v2962
      %v2986 = vpack.c.b16 %v2965, %v2964
      %v2987 = vpack.c.b16 %v2967, %v2966
      %v2988 = vpack.c.b16 %v2969, %v2968
      %v2989 = vpack.c.b16 %v2971, %v2970
      %v2990 = vpack.c.b16 %v2973, %v2972
      %v2991 = vpack.c.b16 %v2975, %v2974
      %3008 = vmatprep.subr.bf16.mxu0 0
      %3009 = vmatpush1.bf16.msra.mxu0 %v2976
      %3010 = vmatprep.subr.bf16.mxu0 0
      %3011 = vmatpush1.bf16.msra.mxu0 %v2977
      %3012 = vmatprep.subr.bf16.mxu0 0
      %3013 = vmatpush1.bf16.msra.mxu0 %v2978
      %3014 = vmatprep.subr.bf16.mxu0 0
      %3015 = vmatpush1.bf16.msra.mxu0 %v2979
      %3016 = vmatprep.subr.bf16.mxu0 0
      %3017 = vmatpush1.bf16.msra.mxu0 %v2980
      %3018 = vmatprep.subr.bf16.mxu0 0
      %3019 = vmatpush1.bf16.msra.mxu0 %v2981
      %3020 = vmatprep.subr.bf16.mxu0 0
      %3021 = vmatpush1.bf16.msra.mxu0 %v2982
      %3022 = vmatprep.subr.bf16.mxu0 0
      %3023 = vmatpush1.bf16.msra.mxu0 %v2983
      %3024 = vmatprep.subr.bf16.mxu0 0
      %3025 = vmatpush1.bf16.msra.mxu0 %v2984
      %3026 = vmatprep.subr.bf16.mxu0 0
      %3027 = vmatpush1.bf16.msra.mxu0 %v2985
      %3028 = vmatprep.subr.bf16.mxu0 0
      %3029 = vmatpush1.bf16.msra.mxu0 %v2986
      %3030 = vmatprep.subr.bf16.mxu0 0
      %3031 = vmatpush1.bf16.msra.mxu0 %v2987
      %3032 = vmatprep.subr.bf16.mxu0 0
      %3033 = vmatpush1.bf16.msra.mxu0 %v2988
      %3034 = vmatprep.subr.bf16.mxu0 0
      %3035 = vmatpush1.bf16.msra.mxu0 %v2989
      %3036 = vmatprep.subr.bf16.mxu0 0
      %3037 = vmatpush1.bf16.msra.mxu0 %v2990
      %3038 = vmatprep.subr.bf16.mxu0 0
      %3039 = vmatpush1.bf16.msra.mxu0 %v2991
      %3040 = vmatprep.mubr.bf16.mxu0 %v2872
      %3041 = vmatmul.mubr.bf16.gmra.mrb[0].mxu0 %v1868
      %v3042 = vpop.f32.mrb[0].mxu0
      %v3043 = vadd.f32 %v2910, %v3042
      %v3044 = vpop.f32.mrb[0].mxu0
      %v3045 = vpop.f32.mrb[0].mxu0
      %v3046 = vpop.f32.mrb[0].mxu0
      %3047 = vdwg.mxu0
      %v3048 = vtanh.pop %v3043
      %3049 = vst [vmem:[#allocation4] sm:$0xff] %v3048
    $region93: #{forward.2} parent=1 // pred_fallthru
      _
    %v3050 = vld [vmem:[#allocation4] sm:$0xff]
    %v3051 = vpack.c.bf16 %v3050, %v3050
    %v3052 = vld [vmem:[#allocation22] sm:$0xf]
    %v3053 = vld [vmem:[#allocation22 + $0x4] sm:$0xf]
    %v3054 = vld [vmem:[#allocation22 + $0x8] sm:$0xf]
    %v3055 = vld [vmem:[#allocation22 + $0xc] sm:$0xf]
    %v3056 = vld [vmem:[#allocation22 + $0x10] sm:$0xf]
    %v3057 = vld [vmem:[#allocation22 + $0x14] sm:$0xf]
    %v3058 = vld [vmem:[#allocation22 + $0x18] sm:$0xf]
    %v3059 = vld [vmem:[#allocation22 + $0x1c] sm:$0xf]
    %v3060 = vld [vmem:[#allocation22 + $0x20] sm:$0xf]
    %v3061 = vld [vmem:[#allocation22 + $0x24] sm:$0xf]
    %v3062 = vld [vmem:[#allocation22 + $0x28] sm:$0xf]
    %v3063 = vld [vmem:[#allocation22 + $0x2c] sm:$0xf]
    %v3064 = vld [vmem:[#allocation22 + $0x30] sm:$0xf]
    %v3065 = vld [vmem:[#allocation22 + $0x34] sm:$0xf]
    %v3066 = vld [vmem:[#allocation22 + $0x38] sm:$0xf]
    %v3067 = vld [vmem:[#allocation22 + $0x3c] sm:$0xf]
    %v3068 = vld [vmem:[#allocation24] sm:$0x1]
    %v3070 = vlaneseq
    %v3071 = vshrl.u32 %v3070, 7
    %v3072 = vsub.s32 0, %v3071
    %v3073 = vrot.slane %v3068, %v3072
    %v3091 = vunpack.c.l.b16 %v3052
    %v3092 = vunpack.c.l.b16 %v3053
    %v3093 = vunpack.c.l.b16 %v3054
    %v3094 = vunpack.c.l.b16 %v3055
    %v3095 = vunpack.c.l.b16 %v3056
    %v3096 = vunpack.c.l.b16 %v3057
    %v3097 = vunpack.c.l.b16 %v3058
    %v3098 = vunpack.c.l.b16 %v3059
    %v3099 = vunpack.c.l.b16 %v3060
    %v3100 = vunpack.c.l.b16 %v3061
    %v3101 = vunpack.c.l.b16 %v3062
    %v3102 = vunpack.c.l.b16 %v3063
    %v3103 = vunpack.c.l.b16 %v3064
    %v3104 = vunpack.c.l.b16 %v3065
    %v3105 = vunpack.c.l.b16 %v3066
    %v3106 = vunpack.c.l.b16 %v3067
    %v3107 = vpack.c.b16 %v3092, %v3091
    %v3108 = vpack.c.b16 %v3094, %v3093
    %v3109 = vpack.c.b16 %v3096, %v3095
    %v3110 = vpack.c.b16 %v3098, %v3097
    %v3111 = vpack.c.b16 %v3100, %v3099
    %v3112 = vpack.c.b16 %v3102, %v3101
    %v3113 = vpack.c.b16 %v3104, %v3103
    %v3114 = vpack.c.b16 %v3106, %v3105
    %3123 = vmatprep.subr.bf16.mxu0 0
    %3124 = vmatpush1.bf16.msra.mxu0 %v3107
    %3125 = vmatprep.subr.bf16.mxu0 0
    %3126 = vmatpush1.bf16.msra.mxu0 %v3108
    %3127 = vmatprep.subr.bf16.mxu0 0
    %3128 = vmatpush1.bf16.msra.mxu0 %v3109
    %3129 = vmatprep.subr.bf16.mxu0 0
    %3130 = vmatpush1.bf16.msra.mxu0 %v3110
    %3131 = vmatprep.subr.bf16.mxu0 0
    %3132 = vmatpush1.bf16.msra.mxu0 %v3111
    %3133 = vmatprep.subr.bf16.mxu0 0
    %3134 = vmatpush1.bf16.msra.mxu0 %v3112
    %3135 = vmatprep.subr.bf16.mxu0 0
    %3136 = vmatpush1.bf16.msra.mxu0 %v3113
    %3137 = vmatprep.subr.bf16.mxu0 0
    %3138 = vmatpush1.bf16.msra.mxu0 %v3114
    %3139 = vmatprep.subr.bf16.mxu0 0
    %3140 = vmatpush1.bf16.msra.mxu0 0
    %3141 = vmatprep.subr.bf16.mxu0 0
    %3142 = vmatpush1.bf16.msra.mxu0 0
    %3143 = vmatprep.subr.bf16.mxu0 0
    %3144 = vmatpush1.bf16.msra.mxu0 0
    %3145 = vmatprep.subr.bf16.mxu0 0
    %3146 = vmatpush1.bf16.msra.mxu0 0
    %3147 = vmatprep.subr.bf16.mxu0 0
    %3148 = vmatpush1.bf16.msra.mxu0 0
    %3149 = vmatprep.subr.bf16.mxu0 0
    %3150 = vmatpush1.bf16.msra.mxu0 0
    %3151 = vmatprep.subr.bf16.mxu0 0
    %3152 = vmatpush1.bf16.msra.mxu0 0
    %3153 = vmatprep.subr.bf16.mxu0 0
    %3154 = vmatpush1.bf16.msra.mxu0 0
    %3155 = vmatprep.mubr.bf16.mxu0 0
    %3156 = vmatmul.mubr.bf16.gmra.mrb[0].mxu0 %v3051
    %v3157 = vpop.f32.mrb[0].mxu0
    %v3158 = vadd.f32 %v3073, %v3157
    %v3159 = vpop.f32.mrb[0].mxu0
    %v3160 = vpop.f32.mrb[0].mxu0
    %v3161 = vpop.f32.mrb[0].mxu0
    %3162 = vdwg.mxu0
    %3163 = vst [vmem:[#allocation26] sm:$0xff] %v3158
    // Predicated region
    $region126: #{forward.2} parent=1 // pred_check
      _
    $region127: #{forward.2} parent=1 // pred_check_branch
      %3165 = sbr.rel (0) target = $region129
    $region128: #{forward.2} parent=1 // pred_region
      %s3167 = ssub.s32 256, 256
      %3168 = vsyncadd [#allocation9], %s3167
      %s3169 = sshll.u32 [#allocation25], 4
      %s3170 = int_to_ptr.vmem [resolvable:$true] %s3169
      %3175 = dma.vmem_to_hbm [thread:$0]  %s3170, 256, %s13, [#allocation9], 128, 128, 8
    $region129: #{forward.2} parent=1 // pred_fallthru
      _
    // Predicated region
    $region130: #{forward.2} parent=1 // pred_check
      _
    $region131: #{forward.2} parent=1 // pred_check_branch
      %3177 = sbr.rel (0) target = $region133
    $region132: #{forward.2} parent=1 // pred_region
      %s3179 = ssub.s32 128, 128
      %3180 = vsyncadd [#allocation27], %s3179
      %s3182 = sshll.u32 [#allocation26], 4
      %s3183 = int_to_ptr.vmem [resolvable:$true] %s3182
      %3185 = dma.vmem_to_hbm [thread:$0]  %s3183, 128, %s14, [#allocation27]
    $region133: #{forward.2} parent=1 // pred_fallthru
      _
    // Predicated region
    $region134: #{forward.2} parent=1 // pred_check
      _
    $region135: #{forward.2} parent=1 // pred_check_branch
      %3187 = sbr.rel (0) target = $region137
    $region136: #{forward.2} parent=1 // pred_region
      %3188 = dma.done [#allocation9], 256
    $region137: #{forward.2} parent=1 // pred_fallthru
      _
    // Predicated region
    $region138: #{forward.2} parent=1 // pred_check
      _
    $region139: #{forward.2} parent=1 // pred_check_branch
      %3190 = sbr.rel (0) target = $region141
    $region140: #{forward.2} parent=1 // pred_region
      %3191 = dma.done [#allocation27], 128
    $region141: #{forward.2} parent=1 // pred_fallthru
      _
    %3192 = vsyncpa [#allocation8], 1
    %3193 = vsyncpa [#allocation11], 1
    %3194 = vsyncpa [#allocation14], 1
    %3195 = vsyncpa [#allocation17], 1
    %3196 = vsyncpa [#allocation20], 1
    %3197 = vsyncpa [#allocation23], 1
    %3198 = vsyncpa [#allocation9], 1
    %3199 = vsyncpa [#allocation27], 1
  %3200 = vsyncmov [#allocation3]
  %s3201 = vpop.sfrf %3200
  %p3202 = scmp.eq.s32.totalorder %s3201, 0
  %p3203 = pneg %p3202
  %3205 = shalt.err (%p3203)
  %s3206 = scalar_lea.sflag [#allocation3], 1
  %3207 = vsyncmov %s3206
  %s3208 = vpop.sfrf %3207
  %p3209 = scmp.eq.s32.totalorder %s3208, 0
  %p3210 = pneg %p3209
  %3212 = shalt.err (%p3210)
  %s3213 = scalar_lea.sflag [#allocation3], 2
  %3214 = vsyncmov %s3213
  %s3215 = vpop.sfrf %3214
  %p3216 = scmp.eq.s32.totalorder %s3215, 0
  %p3217 = pneg %p3216
  %3219 = shalt.err (%p3217)
  %s3220 = scalar_lea.sflag [#allocation3], 3
  %3221 = vsyncmov %s3220
  %s3222 = vpop.sfrf %3221
  %p3223 = scmp.eq.s32.totalorder %s3222, 0
  %p3224 = pneg %p3223
  %3226 = shalt.err (%p3224)
  %s3227 = scalar_lea.sflag [#allocation3], 4
  %3228 = vsyncmov %s3227
  %s3229 = vpop.sfrf %3228
  %p3230 = scmp.eq.s32.totalorder %s3229, 0
  %p3231 = pneg %p3230
  %3233 = shalt.err (%p3231)
  %s3234 = scalar_lea.sflag [#allocation3], 5
  %3235 = vsyncmov %s3234
  %s3236 = vpop.sfrf %3235
  %p3237 = scmp.eq.s32.totalorder %s3236, 0
  %p3238 = pneg %p3237
  %3240 = shalt.err (%p3238)
  %s3241 = scalar_lea.sflag [#allocation3], 6
  %3242 = vsyncmov %s3241
  %s3243 = vpop.sfrf %3242
  %p3244 = scmp.eq.s32.totalorder %s3243, 0
  %p3245 = pneg %p3244
  %3247 = shalt.err (%p3245)
  %s3248 = scalar_lea.sflag [#allocation3], 7
  %3249 = vsyncmov %s3248
  %s3250 = vpop.sfrf %3249
  %p3251 = scmp.eq.s32.totalorder %s3250, 0
  %p3252 = pneg %p3251
  %3254 = shalt.err (%p3252)

</llo_original>
